<compile_context>
chip_gen: v6e
topology: v6e:2x2x1
jax: 0.10.0
libtpu: 0.0.40
codegen_flags: <defaults>
</compile_context>

<pallas_src>
import functools

import jax
import jax.numpy as jnp
from jax.experimental import pallas as pl
from jax.experimental.pallas import tpu as pltpu

_EPS = 1e-5                   # torch.nn.LayerNorm default eps
_NEG = jnp.float32(-1e30)     # stand-in for -inf in KeepTopK (exp underflows to exactly 0 in f32)


# ---------------------------------------------------------------------------
# small host-side helpers
# ---------------------------------------------------------------------------
def _round_up(x, m):
    return ((x + m - 1) // m) * m


def _row_tile(m):
    """Largest token tile (multiple of 8, <= 1024) dividing m; else the full extent."""
    for t in (1024, 512, 256, 128, 64, 32, 16, 8):
        if m % t == 0:
            return t
    return m


def _batch_tile(b, n):
    """Batch elements per attention grid step: aim for >= 256 rows per block."""
    target = max(1, -(-256 // n))
    bb = 1
    for cand in range(1, b + 1):
        if b % cand == 0 and cand <= target:
            bb = cand
    return bb


def _vmem_limit(block_bytes):
    """Explicit scoped-VMEM limit: blocks + double buffers + headroom, under v7x's 64 MiB."""
    return int(min(max(2 * block_bytes + (8 << 20), 32 << 20), 56 << 20))


# ---------------------------------------------------------------------------
# in-kernel helpers (traced inside Pallas bodies; all math in f32)
# ---------------------------------------------------------------------------
def _layernorm(x, g, b):
    mu = jnp.mean(x, axis=-1, keepdims=True)
    var = jnp.mean((x - mu) ** 2, axis=-1, keepdims=True)
    return (x - mu) * jax.lax.rsqrt(var + _EPS) * g + b


def _gelu(x):
    # exact erf-based GELU, matching torch.nn.GELU() default
    return 0.5 * x * (1.0 + jax.lax.erf(x * 0.7071067811865476))


def _softmax_last(x, approx=False):
    m = jnp.max(x, axis=-1, keepdims=True)
    e = jnp.exp(x - m)
    s = jnp.sum(e, axis=-1, keepdims=True)
    if approx:
        return e * pl.reciprocal(s, approx=True)   # EUP slot: frees VALU in the hot loop
    return e / s                                   # exact: router weights sum to 1 exactly


# ---------------------------------------------------------------------------
# Kernel 1: PreNorm multi-head attention + residual, Bb batch elements per grid step
# ---------------------------------------------------------------------------
def _attn_kernel(x_ref, g_ref, b_ref, wq_ref, wk_ref, wv_ref, wo_ref, bo_ref, o_ref,
                 *, heads, dim_head):
    bb, n, d = x_ref.shape
    x = x_ref[...]                                   # (bb, n, d) f32
    xf = x.reshape(bb * n, d)
    xn = _layernorm(xf, g_ref[...], b_ref[...])
    xn_b = xn.astype(jnp.bfloat16)                   # bf16 MXU inputs, f32 accumulation
    scale = dim_head ** -0.5

    acc = jnp.zeros((bb * n, d), jnp.float32)
    for h in range(heads):                           # static, small
        # per-head lane-aligned weight slabs; scale folded into q (small (rows, dh) op)
        q = jnp.dot(xn_b, wq_ref[h], preferred_element_type=jnp.float32) * scale
        k = jnp.dot(xn_b, wk_ref[h], preferred_element_type=jnp.float32)
        v = jnp.dot(xn_b, wv_ref[h], preferred_element_type=jnp.float32)
        q3 = q.reshape(bb, n, dim_head).astype(jnp.bfloat16)
        k3 = k.reshape(bb, n, dim_head).astype(jnp.bfloat16)
        v3 = v.reshape(bb, n, dim_head).astype(jnp.bfloat16)
        # q k^T via contraction on the head dim: no explicit transpose of k
        s = jnp.einsum('bqh,bkh->bqk', q3, k3, preferred_element_type=jnp.float32)
        p = _softmax_last(s, approx=True)
        o = jnp.einsum('bqk,bkh->bqh', p.astype(jnp.bfloat16), v3,
                       preferred_element_type=jnp.float32)
        # per-head slice of to_out: accumulate instead of concatenating head outputs
        acc = acc + jnp.dot(o.reshape(bb * n, dim_head).astype(jnp.bfloat16), wo_ref[h],
                            preferred_element_type=jnp.float32)

    out = acc + bo_ref[...]
    o_ref[...] = out.reshape(bb, n, d) + x           # residual in-kernel


def attention_block(x, p, *, heads, dim_head):
    B, N, D = x.shape
    Bb = _batch_tile(B, N)
    blk_bytes = (2 * Bb * N * D * 4                      # x block + out block (f32)
                 + 4 * heads * D * dim_head * 2          # wq, wk, wv, wo (bf16)
                 + 3 * D * 4)                            # ln gamma/beta + out bias (f32)
    kern = functools.partial(_attn_kernel, heads=heads, dim_head=dim_head)
    # TODO(synk): for realistic N (>= 512) tile the KV axis (flash-style online softmax)
    # instead of materializing the full (N, N) score matrix per head.
    return pl.pallas_call(
        kern,
        out_shape=jax.ShapeDtypeStruct((B, N, D), jnp.float32),
        grid=(B // Bb,),
        in_specs=[
            pl.BlockSpec((Bb, N, D), lambda b: (b, 0, 0)),
            pl.BlockSpec((1, D), lambda b: (0, 0)),
            pl.BlockSpec((1, D), lambda b: (0, 0)),
            pl.BlockSpec((heads, D, dim_head), lambda b: (0, 0, 0)),
            pl.BlockSpec((heads, D, dim_head), lambda b: (0, 0, 0)),
            pl.BlockSpec((heads, D, dim_head), lambda b: (0, 0, 0)),
            pl.BlockSpec((heads, dim_head, D), lambda b: (0, 0, 0)),
            pl.BlockSpec((1, D), lambda b: (0, 0)),
        ],
        out_specs=pl.BlockSpec((Bb, N, D), lambda b: (b, 0, 0)),
        compiler_params=pltpu.CompilerParams(
            dimension_semantics=("parallel",),
            vmem_limit_bytes=_vmem_limit(blk_bytes)),
    )(x, p["attn_ln_g"], p["attn_ln_b"], p["wq"], p["wk"], p["wv"], p["wo"], p["bo"])


# ---------------------------------------------------------------------------
# Kernel 2: fused LayerNorm -> router (KeepTopK softmax) -> gated basenet -> experts
#           (expert weights streamed per grid step) -> adaptor MLP -> residual
# grid = (token tiles [parallel], FiLM experts [arbitrary])
# ---------------------------------------------------------------------------
def _moe_film_kernel(x_ref, ln_g_ref, ln_b_ref, wr_ref, br_ref,
                     wb_ref, bb_ref, wp_ref, bp_ref, wa_ref, ba_ref,
                     w1_ref, b1_ref, w2_ref, b2_ref,
                     o_ref, rw_ref, ytmp_sc, yacc_sc,
                     *, num_expert, top_k):
    e = pl.program_id(1)
    n_e = pl.num_programs(1)

    # ---- once per token tile: LayerNorm, fused router, gated basenet, GELU "expert 0" ----
    @pl.when(e == 0)
    def _init():
        x = x_ref[...]                                            # (TM, D) f32
        xn = _layernorm(x, ln_g_ref[...], ln_b_ref[...])
        xn_b = xn.astype(jnp.bfloat16)

        # router = Linear(dim, E) -> KeepTopK -> Softmax on a 128-lane-padded weight slab
        # (pad columns carry a -1e30 bias so their softmax weight is exactly 0).
        logits = jnp.dot(xn_b, wr_ref[...], preferred_element_type=jnp.float32) + br_ref[...]
        if 0 < top_k < num_expert:
            # k-th largest per row via iterative max-masking (ties kept, matching `x < kth`)
            remaining = logits
            kth = None
            for _ in range(top_k):
                kth = jnp.max(remaining, axis=-1, keepdims=True)
                remaining = jnp.where(remaining >= kth, _NEG, remaining)
            logits = jnp.where(logits < kth, _NEG, logits)
        rw = _softmax_last(logits)                                # exact divide, rows sum to 1
        rw_ref[...] = rw                                          # lane-dense (TM, 128) store

        # y_temp = GELU(basenet0(xn)) * basenet1(xn)
        h0 = jnp.dot(xn_b, wb_ref[0], preferred_element_type=jnp.float32) + bb_ref[0]
        h1 = jnp.dot(xn_b, wb_ref[1], preferred_element_type=jnp.float32) + bb_ref[1]
        ytmp = _gelu(h0) * h1
        ytmp_sc[...] = ytmp

        # expert idx 0 is ff_list[2] == nn.GELU() in the reference forward (`ff_list[idx+2]`)
        yacc_sc[...] = rw[:, 0:1] * _gelu(ytmp)

    # ---- streamed FiLM expert: module expert idx = e + 1 uses Modular_Experts[e] ----
    if num_expert > 1:                                            # static
        yt = ytmp_sc[...]
        yb = yt.astype(jnp.bfloat16)
        mp = jnp.dot(yb, wp_ref[0], preferred_element_type=jnp.float32) + bp_ref[0]
        ma = jnp.dot(yb, wa_ref[0], preferred_element_type=jnp.float32) + ba_ref[0]
        # routing weight column e+1 (dynamic lane select via iota mask + lane reduce)
        rw_all = rw_ref[...]
        lane = jax.lax.broadcasted_iota(jnp.int32, rw_all.shape, 1)
        w_e = jnp.sum(jnp.where(lane == e + 1, rw_all, 0.0), axis=-1, keepdims=True)
        yacc_sc[...] = yacc_sc[...] + w_e * (mp * yt + ma)

    # ---- after the last streamed expert: adaptor MLP + residual ----
    @pl.when(e == n_e - 1)
    def _finalize():
        y = yacc_sc[...]
        h = _gelu(jnp.dot(y.astype(jnp.bfloat16), w1_ref[...],
                          preferred_element_type=jnp.float32) + b1_ref[...])
        out = jnp.dot(h.astype(jnp.bfloat16), w2_ref[...],
                      preferred_element_type=jnp.float32) + b2_ref[...]
        o_ref[...] = out + x_ref[...]                             # residual in-kernel


def moe_film_block(x2, p, *, top_k, num_expert):
    M, D = x2.shape
    assert num_expert >= 1
    TM = _row_tile(M)
    RW = p["router_w"].shape[1]          # num_expert padded up to a multiple of 128 lanes
    mlp = p["w1"].shape[1]
    n_film = max(num_expert - 1, 1)      # expert-streaming grid axis (>= 1 so grid non-empty)

    blk_bytes = (2 * TM * D * 4 + TM * RW * 4      # x / y tiles + lane-dense router slab
                 + 2 * TM * D * 4                  # VMEM scratches
                 + D * RW * 2 + RW * 4             # router
                 + 2 * D * D * 2 + 2 * D * 4       # basenet
                 + 2 * (D * D * 2 + D * 4)         # one streamed FiLM expert (wp/wa + biases)
                 + 2 * D * mlp * 2 + mlp * 4 + D * 4)  # adaptor

    kern = functools.partial(_moe_film_kernel, num_expert=num_expert, top_k=top_k)
    return pl.pallas_call(
        kern,
        out_shape=(jax.ShapeDtypeStruct((M, D), jnp.float32),
                   jax.ShapeDtypeStruct((M, RW), jnp.float32)),
        grid=(M // TM, n_film),
        in_specs=[
            pl.BlockSpec((TM, D), lambda i, e: (i, 0)),          # x2 tile (DMA'd once per i)
            pl.BlockSpec((1, D), lambda i, e: (0, 0)),           # ff LayerNorm gamma
            pl.BlockSpec((1, D), lambda i, e: (0, 0)),           # ff LayerNorm beta
            pl.BlockSpec((D, RW), lambda i, e: (0, 0)),          # router W (bf16, lane padded)
            pl.BlockSpec((1, RW), lambda i, e: (0, 0)),          # router b (pad lanes = -1e30)
            pl.BlockSpec((2, D, D), lambda i, e: (0, 0, 0)),     # basenet weights
            pl.BlockSpec((2, 1, D), lambda i, e: (0, 0, 0)),     # basenet biases
            pl.BlockSpec((1, D, D), lambda i, e: (e, 0, 0)),     # FiLM product W  (streamed)
            pl.BlockSpec((1, 1, D), lambda i, e: (e, 0, 0)),     # FiLM product b  (streamed)
            pl.BlockSpec((1, D, D), lambda i, e: (e, 0, 0)),     # FiLM add W      (streamed)
            pl.BlockSpec((1, 1, D), lambda i, e: (e, 0, 0)),     # FiLM add b      (streamed)
            pl.BlockSpec((D, mlp), lambda i, e: (0, 0)),         # adaptor W1
            pl.BlockSpec((1, mlp), lambda i, e: (0, 0)),         # adaptor b1
            pl.BlockSpec((mlp, D), lambda i, e: (0, 0)),         # adaptor W2
            pl.BlockSpec((1, D), lambda i, e: (0, 0)),           # adaptor b2
        ],
        out_specs=(
            pl.BlockSpec((TM, D), lambda i, e: (i, 0)),          # adaptor(MoE) + x
            pl.BlockSpec((TM, RW), lambda i, e: (i, 0)),         # routing weights, lane dense
        ),
        scratch_shapes=[pltpu.VMEM((TM, D), jnp.float32),        # y_temp
                        pltpu.VMEM((TM, D), jnp.float32)],       # expert-weighted accumulator
        compiler_params=pltpu.CompilerParams(
            dimension_semantics=("parallel", "arbitrary"),
            vmem_limit_bytes=_vmem_limit(blk_bytes)),
    )(x2, p["ff_ln_g"], p["ff_ln_b"], p["router_w"], p["router_b"],
      p["wb"], p["bb"], p["wp"], p["bp"], p["wa"], p["ba"],
      p["w1"], p["b1"], p["w2"], p["b2"])


# ---------------------------------------------------------------------------
# Parameter init (deterministic, synthetic) and full forward
# ---------------------------------------------------------------------------
def init_layer_params(key, dim, heads, dim_head, mlp_dim, num_expert):
    keys = iter(jax.random.split(key, 24))

    def rnd(shape, scale=0.02, dtype=jnp.bfloat16):
        return (scale * jax.random.normal(next(keys), shape)).astype(dtype)

    rw_pad = _round_up(num_expert, 128)
    router_w = jnp.zeros((dim, rw_pad), jnp.bfloat16).at[:, :num_expert].set(
        rnd((dim, num_expert)))
    router_b = jnp.full((1, rw_pad), _NEG, jnp.float32).at[:, :num_expert].set(
        rnd((1, num_expert), 0.01, jnp.float32))

    return dict(
        attn_ln_g=jnp.ones((1, dim), jnp.float32),
        attn_ln_b=jnp.zeros((1, dim), jnp.float32),
        wq=rnd((heads, dim, dim_head)),
        wk=rnd((heads, dim, dim_head)),
        wv=rnd((heads, dim, dim_head)),
        wo=rnd((heads, dim_head, dim)),
        bo=rnd((1, dim), 0.01, jnp.float32),
        router_w=router_w,
        router_b=router_b,
        ff_ln_g=jnp.ones((1, dim), jnp.float32),
        ff_ln_b=jnp.zeros((1, dim), jnp.float32),
        wb=rnd((2, dim, dim)),
        bb=rnd((2, 1, dim), 0.01, jnp.float32),
        wp=rnd((num_expert, dim, dim)),          # last entry unused (matches ff_list[idx+2])
        bp=rnd((num_expert, 1, dim), 0.01, jnp.float32),
        wa=rnd((num_expert, dim, dim)),
        ba=rnd((num_expert, 1, dim), 0.01, jnp.float32),
        w1=rnd((dim, mlp_dim)),
        b1=rnd((1, mlp_dim), 0.01, jnp.float32),
        w2=rnd((mlp_dim, dim)),
        b2=rnd((1, dim), 0.01, jnp.float32),
    )


def transformer_moe_film_forward(x, layer_params, *, heads, dim_head, top_k, num_expert):
    B, N, D = x.shape
    weights_list = []
    for p in layer_params:
        x = attention_block(x, p, heads=heads, dim_head=dim_head)        # x = attn(x) + x
        x2 = x.reshape(B * N, D)
        y2, rw_pad = moe_film_block(x2, p, top_k=top_k, num_expert=num_expert)
        x = y2.reshape(B, N, D)                                           # x = adaptor(MoE) + x
        weights_list.append(rw_pad[:, :num_expert].reshape(B, N, num_expert))
    return x, weights_list


if __name__ == "__main__":
    # small shapes consistent with the module's forward: x is (bs, n, d)
    B, N, D = 2, 8, 32
    depth, heads, dim_head, mlp_dim = 2, 2, 16, 32
    num_expert, top_k = 2, 2

    key = jax.random.PRNGKey(0)
    kx, kp = jax.random.split(key)
    x = jax.random.normal(kx, (B, N, D), jnp.float32)
    layer_keys = jax.random.split(kp, depth)
    params = [init_layer_params(k, D, heads, dim_head, mlp_dim, num_expert)
              for k in layer_keys]

    fwd = jax.jit(functools.partial(
        transformer_moe_film_forward,
        heads=heads, dim_head=dim_head, top_k=top_k, num_expert=num_expert))
    out, weights_list = fwd(x, params)

    out = jax.block_until_ready(out)
    weights_list = [jax.block_until_ready(w) for w in weights_list]

    assert out.shape == (B, N, D)
    assert len(weights_list) == depth
    assert all(w.shape == (B, N, num_expert) for w in weights_list)
    assert bool(jnp.all(jnp.isfinite(out)))
    # router outputs are a softmax over (top-k of) experts: rows sum to 1
    assert bool(jnp.allclose(jnp.sum(weights_list[0], axis=-1), 1.0, atol=1e-5))
    print("KERNEL_OK")
</pallas_src>

<mosaic_0001>
module attributes {stable_mosaic.version = 11 : i64} {
  func.func @_moe_film_kernel(%arg0: i32, %arg1: i32, %arg2: memref<16x32xf32, #tpu.memory_space<vmem>>, %arg3: memref<1x32xf32, #tpu.memory_space<vmem>>, %arg4: memref<1x32xf32, #tpu.memory_space<vmem>>, %arg5: memref<32x128xbf16, #tpu.memory_space<vmem>>, %arg6: memref<1x128xf32, #tpu.memory_space<vmem>>, %arg7: memref<2x32x32xbf16, #tpu.memory_space<vmem>>, %arg8: memref<2x1x32xf32, #tpu.memory_space<vmem>>, %arg9: memref<1x32x32xbf16, #tpu.memory_space<vmem>>, %arg10: memref<1x1x32xf32, #tpu.memory_space<vmem>>, %arg11: memref<1x32x32xbf16, #tpu.memory_space<vmem>>, %arg12: memref<1x1x32xf32, #tpu.memory_space<vmem>>, %arg13: memref<32x32xbf16, #tpu.memory_space<vmem>>, %arg14: memref<1x32xf32, #tpu.memory_space<vmem>>, %arg15: memref<32x32xbf16, #tpu.memory_space<vmem>>, %arg16: memref<1x32xf32, #tpu.memory_space<vmem>>, %arg17: memref<16x32xf32, #tpu.memory_space<vmem>>, %arg18: memref<16x128xf32, #tpu.memory_space<vmem>>, %arg19: memref<16x32xf32, #tpu.memory_space<vmem>>, %arg20: memref<16x32xf32, #tpu.memory_space<vmem>>) attributes {dimension_semantics = [#tpu.dimension_semantics<parallel>, #tpu.dimension_semantics<arbitrary>], iteration_bounds = array<i64: 1, 1>, scalar_prefetch = 0 : i64, scratch_operands = 2 : i64, tpu.core_type = #tpu.core_type<tc>, window_params = [{transform_indices = @transform_0, window_bounds = array<i64: 16, 32>}, {pipeline_mode = #tpu.pipeline_mode<synchronous>, transform_indices = @transform_1, window_bounds = array<i64: 1, 32>}, {pipeline_mode = #tpu.pipeline_mode<synchronous>, transform_indices = @transform_2, window_bounds = array<i64: 1, 32>}, {pipeline_mode = #tpu.pipeline_mode<synchronous>, transform_indices = @transform_3, window_bounds = array<i64: 32, 128>}, {pipeline_mode = #tpu.pipeline_mode<synchronous>, transform_indices = @transform_4, window_bounds = array<i64: 1, 128>}, {pipeline_mode = #tpu.pipeline_mode<synchronous>, transform_indices = @transform_5, window_bounds = array<i64: 2, 32, 32>}, {pipeline_mode = #tpu.pipeline_mode<synchronous>, transform_indices = @transform_6, window_bounds = array<i64: 2, 1, 32>}, {transform_indices = @transform_7, window_bounds = array<i64: 1, 32, 32>}, {transform_indices = @transform_8, window_bounds = array<i64: 1, 1, 32>}, {transform_indices = @transform_9, window_bounds = array<i64: 1, 32, 32>}, {transform_indices = @transform_10, window_bounds = array<i64: 1, 1, 32>}, {pipeline_mode = #tpu.pipeline_mode<synchronous>, transform_indices = @transform_11, window_bounds = array<i64: 32, 32>}, {pipeline_mode = #tpu.pipeline_mode<synchronous>, transform_indices = @transform_12, window_bounds = array<i64: 1, 32>}, {pipeline_mode = #tpu.pipeline_mode<synchronous>, transform_indices = @transform_13, window_bounds = array<i64: 32, 32>}, {pipeline_mode = #tpu.pipeline_mode<synchronous>, transform_indices = @transform_14, window_bounds = array<i64: 1, 32>}, {transform_indices = @transform_15, window_bounds = array<i64: 16, 32>}, {transform_indices = @transform_16, window_bounds = array<i64: 16, 128>}]} {
    %c0_i32 = arith.constant 0 : i32
    %0 = arith.cmpi eq, %arg1, %c0_i32 : i32
    %1 = arith.extui %0 : i1 to i32
    %c0_i32_0 = arith.constant 0 : i32
    %2 = arith.cmpi ne, %1, %c0_i32_0 : i32
    scf.if %2 {
      %c0_25 = arith.constant 0 : index
      %c0_26 = arith.constant 0 : index
      %38 = vector.load %arg2[%c0_25, %c0_26] : memref<16x32xf32, #tpu.memory_space<vmem>>, vector<16x32xf32>
      %c0_27 = arith.constant 0 : index
      %c0_28 = arith.constant 0 : index
      %39 = vector.load %arg3[%c0_27, %c0_28] : memref<1x32xf32, #tpu.memory_space<vmem>>, vector<1x32xf32>
      %c0_29 = arith.constant 0 : index
      %c0_30 = arith.constant 0 : index
      %40 = vector.load %arg4[%c0_29, %c0_30] : memref<1x32xf32, #tpu.memory_space<vmem>>, vector<1x32xf32>
      %cst_31 = arith.constant dense<0.000000e+00> : vector<16xf32>
      %41 = vector.multi_reduction <add>, %38, %cst_31 [1] : vector<16x32xf32> to vector<16xf32>
      %42 = vector.shape_cast %41 : vector<16xf32> to vector<16x1xf32>
      %cst_32 = arith.constant 3.200000e+01 : f32
      %43 = vector.broadcast %cst_32 : f32 to vector<16x1xf32>
      %44 = arith.divf %42, %43 : vector<16x1xf32>
      %45 = vector.broadcast %44 : vector<16x1xf32> to vector<16x32xf32>
      %46 = arith.subf %38, %45 : vector<16x32xf32>
      %47 = arith.mulf %46, %46 : vector<16x32xf32>
      %cst_33 = arith.constant dense<0.000000e+00> : vector<16xf32>
      %48 = vector.multi_reduction <add>, %47, %cst_33 [1] : vector<16x32xf32> to vector<16xf32>
      %49 = vector.shape_cast %48 : vector<16xf32> to vector<16x1xf32>
      %cst_34 = arith.constant 3.200000e+01 : f32
      %50 = vector.broadcast %cst_34 : f32 to vector<16x1xf32>
      %51 = arith.divf %49, %50 : vector<16x1xf32>
      %52 = vector.broadcast %44 : vector<16x1xf32> to vector<16x32xf32>
      %53 = arith.subf %38, %52 : vector<16x32xf32>
      %cst_35 = arith.constant 9.99999974E-6 : f32
      %54 = vector.broadcast %cst_35 : f32 to vector<16x1xf32>
      %55 = arith.addf %51, %54 : vector<16x1xf32>
      %56 = math.rsqrt %55 : vector<16x1xf32>
      %57 = vector.broadcast %56 : vector<16x1xf32> to vector<16x32xf32>
      %58 = arith.mulf %53, %57 : vector<16x32xf32>
      %59 = vector.broadcast %39 : vector<1x32xf32> to vector<16x32xf32>
      %60 = arith.mulf %58, %59 : vector<16x32xf32>
      %61 = vector.broadcast %40 : vector<1x32xf32> to vector<16x32xf32>
      %62 = arith.addf %60, %61 : vector<16x32xf32>
      %63 = arith.truncf %62 : vector<16x32xf32> to vector<16x32xbf16>
      %c0_36 = arith.constant 0 : index
      %c0_37 = arith.constant 0 : index
      %64 = vector.load %arg5[%c0_36, %c0_37] : memref<32x128xbf16, #tpu.memory_space<vmem>>, vector<32x128xbf16>
      %cst_38 = arith.constant dense<0.000000e+00> : vector<16x128xf32>
      %65 = tpu.matmul %63, %64, %cst_38 {dimension_numbers = #tpu.dot_dimension_numbers<[1], [0], [0], [1], [0, 0, 1, 1], [], []>} : vector<16x32xbf16>, vector<32x128xbf16>, vector<16x128xf32> -> vector<16x128xf32>
      %c0_39 = arith.constant 0 : index
      %c0_40 = arith.constant 0 : index
      %66 = vector.load %arg6[%c0_39, %c0_40] : memref<1x128xf32, #tpu.memory_space<vmem>>, vector<1x128xf32>
      %67 = vector.broadcast %66 : vector<1x128xf32> to vector<16x128xf32>
      %68 = arith.addf %65, %67 : vector<16x128xf32>
      %cst_41 = arith.constant dense<0xFF800000> : vector<16xf32>
      %69 = vector.multi_reduction <maximumf>, %68, %cst_41 [1] : vector<16x128xf32> to vector<16xf32>
      %70 = vector.shape_cast %69 : vector<16xf32> to vector<16x1xf32>
      %71 = vector.broadcast %70 : vector<16x1xf32> to vector<16x128xf32>
      %72 = arith.subf %68, %71 : vector<16x128xf32>
      %73 = math.exp %72 : vector<16x128xf32>
      %cst_42 = arith.constant dense<0.000000e+00> : vector<16xf32>
      %74 = vector.multi_reduction <add>, %73, %cst_42 [1] : vector<16x128xf32> to vector<16xf32>
      %75 = vector.shape_cast %74 : vector<16xf32> to vector<16x1xf32>
      %76 = vector.broadcast %75 : vector<16x1xf32> to vector<16x128xf32>
      %77 = arith.divf %73, %76 : vector<16x128xf32>
      %c0_43 = arith.constant 0 : index
      %c0_44 = arith.constant 0 : index
      %78 = vector.load %arg18[%c0_43, %c0_44] : memref<16x128xf32, #tpu.memory_space<vmem>>, vector<16x128xf32>
      tpu.vector_store %arg18[%c0_43, %c0_44], %77 {strides = array<i32>} : memref<16x128xf32, #tpu.memory_space<vmem>>, vector<16x128xf32>,
      %c0_45 = arith.constant 0 : index
      %c0_46 = arith.constant 0 : index
      %c0_47 = arith.constant 0 : index
      %79 = vector.load %arg7[%c0_45, %c0_46, %c0_47] : memref<2x32x32xbf16, #tpu.memory_space<vmem>>, vector<1x32x32xbf16>
      %80 = vector.shape_cast %79 : vector<1x32x32xbf16> to vector<32x32xbf16>
      %cst_48 = arith.constant dense<0.000000e+00> : vector<16x32xf32>
      %81 = tpu.matmul %63, %80, %cst_48 {dimension_numbers = #tpu.dot_dimension_numbers<[1], [0], [0], [1], [0, 0, 1, 1], [], []>} : vector<16x32xbf16>, vector<32x32xbf16>, vector<16x32xf32> -> vector<16x32xf32>
      %c0_49 = arith.constant 0 : index
      %c0_50 = arith.constant 0 : index
      %c0_51 = arith.constant 0 : index
      %82 = vector.load %arg8[%c0_49, %c0_50, %c0_51] : memref<2x1x32xf32, #tpu.memory_space<vmem>>, vector<1x1x32xf32>
      %83 = vector.shape_cast %82 : vector<1x1x32xf32> to vector<1x32xf32>
      %84 = vector.broadcast %83 : vector<1x32xf32> to vector<16x32xf32>
      %85 = arith.addf %81, %84 : vector<16x32xf32>
      %c1 = arith.constant 1 : index
      %c0_52 = arith.constant 0 : index
      %c0_53 = arith.constant 0 : index
      %86 = vector.load %arg7[%c1, %c0_52, %c0_53] : memref<2x32x32xbf16, #tpu.memory_space<vmem>>, vector<1x32x32xbf16>
      %87 = vector.shape_cast %86 : vector<1x32x32xbf16> to vector<32x32xbf16>
      %cst_54 = arith.constant dense<0.000000e+00> : vector<16x32xf32>
      %88 = tpu.matmul %63, %87, %cst_54 {dimension_numbers = #tpu.dot_dimension_numbers<[1], [0], [0], [1], [0, 0, 1, 1], [], []>} : vector<16x32xbf16>, vector<32x32xbf16>, vector<16x32xf32> -> vector<16x32xf32>
      %c1_55 = arith.constant 1 : index
      %c0_56 = arith.constant 0 : index
      %c0_57 = arith.constant 0 : index
      %89 = vector.load %arg8[%c1_55, %c0_56, %c0_57] : memref<2x1x32xf32, #tpu.memory_space<vmem>>, vector<1x1x32xf32>
      %90 = vector.shape_cast %89 : vector<1x1x32xf32> to vector<1x32xf32>
      %91 = vector.broadcast %90 : vector<1x32xf32> to vector<16x32xf32>
      %92 = arith.addf %88, %91 : vector<16x32xf32>
      %cst_58 = arith.constant 5.000000e-01 : f32
      %93 = vector.broadcast %cst_58 : f32 to vector<16x32xf32>
      %94 = arith.mulf %93, %85 : vector<16x32xf32>
      %cst_59 = arith.constant 0.707106769 : f32
      %95 = vector.broadcast %cst_59 : f32 to vector<16x32xf32>
      %96 = arith.mulf %85, %95 : vector<16x32xf32>
      %97 = math.erf %96 : vector<16x32xf32>
      %cst_60 = arith.constant 1.000000e+00 : f32
      %98 = vector.broadcast %cst_60 : f32 to vector<16x32xf32>
      %99 = arith.addf %98, %97 : vector<16x32xf32>
      %100 = arith.mulf %94, %99 : vector<16x32xf32>
      %101 = arith.mulf %100, %92 : vector<16x32xf32>
      %c0_61 = arith.constant 0 : index
      %c0_62 = arith.constant 0 : index
      %102 = vector.load %arg19[%c0_61, %c0_62] : memref<16x32xf32, #tpu.memory_space<vmem>>, vector<16x32xf32>
      tpu.vector_store %arg19[%c0_61, %c0_62], %101 {strides = array<i32>} : memref<16x32xf32, #tpu.memory_space<vmem>>, vector<16x32xf32>,
      %103 = vector.extract_strided_slice %77 {offsets = [0, 0], sizes = [16, 1], strides = [1, 1]} : vector<16x128xf32> to vector<16x1xf32>
      %cst_63 = arith.constant 5.000000e-01 : f32
      %104 = vector.broadcast %cst_63 : f32 to vector<16x32xf32>
      %105 = arith.mulf %104, %101 : vector<16x32xf32>
      %cst_64 = arith.constant 0.707106769 : f32
      %106 = vector.broadcast %cst_64 : f32 to vector<16x32xf32>
      %107 = arith.mulf %101, %106 : vector<16x32xf32>
      %108 = math.erf %107 : vector<16x32xf32>
      %cst_65 = arith.constant 1.000000e+00 : f32
      %109 = vector.broadcast %cst_65 : f32 to vector<16x32xf32>
      %110 = arith.addf %109, %108 : vector<16x32xf32>
      %111 = arith.mulf %105, %110 : vector<16x32xf32>
      %112 = vector.broadcast %103 : vector<16x1xf32> to vector<16x32xf32>
      %113 = arith.mulf %112, %111 : vector<16x32xf32>
      %c0_66 = arith.constant 0 : index
      %c0_67 = arith.constant 0 : index
      %114 = vector.load %arg20[%c0_66, %c0_67] : memref<16x32xf32, #tpu.memory_space<vmem>>, vector<16x32xf32>
      tpu.vector_store %arg20[%c0_66, %c0_67], %113 {strides = array<i32>} : memref<16x32xf32, #tpu.memory_space<vmem>>, vector<16x32xf32>,
    } else {
    }
    %c0 = arith.constant 0 : index
    %c0_1 = arith.constant 0 : index
    %3 = vector.load %arg19[%c0, %c0_1] : memref<16x32xf32, #tpu.memory_space<vmem>>, vector<16x32xf32>
    %4 = arith.truncf %3 : vector<16x32xf32> to vector<16x32xbf16>
    %c0_2 = arith.constant 0 : index
    %c0_3 = arith.constant 0 : index
    %c0_4 = arith.constant 0 : index
    %5 = vector.load %arg9[%c0_2, %c0_3, %c0_4] : memref<1x32x32xbf16, #tpu.memory_space<vmem>>, vector<1x32x32xbf16>
    %6 = vector.shape_cast %5 : vector<1x32x32xbf16> to vector<32x32xbf16>
    %cst = arith.constant dense<0.000000e+00> : vector<16x32xf32>
    %7 = tpu.matmul %4, %6, %cst {dimension_numbers = #tpu.dot_dimension_numbers<[1], [0], [0], [1], [0, 0, 1, 1], [], []>} : vector<16x32xbf16>, vector<32x32xbf16>, vector<16x32xf32> -> vector<16x32xf32>
    %c0_5 = arith.constant 0 : index
    %c0_6 = arith.constant 0 : index
    %c0_7 = arith.constant 0 : index
    %8 = vector.load %arg10[%c0_5, %c0_6, %c0_7] : memref<1x1x32xf32, #tpu.memory_space<vmem>>, vector<1x1x32xf32>
    %9 = vector.shape_cast %8 : vector<1x1x32xf32> to vector<1x32xf32>
    %10 = vector.broadcast %9 : vector<1x32xf32> to vector<16x32xf32>
    %11 = arith.addf %7, %10 : vector<16x32xf32>
    %c0_8 = arith.constant 0 : index
    %c0_9 = arith.constant 0 : index
    %c0_10 = arith.constant 0 : index
    %12 = vector.load %arg11[%c0_8, %c0_9, %c0_10] : memref<1x32x32xbf16, #tpu.memory_space<vmem>>, vector<1x32x32xbf16>
    %13 = vector.shape_cast %12 : vector<1x32x32xbf16> to vector<32x32xbf16>
    %cst_11 = arith.constant dense<0.000000e+00> : vector<16x32xf32>
    %14 = tpu.matmul %4, %13, %cst_11 {dimension_numbers = #tpu.dot_dimension_numbers<[1], [0], [0], [1], [0, 0, 1, 1], [], []>} : vector<16x32xbf16>, vector<32x32xbf16>, vector<16x32xf32> -> vector<16x32xf32>
    %c0_12 = arith.constant 0 : index
    %c0_13 = arith.constant 0 : index
    %c0_14 = arith.constant 0 : index
    %15 = vector.load %arg12[%c0_12, %c0_13, %c0_14] : memref<1x1x32xf32, #tpu.memory_space<vmem>>, vector<1x1x32xf32>
    %16 = vector.shape_cast %15 : vector<1x1x32xf32> to vector<1x32xf32>
    %17 = vector.broadcast %16 : vector<1x32xf32> to vector<16x32xf32>
    %18 = arith.addf %14, %17 : vector<16x32xf32>
    %c0_15 = arith.constant 0 : index
    %c0_16 = arith.constant 0 : index
    %19 = vector.load %arg18[%c0_15, %c0_16] : memref<16x128xf32, #tpu.memory_space<vmem>>, vector<16x128xf32>
    %20 = tpu.iota {dimensions = array<i32: 1>} : vector<16x128xi32>
    %c1_i32 = arith.constant 1 : i32
    %21 = arith.addi %arg1, %c1_i32 : i32
    %22 = vector.broadcast %21 : i32 to vector<16x128xi32>
    %23 = arith.cmpi eq, %20, %22 : vector<16x128xi32>
    %cst_17 = arith.constant 0.000000e+00 : f32
    %24 = vector.broadcast %cst_17 : f32 to vector<16x128xf32>
    %25 = arith.select %23, %19, %24 : vector<16x128xi1>, vector<16x128xf32>
    %cst_18 = arith.constant dense<0.000000e+00> : vector<16xf32>
    %26 = vector.multi_reduction <add>, %25, %cst_18 [1] : vector<16x128xf32> to vector<16xf32>
    %27 = vector.shape_cast %26 : vector<16xf32> to vector<16x1xf32>
    %c0_19 = arith.constant 0 : index
    %c0_20 = arith.constant 0 : index
    %28 = vector.load %arg20[%c0_19, %c0_20] : memref<16x32xf32, #tpu.memory_space<vmem>>, vector<16x32xf32>
    %29 = arith.mulf %11, %3 : vector<16x32xf32>
    %30 = arith.addf %29, %18 : vector<16x32xf32>
    %31 = vector.broadcast %27 : vector<16x1xf32> to vector<16x32xf32>
    %32 = arith.mulf %31, %30 : vector<16x32xf32>
    %33 = arith.addf %28, %32 : vector<16x32xf32>
    %c0_21 = arith.constant 0 : index
    %c0_22 = arith.constant 0 : index
    %34 = vector.load %arg20[%c0_21, %c0_22] : memref<16x32xf32, #tpu.memory_space<vmem>>, vector<16x32xf32>
    tpu.vector_store %arg20[%c0_21, %c0_22], %33 {strides = array<i32>} : memref<16x32xf32, #tpu.memory_space<vmem>>, vector<16x32xf32>,
    %c0_i32_23 = arith.constant 0 : i32
    %35 = arith.cmpi eq, %arg1, %c0_i32_23 : i32
    %36 = arith.extui %35 : i1 to i32
    %c0_i32_24 = arith.constant 0 : i32
    %37 = arith.cmpi ne, %36, %c0_i32_24 : i32
    scf.if %37 {
      %c0_25 = arith.constant 0 : index
      %c0_26 = arith.constant 0 : index
      %38 = vector.load %arg20[%c0_25, %c0_26] : memref<16x32xf32, #tpu.memory_space<vmem>>, vector<16x32xf32>
      %39 = arith.truncf %38 : vector<16x32xf32> to vector<16x32xbf16>
      %c0_27 = arith.constant 0 : index
      %c0_28 = arith.constant 0 : index
      %40 = vector.load %arg13[%c0_27, %c0_28] : memref<32x32xbf16, #tpu.memory_space<vmem>>, vector<32x32xbf16>
      %cst_29 = arith.constant dense<0.000000e+00> : vector<16x32xf32>
      %41 = tpu.matmul %39, %40, %cst_29 {dimension_numbers = #tpu.dot_dimension_numbers<[1], [0], [0], [1], [0, 0, 1, 1], [], []>} : vector<16x32xbf16>, vector<32x32xbf16>, vector<16x32xf32> -> vector<16x32xf32>
      %c0_30 = arith.constant 0 : index
      %c0_31 = arith.constant 0 : index
      %42 = vector.load %arg14[%c0_30, %c0_31] : memref<1x32xf32, #tpu.memory_space<vmem>>, vector<1x32xf32>
      %43 = vector.broadcast %42 : vector<1x32xf32> to vector<16x32xf32>
      %44 = arith.addf %41, %43 : vector<16x32xf32>
      %cst_32 = arith.constant 5.000000e-01 : f32
      %45 = vector.broadcast %cst_32 : f32 to vector<16x32xf32>
      %46 = arith.mulf %45, %44 : vector<16x32xf32>
      %cst_33 = arith.constant 0.707106769 : f32
      %47 = vector.broadcast %cst_33 : f32 to vector<16x32xf32>
      %48 = arith.mulf %44, %47 : vector<16x32xf32>
      %49 = math.erf %48 : vector<16x32xf32>
      %cst_34 = arith.constant 1.000000e+00 : f32
      %50 = vector.broadcast %cst_34 : f32 to vector<16x32xf32>
      %51 = arith.addf %50, %49 : vector<16x32xf32>
      %52 = arith.mulf %46, %51 : vector<16x32xf32>
      %53 = arith.truncf %52 : vector<16x32xf32> to vector<16x32xbf16>
      %c0_35 = arith.constant 0 : index
      %c0_36 = arith.constant 0 : index
      %54 = vector.load %arg15[%c0_35, %c0_36] : memref<32x32xbf16, #tpu.memory_space<vmem>>, vector<32x32xbf16>
      %cst_37 = arith.constant dense<0.000000e+00> : vector<16x32xf32>
      %55 = tpu.matmul %53, %54, %cst_37 {dimension_numbers = #tpu.dot_dimension_numbers<[1], [0], [0], [1], [0, 0, 1, 1], [], []>} : vector<16x32xbf16>, vector<32x32xbf16>, vector<16x32xf32> -> vector<16x32xf32>
      %c0_38 = arith.constant 0 : index
      %c0_39 = arith.constant 0 : index
      %56 = vector.load %arg16[%c0_38, %c0_39] : memref<1x32xf32, #tpu.memory_space<vmem>>, vector<1x32xf32>
      %57 = vector.broadcast %56 : vector<1x32xf32> to vector<16x32xf32>
      %58 = arith.addf %55, %57 : vector<16x32xf32>
      %c0_40 = arith.constant 0 : index
      %c0_41 = arith.constant 0 : index
      %59 = vector.load %arg2[%c0_40, %c0_41] : memref<16x32xf32, #tpu.memory_space<vmem>>, vector<16x32xf32>
      %60 = arith.addf %58, %59 : vector<16x32xf32>
      %c0_42 = arith.constant 0 : index
      %c0_43 = arith.constant 0 : index
      %61 = vector.load %arg17[%c0_42, %c0_43] : memref<16x32xf32, #tpu.memory_space<vmem>>, vector<16x32xf32>
      tpu.vector_store %arg17[%c0_42, %c0_43], %60 {strides = array<i32>} : memref<16x32xf32, #tpu.memory_space<vmem>>, vector<16x32xf32>,
    } else {
    }
    return
  }
  func.func @transform_0(%arg0: i32, %arg1: i32) -> (i32, i32) {
    %c0_i32 = arith.constant 0 : i32
    %c0_i32_0 = arith.constant 0 : i32
    return %arg0, %c0_i32 : i32, i32
  }
  func.func @transform_1(%arg0: i32, %arg1: i32) -> (i32, i32) {
    %c0_i32 = arith.constant 0 : i32
    %c0_i32_0 = arith.constant 0 : i32
    %c0_i32_1 = arith.constant 0 : i32
    return %c0_i32, %c0_i32_0 : i32, i32
  }
  func.func @transform_2(%arg0: i32, %arg1: i32) -> (i32, i32) {
    %c0_i32 = arith.constant 0 : i32
    %c0_i32_0 = arith.constant 0 : i32
    %c0_i32_1 = arith.constant 0 : i32
    return %c0_i32, %c0_i32_0 : i32, i32
  }
  func.func @transform_3(%arg0: i32, %arg1: i32) -> (i32, i32) {
    %c0_i32 = arith.constant 0 : i32
    %c0_i32_0 = arith.constant 0 : i32
    %c0_i32_1 = arith.constant 0 : i32
    return %c0_i32, %c0_i32_0 : i32, i32
  }
  func.func @transform_4(%arg0: i32, %arg1: i32) -> (i32, i32) {
    %c0_i32 = arith.constant 0 : i32
    %c0_i32_0 = arith.constant 0 : i32
    %c0_i32_1 = arith.constant 0 : i32
    return %c0_i32, %c0_i32_0 : i32, i32
  }
  func.func @transform_5(%arg0: i32, %arg1: i32) -> (i32, i32, i32) {
    %c0_i32 = arith.constant 0 : i32
    %c0_i32_0 = arith.constant 0 : i32
    %c0_i32_1 = arith.constant 0 : i32
    %c0_i32_2 = arith.constant 0 : i32
    return %c0_i32, %c0_i32_0, %c0_i32_1 : i32, i32, i32
  }
  func.func @transform_6(%arg0: i32, %arg1: i32) -> (i32, i32, i32) {
    %c0_i32 = arith.constant 0 : i32
    %c0_i32_0 = arith.constant 0 : i32
    %c0_i32_1 = arith.constant 0 : i32
    %c0_i32_2 = arith.constant 0 : i32
    return %c0_i32, %c0_i32_0, %c0_i32_1 : i32, i32, i32
  }
  func.func @transform_7(%arg0: i32, %arg1: i32) -> (i32, i32, i32) {
    %c0_i32 = arith.constant 0 : i32
    %c0_i32_0 = arith.constant 0 : i32
    %c0_i32_1 = arith.constant 0 : i32
    return %arg1, %c0_i32, %c0_i32_0 : i32, i32, i32
  }
  func.func @transform_8(%arg0: i32, %arg1: i32) -> (i32, i32, i32) {
    %c0_i32 = arith.constant 0 : i32
    %c0_i32_0 = arith.constant 0 : i32
    %c0_i32_1 = arith.constant 0 : i32
    return %arg1, %c0_i32, %c0_i32_0 : i32, i32, i32
  }
  func.func @transform_9(%arg0: i32, %arg1: i32) -> (i32, i32, i32) {
    %c0_i32 = arith.constant 0 : i32
    %c0_i32_0 = arith.constant 0 : i32
    %c0_i32_1 = arith.constant 0 : i32
    return %arg1, %c0_i32, %c0_i32_0 : i32, i32, i32
  }
  func.func @transform_10(%arg0: i32, %arg1: i32) -> (i32, i32, i32) {
    %c0_i32 = arith.constant 0 : i32
    %c0_i32_0 = arith.constant 0 : i32
    %c0_i32_1 = arith.constant 0 : i32
    return %arg1, %c0_i32, %c0_i32_0 : i32, i32, i32
  }
  func.func @transform_11(%arg0: i32, %arg1: i32) -> (i32, i32) {
    %c0_i32 = arith.constant 0 : i32
    %c0_i32_0 = arith.constant 0 : i32
    %c0_i32_1 = arith.constant 0 : i32
    return %c0_i32, %c0_i32_0 : i32, i32
  }
  func.func @transform_12(%arg0: i32, %arg1: i32) -> (i32, i32) {
    %c0_i32 = arith.constant 0 : i32
    %c0_i32_0 = arith.constant 0 : i32
    %c0_i32_1 = arith.constant 0 : i32
    return %c0_i32, %c0_i32_0 : i32, i32
  }
  func.func @transform_13(%arg0: i32, %arg1: i32) -> (i32, i32) {
    %c0_i32 = arith.constant 0 : i32
    %c0_i32_0 = arith.constant 0 : i32
    %c0_i32_1 = arith.constant 0 : i32
    return %c0_i32, %c0_i32_0 : i32, i32
  }
  func.func @transform_14(%arg0: i32, %arg1: i32) -> (i32, i32) {
    %c0_i32 = arith.constant 0 : i32
    %c0_i32_0 = arith.constant 0 : i32
    %c0_i32_1 = arith.constant 0 : i32
    return %c0_i32, %c0_i32_0 : i32, i32
  }
  func.func @transform_15(%arg0: i32, %arg1: i32) -> (i32, i32) {
    %c0_i32 = arith.constant 0 : i32
    %c0_i32_0 = arith.constant 0 : i32
    return %arg0, %c0_i32 : i32, i32
  }
  func.func @transform_16(%arg0: i32, %arg1: i32) -> (i32, i32) {
    %c0_i32 = arith.constant 0 : i32
    %c0_i32_0 = arith.constant 0 : i32
    return %arg0, %c0_i32 : i32, i32
  }
}

module attributes {stable_mosaic.version = 11 : i64} {
  func.func @_attn_kernel(%arg0: i32, %arg1: memref<2x8x32xf32, #tpu.memory_space<vmem>>, %arg2: memref<1x32xf32, #tpu.memory_space<vmem>>, %arg3: memref<1x32xf32, #tpu.memory_space<vmem>>, %arg4: memref<2x32x16xbf16, #tpu.memory_space<vmem>>, %arg5: memref<2x32x16xbf16, #tpu.memory_space<vmem>>, %arg6: memref<2x32x16xbf16, #tpu.memory_space<vmem>>, %arg7: memref<2x16x32xbf16, #tpu.memory_space<vmem>>, %arg8: memref<1x32xf32, #tpu.memory_space<vmem>>, %arg9: memref<2x8x32xf32, #tpu.memory_space<vmem>>) attributes {dimension_semantics = [#tpu.dimension_semantics<parallel>], iteration_bounds = array<i64: 1>, scalar_prefetch = 0 : i64, scratch_operands = 0 : i64, tpu.core_type = #tpu.core_type<tc>, window_params = [{transform_indices = @transform_0, window_bounds = array<i64: 2, 8, 32>}, {pipeline_mode = #tpu.pipeline_mode<synchronous>, transform_indices = @transform_1, window_bounds = array<i64: 1, 32>}, {pipeline_mode = #tpu.pipeline_mode<synchronous>, transform_indices = @transform_2, window_bounds = array<i64: 1, 32>}, {pipeline_mode = #tpu.pipeline_mode<synchronous>, transform_indices = @transform_3, window_bounds = array<i64: 2, 32, 16>}, {pipeline_mode = #tpu.pipeline_mode<synchronous>, transform_indices = @transform_4, window_bounds = array<i64: 2, 32, 16>}, {pipeline_mode = #tpu.pipeline_mode<synchronous>, transform_indices = @transform_5, window_bounds = array<i64: 2, 32, 16>}, {pipeline_mode = #tpu.pipeline_mode<synchronous>, transform_indices = @transform_6, window_bounds = array<i64: 2, 16, 32>}, {pipeline_mode = #tpu.pipeline_mode<synchronous>, transform_indices = @transform_7, window_bounds = array<i64: 1, 32>}, {transform_indices = @transform_8, window_bounds = array<i64: 2, 8, 32>}]} {
    %c0 = arith.constant 0 : index
    %c0_0 = arith.constant 0 : index
    %c0_1 = arith.constant 0 : index
    %0 = vector.load %arg1[%c0, %c0_0, %c0_1] : memref<2x8x32xf32, #tpu.memory_space<vmem>>, vector<2x8x32xf32>
    %1 = vector.shape_cast %0 : vector<2x8x32xf32> to vector<16x32xf32>
    %c0_2 = arith.constant 0 : index
    %c0_3 = arith.constant 0 : index
    %2 = vector.load %arg2[%c0_2, %c0_3] : memref<1x32xf32, #tpu.memory_space<vmem>>, vector<1x32xf32>
    %c0_4 = arith.constant 0 : index
    %c0_5 = arith.constant 0 : index
    %3 = vector.load %arg3[%c0_4, %c0_5] : memref<1x32xf32, #tpu.memory_space<vmem>>, vector<1x32xf32>
    %cst = arith.constant dense<0.000000e+00> : vector<16xf32>
    %4 = vector.multi_reduction <add>, %1, %cst [1] : vector<16x32xf32> to vector<16xf32>
    %5 = vector.shape_cast %4 : vector<16xf32> to vector<16x1xf32>
    %cst_6 = arith.constant 3.200000e+01 : f32
    %6 = vector.broadcast %cst_6 : f32 to vector<16x1xf32>
    %7 = arith.divf %5, %6 : vector<16x1xf32>
    %8 = vector.broadcast %7 : vector<16x1xf32> to vector<16x32xf32>
    %9 = arith.subf %1, %8 : vector<16x32xf32>
    %10 = arith.mulf %9, %9 : vector<16x32xf32>
    %cst_7 = arith.constant dense<0.000000e+00> : vector<16xf32>
    %11 = vector.multi_reduction <add>, %10, %cst_7 [1] : vector<16x32xf32> to vector<16xf32>
    %12 = vector.shape_cast %11 : vector<16xf32> to vector<16x1xf32>
    %cst_8 = arith.constant 3.200000e+01 : f32
    %13 = vector.broadcast %cst_8 : f32 to vector<16x1xf32>
    %14 = arith.divf %12, %13 : vector<16x1xf32>
    %15 = vector.broadcast %7 : vector<16x1xf32> to vector<16x32xf32>
    %16 = arith.subf %1, %15 : vector<16x32xf32>
    %cst_9 = arith.constant 9.99999974E-6 : f32
    %17 = vector.broadcast %cst_9 : f32 to vector<16x1xf32>
    %18 = arith.addf %14, %17 : vector<16x1xf32>
    %19 = math.rsqrt %18 : vector<16x1xf32>
    %20 = vector.broadcast %19 : vector<16x1xf32> to vector<16x32xf32>
    %21 = arith.mulf %16, %20 : vector<16x32xf32>
    %22 = vector.broadcast %2 : vector<1x32xf32> to vector<16x32xf32>
    %23 = arith.mulf %21, %22 : vector<16x32xf32>
    %24 = vector.broadcast %3 : vector<1x32xf32> to vector<16x32xf32>
    %25 = arith.addf %23, %24 : vector<16x32xf32>
    %26 = arith.truncf %25 : vector<16x32xf32> to vector<16x32xbf16>
    %cst_10 = arith.constant 0.000000e+00 : f32
    %27 = vector.broadcast %cst_10 : f32 to vector<16x32xf32>
    %c0_11 = arith.constant 0 : index
    %c0_12 = arith.constant 0 : index
    %c0_13 = arith.constant 0 : index
    %28 = vector.load %arg4[%c0_11, %c0_12, %c0_13] : memref<2x32x16xbf16, #tpu.memory_space<vmem>>, vector<1x32x16xbf16>
    %29 = vector.shape_cast %28 : vector<1x32x16xbf16> to vector<32x16xbf16>
    %cst_14 = arith.constant dense<0.000000e+00> : vector<16x16xf32>
    %30 = tpu.matmul %26, %29, %cst_14 {dimension_numbers = #tpu.dot_dimension_numbers<[1], [0], [0], [1], [0, 0, 1, 1], [], []>} : vector<16x32xbf16>, vector<32x16xbf16>, vector<16x16xf32> -> vector<16x16xf32>
    %cst_15 = arith.constant 2.500000e-01 : f32
    %31 = vector.broadcast %cst_15 : f32 to vector<16x16xf32>
    %32 = arith.mulf %30, %31 : vector<16x16xf32>
    %c0_16 = arith.constant 0 : index
    %c0_17 = arith.constant 0 : index
    %c0_18 = arith.constant 0 : index
    %33 = vector.load %arg5[%c0_16, %c0_17, %c0_18] : memref<2x32x16xbf16, #tpu.memory_space<vmem>>, vector<1x32x16xbf16>
    %34 = vector.shape_cast %33 : vector<1x32x16xbf16> to vector<32x16xbf16>
    %cst_19 = arith.constant dense<0.000000e+00> : vector<16x16xf32>
    %35 = tpu.matmul %26, %34, %cst_19 {dimension_numbers = #tpu.dot_dimension_numbers<[1], [0], [0], [1], [0, 0, 1, 1], [], []>} : vector<16x32xbf16>, vector<32x16xbf16>, vector<16x16xf32> -> vector<16x16xf32>
    %c0_20 = arith.constant 0 : index
    %c0_21 = arith.constant 0 : index
    %c0_22 = arith.constant 0 : index
    %36 = vector.load %arg6[%c0_20, %c0_21, %c0_22] : memref<2x32x16xbf16, #tpu.memory_space<vmem>>, vector<1x32x16xbf16>
    %37 = vector.shape_cast %36 : vector<1x32x16xbf16> to vector<32x16xbf16>
    %cst_23 = arith.constant dense<0.000000e+00> : vector<16x16xf32>
    %38 = tpu.matmul %26, %37, %cst_23 {dimension_numbers = #tpu.dot_dimension_numbers<[1], [0], [0], [1], [0, 0, 1, 1], [], []>} : vector<16x32xbf16>, vector<32x16xbf16>, vector<16x16xf32> -> vector<16x16xf32>
    %39 = vector.shape_cast %32 : vector<16x16xf32> to vector<2x8x16xf32>
    %40 = arith.truncf %39 : vector<2x8x16xf32> to vector<2x8x16xbf16>
    %41 = vector.shape_cast %35 : vector<16x16xf32> to vector<2x8x16xf32>
    %42 = arith.truncf %41 : vector<2x8x16xf32> to vector<2x8x16xbf16>
    %43 = vector.shape_cast %38 : vector<16x16xf32> to vector<2x8x16xf32>
    %44 = arith.truncf %43 : vector<2x8x16xf32> to vector<2x8x16xbf16>
    "tpu.trace_start"() <{level = 10 : i32, message = "bqh,bkh->bqk"}> : () -> ()
    %cst_24 = arith.constant dense<0.000000e+00> : vector<2x8x8xf32>
    %45 = tpu.matmul %40, %42, %cst_24 {dimension_numbers = #tpu.dot_dimension_numbers<[2], [2], [1], [1], [0, 0, 0, 1, 1, 1], [0], [0]>} : vector<2x8x16xbf16>, vector<2x8x16xbf16>, vector<2x8x8xf32> -> vector<2x8x8xf32>
    "tpu.trace_stop"() : () -> ()
    %cst_25 = arith.constant dense<0xFF800000> : vector<2x8xf32>
    %46 = vector.multi_reduction <maximumf>, %45, %cst_25 [2] : vector<2x8x8xf32> to vector<2x8xf32>
    %47 = vector.shape_cast %46 : vector<2x8xf32> to vector<2x8x1xf32>
    %48 = vector.broadcast %47 : vector<2x8x1xf32> to vector<2x8x8xf32>
    %49 = arith.subf %45, %48 : vector<2x8x8xf32>
    %50 = math.exp %49 : vector<2x8x8xf32>
    %cst_26 = arith.constant dense<0.000000e+00> : vector<2x8xf32>
    %51 = vector.multi_reduction <add>, %50, %cst_26 [2] : vector<2x8x8xf32> to vector<2x8xf32>
    %52 = vector.shape_cast %51 : vector<2x8xf32> to vector<2x8x1xf32>
    %53 = tpu.reciprocal %52 {approx = true} : vector<2x8x1xf32> -> vector<2x8x1xf32>
    %54 = vector.broadcast %53 : vector<2x8x1xf32> to vector<2x8x8xf32>
    %55 = arith.mulf %50, %54 : vector<2x8x8xf32>
    %56 = arith.truncf %55 : vector<2x8x8xf32> to vector<2x8x8xbf16>
    "tpu.trace_start"() <{level = 10 : i32, message = "bqk,bkh->bqh"}> : () -> ()
    %cst_27 = arith.constant dense<0.000000e+00> : vector<2x8x16xf32>
    %57 = tpu.matmul %56, %44, %cst_27 {dimension_numbers = #tpu.dot_dimension_numbers<[2], [1], [1], [2], [0, 0, 0, 1, 1, 2], [0], [0]>} : vector<2x8x8xbf16>, vector<2x8x16xbf16>, vector<2x8x16xf32> -> vector<2x8x16xf32>
    "tpu.trace_stop"() : () -> ()
    %58 = vector.shape_cast %57 : vector<2x8x16xf32> to vector<16x16xf32>
    %59 = arith.truncf %58 : vector<16x16xf32> to vector<16x16xbf16>
    %c0_28 = arith.constant 0 : index
    %c0_29 = arith.constant 0 : index
    %c0_30 = arith.constant 0 : index
    %60 = vector.load %arg7[%c0_28, %c0_29, %c0_30] : memref<2x16x32xbf16, #tpu.memory_space<vmem>>, vector<1x16x32xbf16>
    %61 = vector.shape_cast %60 : vector<1x16x32xbf16> to vector<16x32xbf16>
    %cst_31 = arith.constant dense<0.000000e+00> : vector<16x32xf32>
    %62 = tpu.matmul %59, %61, %cst_31 {dimension_numbers = #tpu.dot_dimension_numbers<[1], [0], [0], [1], [0, 0, 1, 1], [], []>} : vector<16x16xbf16>, vector<16x32xbf16>, vector<16x32xf32> -> vector<16x32xf32>
    %63 = arith.addf %27, %62 : vector<16x32xf32>
    %c1 = arith.constant 1 : index
    %c0_32 = arith.constant 0 : index
    %c0_33 = arith.constant 0 : index
    %64 = vector.load %arg4[%c1, %c0_32, %c0_33] : memref<2x32x16xbf16, #tpu.memory_space<vmem>>, vector<1x32x16xbf16>
    %65 = vector.shape_cast %64 : vector<1x32x16xbf16> to vector<32x16xbf16>
    %cst_34 = arith.constant dense<0.000000e+00> : vector<16x16xf32>
    %66 = tpu.matmul %26, %65, %cst_34 {dimension_numbers = #tpu.dot_dimension_numbers<[1], [0], [0], [1], [0, 0, 1, 1], [], []>} : vector<16x32xbf16>, vector<32x16xbf16>, vector<16x16xf32> -> vector<16x16xf32>
    %cst_35 = arith.constant 2.500000e-01 : f32
    %67 = vector.broadcast %cst_35 : f32 to vector<16x16xf32>
    %68 = arith.mulf %66, %67 : vector<16x16xf32>
    %c1_36 = arith.constant 1 : index
    %c0_37 = arith.constant 0 : index
    %c0_38 = arith.constant 0 : index
    %69 = vector.load %arg5[%c1_36, %c0_37, %c0_38] : memref<2x32x16xbf16, #tpu.memory_space<vmem>>, vector<1x32x16xbf16>
    %70 = vector.shape_cast %69 : vector<1x32x16xbf16> to vector<32x16xbf16>
    %cst_39 = arith.constant dense<0.000000e+00> : vector<16x16xf32>
    %71 = tpu.matmul %26, %70, %cst_39 {dimension_numbers = #tpu.dot_dimension_numbers<[1], [0], [0], [1], [0, 0, 1, 1], [], []>} : vector<16x32xbf16>, vector<32x16xbf16>, vector<16x16xf32> -> vector<16x16xf32>
    %c1_40 = arith.constant 1 : index
    %c0_41 = arith.constant 0 : index
    %c0_42 = arith.constant 0 : index
    %72 = vector.load %arg6[%c1_40, %c0_41, %c0_42] : memref<2x32x16xbf16, #tpu.memory_space<vmem>>, vector<1x32x16xbf16>
    %73 = vector.shape_cast %72 : vector<1x32x16xbf16> to vector<32x16xbf16>
    %cst_43 = arith.constant dense<0.000000e+00> : vector<16x16xf32>
    %74 = tpu.matmul %26, %73, %cst_43 {dimension_numbers = #tpu.dot_dimension_numbers<[1], [0], [0], [1], [0, 0, 1, 1], [], []>} : vector<16x32xbf16>, vector<32x16xbf16>, vector<16x16xf32> -> vector<16x16xf32>
    %75 = vector.shape_cast %68 : vector<16x16xf32> to vector<2x8x16xf32>
    %76 = arith.truncf %75 : vector<2x8x16xf32> to vector<2x8x16xbf16>
    %77 = vector.shape_cast %71 : vector<16x16xf32> to vector<2x8x16xf32>
    %78 = arith.truncf %77 : vector<2x8x16xf32> to vector<2x8x16xbf16>
    %79 = vector.shape_cast %74 : vector<16x16xf32> to vector<2x8x16xf32>
    %80 = arith.truncf %79 : vector<2x8x16xf32> to vector<2x8x16xbf16>
    "tpu.trace_start"() <{level = 10 : i32, message = "bqh,bkh->bqk"}> : () -> ()
    %cst_44 = arith.constant dense<0.000000e+00> : vector<2x8x8xf32>
    %81 = tpu.matmul %76, %78, %cst_44 {dimension_numbers = #tpu.dot_dimension_numbers<[2], [2], [1], [1], [0, 0, 0, 1, 1, 1], [0], [0]>} : vector<2x8x16xbf16>, vector<2x8x16xbf16>, vector<2x8x8xf32> -> vector<2x8x8xf32>
    "tpu.trace_stop"() : () -> ()
    %cst_45 = arith.constant dense<0xFF800000> : vector<2x8xf32>
    %82 = vector.multi_reduction <maximumf>, %81, %cst_45 [2] : vector<2x8x8xf32> to vector<2x8xf32>
    %83 = vector.shape_cast %82 : vector<2x8xf32> to vector<2x8x1xf32>
    %84 = vector.broadcast %83 : vector<2x8x1xf32> to vector<2x8x8xf32>
    %85 = arith.subf %81, %84 : vector<2x8x8xf32>
    %86 = math.exp %85 : vector<2x8x8xf32>
    %cst_46 = arith.constant dense<0.000000e+00> : vector<2x8xf32>
    %87 = vector.multi_reduction <add>, %86, %cst_46 [2] : vector<2x8x8xf32> to vector<2x8xf32>
    %88 = vector.shape_cast %87 : vector<2x8xf32> to vector<2x8x1xf32>
    %89 = tpu.reciprocal %88 {approx = true} : vector<2x8x1xf32> -> vector<2x8x1xf32>
    %90 = vector.broadcast %89 : vector<2x8x1xf32> to vector<2x8x8xf32>
    %91 = arith.mulf %86, %90 : vector<2x8x8xf32>
    %92 = arith.truncf %91 : vector<2x8x8xf32> to vector<2x8x8xbf16>
    "tpu.trace_start"() <{level = 10 : i32, message = "bqk,bkh->bqh"}> : () -> ()
    %cst_47 = arith.constant dense<0.000000e+00> : vector<2x8x16xf32>
    %93 = tpu.matmul %92, %80, %cst_47 {dimension_numbers = #tpu.dot_dimension_numbers<[2], [1], [1], [2], [0, 0, 0, 1, 1, 2], [0], [0]>} : vector<2x8x8xbf16>, vector<2x8x16xbf16>, vector<2x8x16xf32> -> vector<2x8x16xf32>
    "tpu.trace_stop"() : () -> ()
    %94 = vector.shape_cast %93 : vector<2x8x16xf32> to vector<16x16xf32>
    %95 = arith.truncf %94 : vector<16x16xf32> to vector<16x16xbf16>
    %c1_48 = arith.constant 1 : index
    %c0_49 = arith.constant 0 : index
    %c0_50 = arith.constant 0 : index
    %96 = vector.load %arg7[%c1_48, %c0_49, %c0_50] : memref<2x16x32xbf16, #tpu.memory_space<vmem>>, vector<1x16x32xbf16>
    %97 = vector.shape_cast %96 : vector<1x16x32xbf16> to vector<16x32xbf16>
    %cst_51 = arith.constant dense<0.000000e+00> : vector<16x32xf32>
    %98 = tpu.matmul %95, %97, %cst_51 {dimension_numbers = #tpu.dot_dimension_numbers<[1], [0], [0], [1], [0, 0, 1, 1], [], []>} : vector<16x16xbf16>, vector<16x32xbf16>, vector<16x32xf32> -> vector<16x32xf32>
    %99 = arith.addf %63, %98 : vector<16x32xf32>
    %c0_52 = arith.constant 0 : index
    %c0_53 = arith.constant 0 : index
    %100 = vector.load %arg8[%c0_52, %c0_53] : memref<1x32xf32, #tpu.memory_space<vmem>>, vector<1x32xf32>
    %101 = vector.broadcast %100 : vector<1x32xf32> to vector<16x32xf32>
    %102 = arith.addf %99, %101 : vector<16x32xf32>
    %103 = vector.shape_cast %102 : vector<16x32xf32> to vector<2x8x32xf32>
    %104 = arith.addf %103, %0 : vector<2x8x32xf32>
    %c0_54 = arith.constant 0 : index
    %c0_55 = arith.constant 0 : index
    %c0_56 = arith.constant 0 : index
    %105 = vector.load %arg9[%c0_54, %c0_55, %c0_56] : memref<2x8x32xf32, #tpu.memory_space<vmem>>, vector<2x8x32xf32>
    tpu.vector_store %arg9[%c0_54, %c0_55, %c0_56], %104 {strides = array<i32>} : memref<2x8x32xf32, #tpu.memory_space<vmem>>, vector<2x8x32xf32>,
    return
  }
  func.func @transform_0(%arg0: i32) -> (i32, i32, i32) {
    %c0_i32 = arith.constant 0 : i32
    %c0_i32_0 = arith.constant 0 : i32
    %c0_i32_1 = arith.constant 0 : i32
    return %arg0, %c0_i32, %c0_i32_0 : i32, i32, i32
  }
  func.func @transform_1(%arg0: i32) -> (i32, i32) {
    %c0_i32 = arith.constant 0 : i32
    %c0_i32_0 = arith.constant 0 : i32
    %c0_i32_1 = arith.constant 0 : i32
    return %c0_i32, %c0_i32_0 : i32, i32
  }
  func.func @transform_2(%arg0: i32) -> (i32, i32) {
    %c0_i32 = arith.constant 0 : i32
    %c0_i32_0 = arith.constant 0 : i32
    %c0_i32_1 = arith.constant 0 : i32
    return %c0_i32, %c0_i32_0 : i32, i32
  }
  func.func @transform_3(%arg0: i32) -> (i32, i32, i32) {
    %c0_i32 = arith.constant 0 : i32
    %c0_i32_0 = arith.constant 0 : i32
    %c0_i32_1 = arith.constant 0 : i32
    %c0_i32_2 = arith.constant 0 : i32
    return %c0_i32, %c0_i32_0, %c0_i32_1 : i32, i32, i32
  }
  func.func @transform_4(%arg0: i32) -> (i32, i32, i32) {
    %c0_i32 = arith.constant 0 : i32
    %c0_i32_0 = arith.constant 0 : i32
    %c0_i32_1 = arith.constant 0 : i32
    %c0_i32_2 = arith.constant 0 : i32
    return %c0_i32, %c0_i32_0, %c0_i32_1 : i32, i32, i32
  }
  func.func @transform_5(%arg0: i32) -> (i32, i32, i32) {
    %c0_i32 = arith.constant 0 : i32
    %c0_i32_0 = arith.constant 0 : i32
    %c0_i32_1 = arith.constant 0 : i32
    %c0_i32_2 = arith.constant 0 : i32
    return %c0_i32, %c0_i32_0, %c0_i32_1 : i32, i32, i32
  }
  func.func @transform_6(%arg0: i32) -> (i32, i32, i32) {
    %c0_i32 = arith.constant 0 : i32
    %c0_i32_0 = arith.constant 0 : i32
    %c0_i32_1 = arith.constant 0 : i32
    %c0_i32_2 = arith.constant 0 : i32
    return %c0_i32, %c0_i32_0, %c0_i32_1 : i32, i32, i32
  }
  func.func @transform_7(%arg0: i32) -> (i32, i32) {
    %c0_i32 = arith.constant 0 : i32
    %c0_i32_0 = arith.constant 0 : i32
    %c0_i32_1 = arith.constant 0 : i32
    return %c0_i32, %c0_i32_0 : i32, i32
  }
  func.func @transform_8(%arg0: i32) -> (i32, i32, i32) {
    %c0_i32 = arith.constant 0 : i32
    %c0_i32_0 = arith.constant 0 : i32
    %c0_i32_1 = arith.constant 0 : i32
    return %arg0, %c0_i32, %c0_i32_0 : i32, i32, i32
  }
}

module attributes {stable_mosaic.version = 11 : i64} {
  func.func @_moe_film_kernel(%arg0: i32, %arg1: i32, %arg2: memref<16x32xf32, #tpu.memory_space<vmem>>, %arg3: memref<1x32xf32, #tpu.memory_space<vmem>>, %arg4: memref<1x32xf32, #tpu.memory_space<vmem>>, %arg5: memref<32x128xbf16, #tpu.memory_space<vmem>>, %arg6: memref<1x128xf32, #tpu.memory_space<vmem>>, %arg7: memref<2x32x32xbf16, #tpu.memory_space<vmem>>, %arg8: memref<2x1x32xf32, #tpu.memory_space<vmem>>, %arg9: memref<1x32x32xbf16, #tpu.memory_space<vmem>>, %arg10: memref<1x1x32xf32, #tpu.memory_space<vmem>>, %arg11: memref<1x32x32xbf16, #tpu.memory_space<vmem>>, %arg12: memref<1x1x32xf32, #tpu.memory_space<vmem>>, %arg13: memref<32x32xbf16, #tpu.memory_space<vmem>>, %arg14: memref<1x32xf32, #tpu.memory_space<vmem>>, %arg15: memref<32x32xbf16, #tpu.memory_space<vmem>>, %arg16: memref<1x32xf32, #tpu.memory_space<vmem>>, %arg17: memref<16x32xf32, #tpu.memory_space<vmem>>, %arg18: memref<16x128xf32, #tpu.memory_space<vmem>>, %arg19: memref<16x32xf32, #tpu.memory_space<vmem>>, %arg20: memref<16x32xf32, #tpu.memory_space<vmem>>) attributes {dimension_semantics = [#tpu.dimension_semantics<parallel>, #tpu.dimension_semantics<arbitrary>], iteration_bounds = array<i64: 1, 1>, scalar_prefetch = 0 : i64, scratch_operands = 2 : i64, tpu.core_type = #tpu.core_type<tc>, window_params = [{transform_indices = @transform_0, window_bounds = array<i64: 16, 32>}, {pipeline_mode = #tpu.pipeline_mode<synchronous>, transform_indices = @transform_1, window_bounds = array<i64: 1, 32>}, {pipeline_mode = #tpu.pipeline_mode<synchronous>, transform_indices = @transform_2, window_bounds = array<i64: 1, 32>}, {pipeline_mode = #tpu.pipeline_mode<synchronous>, transform_indices = @transform_3, window_bounds = array<i64: 32, 128>}, {pipeline_mode = #tpu.pipeline_mode<synchronous>, transform_indices = @transform_4, window_bounds = array<i64: 1, 128>}, {pipeline_mode = #tpu.pipeline_mode<synchronous>, transform_indices = @transform_5, window_bounds = array<i64: 2, 32, 32>}, {pipeline_mode = #tpu.pipeline_mode<synchronous>, transform_indices = @transform_6, window_bounds = array<i64: 2, 1, 32>}, {transform_indices = @transform_7, window_bounds = array<i64: 1, 32, 32>}, {transform_indices = @transform_8, window_bounds = array<i64: 1, 1, 32>}, {transform_indices = @transform_9, window_bounds = array<i64: 1, 32, 32>}, {transform_indices = @transform_10, window_bounds = array<i64: 1, 1, 32>}, {pipeline_mode = #tpu.pipeline_mode<synchronous>, transform_indices = @transform_11, window_bounds = array<i64: 32, 32>}, {pipeline_mode = #tpu.pipeline_mode<synchronous>, transform_indices = @transform_12, window_bounds = array<i64: 1, 32>}, {pipeline_mode = #tpu.pipeline_mode<synchronous>, transform_indices = @transform_13, window_bounds = array<i64: 32, 32>}, {pipeline_mode = #tpu.pipeline_mode<synchronous>, transform_indices = @transform_14, window_bounds = array<i64: 1, 32>}, {transform_indices = @transform_15, window_bounds = array<i64: 16, 32>}, {transform_indices = @transform_16, window_bounds = array<i64: 16, 128>}]} {
    %c0_i32 = arith.constant 0 : i32
    %0 = arith.cmpi eq, %arg1, %c0_i32 : i32
    %1 = arith.extui %0 : i1 to i32
    %c0_i32_0 = arith.constant 0 : i32
    %2 = arith.cmpi ne, %1, %c0_i32_0 : i32
    scf.if %2 {
      %c0_25 = arith.constant 0 : index
      %c0_26 = arith.constant 0 : index
      %38 = vector.load %arg2[%c0_25, %c0_26] : memref<16x32xf32, #tpu.memory_space<vmem>>, vector<16x32xf32>
      %c0_27 = arith.constant 0 : index
      %c0_28 = arith.constant 0 : index
      %39 = vector.load %arg3[%c0_27, %c0_28] : memref<1x32xf32, #tpu.memory_space<vmem>>, vector<1x32xf32>
      %c0_29 = arith.constant 0 : index
      %c0_30 = arith.constant 0 : index
      %40 = vector.load %arg4[%c0_29, %c0_30] : memref<1x32xf32, #tpu.memory_space<vmem>>, vector<1x32xf32>
      %cst_31 = arith.constant dense<0.000000e+00> : vector<16xf32>
      %41 = vector.multi_reduction <add>, %38, %cst_31 [1] : vector<16x32xf32> to vector<16xf32>
      %42 = vector.shape_cast %41 : vector<16xf32> to vector<16x1xf32>
      %cst_32 = arith.constant 3.200000e+01 : f32
      %43 = vector.broadcast %cst_32 : f32 to vector<16x1xf32>
      %44 = arith.divf %42, %43 : vector<16x1xf32>
      %45 = vector.broadcast %44 : vector<16x1xf32> to vector<16x32xf32>
      %46 = arith.subf %38, %45 : vector<16x32xf32>
      %47 = arith.mulf %46, %46 : vector<16x32xf32>
      %cst_33 = arith.constant dense<0.000000e+00> : vector<16xf32>
      %48 = vector.multi_reduction <add>, %47, %cst_33 [1] : vector<16x32xf32> to vector<16xf32>
      %49 = vector.shape_cast %48 : vector<16xf32> to vector<16x1xf32>
      %cst_34 = arith.constant 3.200000e+01 : f32
      %50 = vector.broadcast %cst_34 : f32 to vector<16x1xf32>
      %51 = arith.divf %49, %50 : vector<16x1xf32>
      %52 = vector.broadcast %44 : vector<16x1xf32> to vector<16x32xf32>
      %53 = arith.subf %38, %52 : vector<16x32xf32>
      %cst_35 = arith.constant 9.99999974E-6 : f32
      %54 = vector.broadcast %cst_35 : f32 to vector<16x1xf32>
      %55 = arith.addf %51, %54 : vector<16x1xf32>
      %56 = math.rsqrt %55 : vector<16x1xf32>
      %57 = vector.broadcast %56 : vector<16x1xf32> to vector<16x32xf32>
      %58 = arith.mulf %53, %57 : vector<16x32xf32>
      %59 = vector.broadcast %39 : vector<1x32xf32> to vector<16x32xf32>
      %60 = arith.mulf %58, %59 : vector<16x32xf32>
      %61 = vector.broadcast %40 : vector<1x32xf32> to vector<16x32xf32>
      %62 = arith.addf %60, %61 : vector<16x32xf32>
      %63 = arith.truncf %62 : vector<16x32xf32> to vector<16x32xbf16>
      %c0_36 = arith.constant 0 : index
      %c0_37 = arith.constant 0 : index
      %64 = vector.load %arg5[%c0_36, %c0_37] : memref<32x128xbf16, #tpu.memory_space<vmem>>, vector<32x128xbf16>
      %cst_38 = arith.constant dense<0.000000e+00> : vector<16x128xf32>
      %65 = tpu.matmul %63, %64, %cst_38 {dimension_numbers = #tpu.dot_dimension_numbers<[1], [0], [0], [1], [0, 0, 1, 1], [], []>} : vector<16x32xbf16>, vector<32x128xbf16>, vector<16x128xf32> -> vector<16x128xf32>
      %c0_39 = arith.constant 0 : index
      %c0_40 = arith.constant 0 : index
      %66 = vector.load %arg6[%c0_39, %c0_40] : memref<1x128xf32, #tpu.memory_space<vmem>>, vector<1x128xf32>
      %67 = vector.broadcast %66 : vector<1x128xf32> to vector<16x128xf32>
      %68 = arith.addf %65, %67 : vector<16x128xf32>
      %cst_41 = arith.constant dense<0xFF800000> : vector<16xf32>
      %69 = vector.multi_reduction <maximumf>, %68, %cst_41 [1] : vector<16x128xf32> to vector<16xf32>
      %70 = vector.shape_cast %69 : vector<16xf32> to vector<16x1xf32>
      %71 = vector.broadcast %70 : vector<16x1xf32> to vector<16x128xf32>
      %72 = arith.subf %68, %71 : vector<16x128xf32>
      %73 = math.exp %72 : vector<16x128xf32>
      %cst_42 = arith.constant dense<0.000000e+00> : vector<16xf32>
      %74 = vector.multi_reduction <add>, %73, %cst_42 [1] : vector<16x128xf32> to vector<16xf32>
      %75 = vector.shape_cast %74 : vector<16xf32> to vector<16x1xf32>
      %76 = vector.broadcast %75 : vector<16x1xf32> to vector<16x128xf32>
      %77 = arith.divf %73, %76 : vector<16x128xf32>
      %c0_43 = arith.constant 0 : index
      %c0_44 = arith.constant 0 : index
      %78 = vector.load %arg18[%c0_43, %c0_44] : memref<16x128xf32, #tpu.memory_space<vmem>>, vector<16x128xf32>
      tpu.vector_store %arg18[%c0_43, %c0_44], %77 {strides = array<i32>} : memref<16x128xf32, #tpu.memory_space<vmem>>, vector<16x128xf32>,
      %c0_45 = arith.constant 0 : index
      %c0_46 = arith.constant 0 : index
      %c0_47 = arith.constant 0 : index
      %79 = vector.load %arg7[%c0_45, %c0_46, %c0_47] : memref<2x32x32xbf16, #tpu.memory_space<vmem>>, vector<1x32x32xbf16>
      %80 = vector.shape_cast %79 : vector<1x32x32xbf16> to vector<32x32xbf16>
      %cst_48 = arith.constant dense<0.000000e+00> : vector<16x32xf32>
      %81 = tpu.matmul %63, %80, %cst_48 {dimension_numbers = #tpu.dot_dimension_numbers<[1], [0], [0], [1], [0, 0, 1, 1], [], []>} : vector<16x32xbf16>, vector<32x32xbf16>, vector<16x32xf32> -> vector<16x32xf32>
      %c0_49 = arith.constant 0 : index
      %c0_50 = arith.constant 0 : index
      %c0_51 = arith.constant 0 : index
      %82 = vector.load %arg8[%c0_49, %c0_50, %c0_51] : memref<2x1x32xf32, #tpu.memory_space<vmem>>, vector<1x1x32xf32>
      %83 = vector.shape_cast %82 : vector<1x1x32xf32> to vector<1x32xf32>
      %84 = vector.broadcast %83 : vector<1x32xf32> to vector<16x32xf32>
      %85 = arith.addf %81, %84 : vector<16x32xf32>
      %c1 = arith.constant 1 : index
      %c0_52 = arith.constant 0 : index
      %c0_53 = arith.constant 0 : index
      %86 = vector.load %arg7[%c1, %c0_52, %c0_53] : memref<2x32x32xbf16, #tpu.memory_space<vmem>>, vector<1x32x32xbf16>
      %87 = vector.shape_cast %86 : vector<1x32x32xbf16> to vector<32x32xbf16>
      %cst_54 = arith.constant dense<0.000000e+00> : vector<16x32xf32>
      %88 = tpu.matmul %63, %87, %cst_54 {dimension_numbers = #tpu.dot_dimension_numbers<[1], [0], [0], [1], [0, 0, 1, 1], [], []>} : vector<16x32xbf16>, vector<32x32xbf16>, vector<16x32xf32> -> vector<16x32xf32>
      %c1_55 = arith.constant 1 : index
      %c0_56 = arith.constant 0 : index
      %c0_57 = arith.constant 0 : index
      %89 = vector.load %arg8[%c1_55, %c0_56, %c0_57] : memref<2x1x32xf32, #tpu.memory_space<vmem>>, vector<1x1x32xf32>
      %90 = vector.shape_cast %89 : vector<1x1x32xf32> to vector<1x32xf32>
      %91 = vector.broadcast %90 : vector<1x32xf32> to vector<16x32xf32>
      %92 = arith.addf %88, %91 : vector<16x32xf32>
      %cst_58 = arith.constant 5.000000e-01 : f32
      %93 = vector.broadcast %cst_58 : f32 to vector<16x32xf32>
      %94 = arith.mulf %93, %85 : vector<16x32xf32>
      %cst_59 = arith.constant 0.707106769 : f32
      %95 = vector.broadcast %cst_59 : f32 to vector<16x32xf32>
      %96 = arith.mulf %85, %95 : vector<16x32xf32>
      %97 = math.erf %96 : vector<16x32xf32>
      %cst_60 = arith.constant 1.000000e+00 : f32
      %98 = vector.broadcast %cst_60 : f32 to vector<16x32xf32>
      %99 = arith.addf %98, %97 : vector<16x32xf32>
      %100 = arith.mulf %94, %99 : vector<16x32xf32>
      %101 = arith.mulf %100, %92 : vector<16x32xf32>
      %c0_61 = arith.constant 0 : index
      %c0_62 = arith.constant 0 : index
      %102 = vector.load %arg19[%c0_61, %c0_62] : memref<16x32xf32, #tpu.memory_space<vmem>>, vector<16x32xf32>
      tpu.vector_store %arg19[%c0_61, %c0_62], %101 {strides = array<i32>} : memref<16x32xf32, #tpu.memory_space<vmem>>, vector<16x32xf32>,
      %103 = vector.extract_strided_slice %77 {offsets = [0, 0], sizes = [16, 1], strides = [1, 1]} : vector<16x128xf32> to vector<16x1xf32>
      %cst_63 = arith.constant 5.000000e-01 : f32
      %104 = vector.broadcast %cst_63 : f32 to vector<16x32xf32>
      %105 = arith.mulf %104, %101 : vector<16x32xf32>
      %cst_64 = arith.constant 0.707106769 : f32
      %106 = vector.broadcast %cst_64 : f32 to vector<16x32xf32>
      %107 = arith.mulf %101, %106 : vector<16x32xf32>
      %108 = math.erf %107 : vector<16x32xf32>
      %cst_65 = arith.constant 1.000000e+00 : f32
      %109 = vector.broadcast %cst_65 : f32 to vector<16x32xf32>
      %110 = arith.addf %109, %108 : vector<16x32xf32>
      %111 = arith.mulf %105, %110 : vector<16x32xf32>
      %112 = vector.broadcast %103 : vector<16x1xf32> to vector<16x32xf32>
      %113 = arith.mulf %112, %111 : vector<16x32xf32>
      %c0_66 = arith.constant 0 : index
      %c0_67 = arith.constant 0 : index
      %114 = vector.load %arg20[%c0_66, %c0_67] : memref<16x32xf32, #tpu.memory_space<vmem>>, vector<16x32xf32>
      tpu.vector_store %arg20[%c0_66, %c0_67], %113 {strides = array<i32>} : memref<16x32xf32, #tpu.memory_space<vmem>>, vector<16x32xf32>,
    } else {
    }
    %c0 = arith.constant 0 : index
    %c0_1 = arith.constant 0 : index
    %3 = vector.load %arg19[%c0, %c0_1] : memref<16x32xf32, #tpu.memory_space<vmem>>, vector<16x32xf32>
    %4 = arith.truncf %3 : vector<16x32xf32> to vector<16x32xbf16>
    %c0_2 = arith.constant 0 : index
    %c0_3 = arith.constant 0 : index
    %c0_4 = arith.constant 0 : index
    %5 = vector.load %arg9[%c0_2, %c0_3, %c0_4] : memref<1x32x32xbf16, #tpu.memory_space<vmem>>, vector<1x32x32xbf16>
    %6 = vector.shape_cast %5 : vector<1x32x32xbf16> to vector<32x32xbf16>
    %cst = arith.constant dense<0.000000e+00> : vector<16x32xf32>
    %7 = tpu.matmul %4, %6, %cst {dimension_numbers = #tpu.dot_dimension_numbers<[1], [0], [0], [1], [0, 0, 1, 1], [], []>} : vector<16x32xbf16>, vector<32x32xbf16>, vector<16x32xf32> -> vector<16x32xf32>
    %c0_5 = arith.constant 0 : index
    %c0_6 = arith.constant 0 : index
    %c0_7 = arith.constant 0 : index
    %8 = vector.load %arg10[%c0_5, %c0_6, %c0_7] : memref<1x1x32xf32, #tpu.memory_space<vmem>>, vector<1x1x32xf32>
    %9 = vector.shape_cast %8 : vector<1x1x32xf32> to vector<1x32xf32>
    %10 = vector.broadcast %9 : vector<1x32xf32> to vector<16x32xf32>
    %11 = arith.addf %7, %10 : vector<16x32xf32>
    %c0_8 = arith.constant 0 : index
    %c0_9 = arith.constant 0 : index
    %c0_10 = arith.constant 0 : index
    %12 = vector.load %arg11[%c0_8, %c0_9, %c0_10] : memref<1x32x32xbf16, #tpu.memory_space<vmem>>, vector<1x32x32xbf16>
    %13 = vector.shape_cast %12 : vector<1x32x32xbf16> to vector<32x32xbf16>
    %cst_11 = arith.constant dense<0.000000e+00> : vector<16x32xf32>
    %14 = tpu.matmul %4, %13, %cst_11 {dimension_numbers = #tpu.dot_dimension_numbers<[1], [0], [0], [1], [0, 0, 1, 1], [], []>} : vector<16x32xbf16>, vector<32x32xbf16>, vector<16x32xf32> -> vector<16x32xf32>
    %c0_12 = arith.constant 0 : index
    %c0_13 = arith.constant 0 : index
    %c0_14 = arith.constant 0 : index
    %15 = vector.load %arg12[%c0_12, %c0_13, %c0_14] : memref<1x1x32xf32, #tpu.memory_space<vmem>>, vector<1x1x32xf32>
    %16 = vector.shape_cast %15 : vector<1x1x32xf32> to vector<1x32xf32>
    %17 = vector.broadcast %16 : vector<1x32xf32> to vector<16x32xf32>
    %18 = arith.addf %14, %17 : vector<16x32xf32>
    %c0_15 = arith.constant 0 : index
    %c0_16 = arith.constant 0 : index
    %19 = vector.load %arg18[%c0_15, %c0_16] : memref<16x128xf32, #tpu.memory_space<vmem>>, vector<16x128xf32>
    %20 = tpu.iota {dimensions = array<i32: 1>} : vector<16x128xi32>
    %c1_i32 = arith.constant 1 : i32
    %21 = arith.addi %arg1, %c1_i32 : i32
    %22 = vector.broadcast %21 : i32 to vector<16x128xi32>
    %23 = arith.cmpi eq, %20, %22 : vector<16x128xi32>
    %cst_17 = arith.constant 0.000000e+00 : f32
    %24 = vector.broadcast %cst_17 : f32 to vector<16x128xf32>
    %25 = arith.select %23, %19, %24 : vector<16x128xi1>, vector<16x128xf32>
    %cst_18 = arith.constant dense<0.000000e+00> : vector<16xf32>
    %26 = vector.multi_reduction <add>, %25, %cst_18 [1] : vector<16x128xf32> to vector<16xf32>
    %27 = vector.shape_cast %26 : vector<16xf32> to vector<16x1xf32>
    %c0_19 = arith.constant 0 : index
    %c0_20 = arith.constant 0 : index
    %28 = vector.load %arg20[%c0_19, %c0_20] : memref<16x32xf32, #tpu.memory_space<vmem>>, vector<16x32xf32>
    %29 = arith.mulf %11, %3 : vector<16x32xf32>
    %30 = arith.addf %29, %18 : vector<16x32xf32>
    %31 = vector.broadcast %27 : vector<16x1xf32> to vector<16x32xf32>
    %32 = arith.mulf %31, %30 : vector<16x32xf32>
    %33 = arith.addf %28, %32 : vector<16x32xf32>
    %c0_21 = arith.constant 0 : index
    %c0_22 = arith.constant 0 : index
    %34 = vector.load %arg20[%c0_21, %c0_22] : memref<16x32xf32, #tpu.memory_space<vmem>>, vector<16x32xf32>
    tpu.vector_store %arg20[%c0_21, %c0_22], %33 {strides = array<i32>} : memref<16x32xf32, #tpu.memory_space<vmem>>, vector<16x32xf32>,
    %c0_i32_23 = arith.constant 0 : i32
    %35 = arith.cmpi eq, %arg1, %c0_i32_23 : i32
    %36 = arith.extui %35 : i1 to i32
    %c0_i32_24 = arith.constant 0 : i32
    %37 = arith.cmpi ne, %36, %c0_i32_24 : i32
    scf.if %37 {
      %c0_25 = arith.constant 0 : index
      %c0_26 = arith.constant 0 : index
      %38 = vector.load %arg20[%c0_25, %c0_26] : memref<16x32xf32, #tpu.memory_space<vmem>>, vector<16x32xf32>
      %39 = arith.truncf %38 : vector<16x32xf32> to vector<16x32xbf16>
      %c0_27 = arith.constant 0 : index
      %c0_28 = arith.constant 0 : index
      %40 = vector.load %arg13[%c0_27, %c0_28] : memref<32x32xbf16, #tpu.memory_space<vmem>>, vector<32x32xbf16>
      %cst_29 = arith.constant dense<0.000000e+00> : vector<16x32xf32>
      %41 = tpu.matmul %39, %40, %cst_29 {dimension_numbers = #tpu.dot_dimension_numbers<[1], [0], [0], [1], [0, 0, 1, 1], [], []>} : vector<16x32xbf16>, vector<32x32xbf16>, vector<16x32xf32> -> vector<16x32xf32>
      %c0_30 = arith.constant 0 : index
      %c0_31 = arith.constant 0 : index
      %42 = vector.load %arg14[%c0_30, %c0_31] : memref<1x32xf32, #tpu.memory_space<vmem>>, vector<1x32xf32>
      %43 = vector.broadcast %42 : vector<1x32xf32> to vector<16x32xf32>
      %44 = arith.addf %41, %43 : vector<16x32xf32>
      %cst_32 = arith.constant 5.000000e-01 : f32
      %45 = vector.broadcast %cst_32 : f32 to vector<16x32xf32>
      %46 = arith.mulf %45, %44 : vector<16x32xf32>
      %cst_33 = arith.constant 0.707106769 : f32
      %47 = vector.broadcast %cst_33 : f32 to vector<16x32xf32>
      %48 = arith.mulf %44, %47 : vector<16x32xf32>
      %49 = math.erf %48 : vector<16x32xf32>
      %cst_34 = arith.constant 1.000000e+00 : f32
      %50 = vector.broadcast %cst_34 : f32 to vector<16x32xf32>
      %51 = arith.addf %50, %49 : vector<16x32xf32>
      %52 = arith.mulf %46, %51 : vector<16x32xf32>
      %53 = arith.truncf %52 : vector<16x32xf32> to vector<16x32xbf16>
      %c0_35 = arith.constant 0 : index
      %c0_36 = arith.constant 0 : index
      %54 = vector.load %arg15[%c0_35, %c0_36] : memref<32x32xbf16, #tpu.memory_space<vmem>>, vector<32x32xbf16>
      %cst_37 = arith.constant dense<0.000000e+00> : vector<16x32xf32>
      %55 = tpu.matmul %53, %54, %cst_37 {dimension_numbers = #tpu.dot_dimension_numbers<[1], [0], [0], [1], [0, 0, 1, 1], [], []>} : vector<16x32xbf16>, vector<32x32xbf16>, vector<16x32xf32> -> vector<16x32xf32>
      %c0_38 = arith.constant 0 : index
      %c0_39 = arith.constant 0 : index
      %56 = vector.load %arg16[%c0_38, %c0_39] : memref<1x32xf32, #tpu.memory_space<vmem>>, vector<1x32xf32>
      %57 = vector.broadcast %56 : vector<1x32xf32> to vector<16x32xf32>
      %58 = arith.addf %55, %57 : vector<16x32xf32>
      %c0_40 = arith.constant 0 : index
      %c0_41 = arith.constant 0 : index
      %59 = vector.load %arg2[%c0_40, %c0_41] : memref<16x32xf32, #tpu.memory_space<vmem>>, vector<16x32xf32>
      %60 = arith.addf %58, %59 : vector<16x32xf32>
      %c0_42 = arith.constant 0 : index
      %c0_43 = arith.constant 0 : index
      %61 = vector.load %arg17[%c0_42, %c0_43] : memref<16x32xf32, #tpu.memory_space<vmem>>, vector<16x32xf32>
      tpu.vector_store %arg17[%c0_42, %c0_43], %60 {strides = array<i32>} : memref<16x32xf32, #tpu.memory_space<vmem>>, vector<16x32xf32>,
    } else {
    }
    return
  }
  func.func @transform_0(%arg0: i32, %arg1: i32) -> (i32, i32) {
    %c0_i32 = arith.constant 0 : i32
    %c0_i32_0 = arith.constant 0 : i32
    return %arg0, %c0_i32 : i32, i32
  }
  func.func @transform_1(%arg0: i32, %arg1: i32) -> (i32, i32) {
    %c0_i32 = arith.constant 0 : i32
    %c0_i32_0 = arith.constant 0 : i32
    %c0_i32_1 = arith.constant 0 : i32
    return %c0_i32, %c0_i32_0 : i32, i32
  }
  func.func @transform_2(%arg0: i32, %arg1: i32) -> (i32, i32) {
    %c0_i32 = arith.constant 0 : i32
    %c0_i32_0 = arith.constant 0 : i32
    %c0_i32_1 = arith.constant 0 : i32
    return %c0_i32, %c0_i32_0 : i32, i32
  }
  func.func @transform_3(%arg0: i32, %arg1: i32) -> (i32, i32) {
    %c0_i32 = arith.constant 0 : i32
    %c0_i32_0 = arith.constant 0 : i32
    %c0_i32_1 = arith.constant 0 : i32
    return %c0_i32, %c0_i32_0 : i32, i32
  }
  func.func @transform_4(%arg0: i32, %arg1: i32) -> (i32, i32) {
    %c0_i32 = arith.constant 0 : i32
    %c0_i32_0 = arith.constant 0 : i32
    %c0_i32_1 = arith.constant 0 : i32
    return %c0_i32, %c0_i32_0 : i32, i32
  }
  func.func @transform_5(%arg0: i32, %arg1: i32) -> (i32, i32, i32) {
    %c0_i32 = arith.constant 0 : i32
    %c0_i32_0 = arith.constant 0 : i32
    %c0_i32_1 = arith.constant 0 : i32
    %c0_i32_2 = arith.constant 0 : i32
    return %c0_i32, %c0_i32_0, %c0_i32_1 : i32, i32, i32
  }
  func.func @transform_6(%arg0: i32, %arg1: i32) -> (i32, i32, i32) {
    %c0_i32 = arith.constant 0 : i32
    %c0_i32_0 = arith.constant 0 : i32
    %c0_i32_1 = arith.constant 0 : i32
    %c0_i32_2 = arith.constant 0 : i32
    return %c0_i32, %c0_i32_0, %c0_i32_1 : i32, i32, i32
  }
  func.func @transform_7(%arg0: i32, %arg1: i32) -> (i32, i32, i32) {
    %c0_i32 = arith.constant 0 : i32
    %c0_i32_0 = arith.constant 0 : i32
    %c0_i32_1 = arith.constant 0 : i32
    return %arg1, %c0_i32, %c0_i32_0 : i32, i32, i32
  }
  func.func @transform_8(%arg0: i32, %arg1: i32) -> (i32, i32, i32) {
    %c0_i32 = arith.constant 0 : i32
    %c0_i32_0 = arith.constant 0 : i32
    %c0_i32_1 = arith.constant 0 : i32
    return %arg1, %c0_i32, %c0_i32_0 : i32, i32, i32
  }
  func.func @transform_9(%arg0: i32, %arg1: i32) -> (i32, i32, i32) {
    %c0_i32 = arith.constant 0 : i32
    %c0_i32_0 = arith.constant 0 : i32
    %c0_i32_1 = arith.constant 0 : i32
    return %arg1, %c0_i32, %c0_i32_0 : i32, i32, i32
  }
  func.func @transform_10(%arg0: i32, %arg1: i32) -> (i32, i32, i32) {
    %c0_i32 = arith.constant 0 : i32
    %c0_i32_0 = arith.constant 0 : i32
    %c0_i32_1 = arith.constant 0 : i32
    return %arg1, %c0_i32, %c0_i32_0 : i32, i32, i32
  }
  func.func @transform_11(%arg0: i32, %arg1: i32) -> (i32, i32) {
    %c0_i32 = arith.constant 0 : i32
    %c0_i32_0 = arith.constant 0 : i32
    %c0_i32_1 = arith.constant 0 : i32
    return %c0_i32, %c0_i32_0 : i32, i32
  }
  func.func @transform_12(%arg0: i32, %arg1: i32) -> (i32, i32) {
    %c0_i32 = arith.constant 0 : i32
    %c0_i32_0 = arith.constant 0 : i32
    %c0_i32_1 = arith.constant 0 : i32
    return %c0_i32, %c0_i32_0 : i32, i32
  }
  func.func @transform_13(%arg0: i32, %arg1: i32) -> (i32, i32) {
    %c0_i32 = arith.constant 0 : i32
    %c0_i32_0 = arith.constant 0 : i32
    %c0_i32_1 = arith.constant 0 : i32
    return %c0_i32, %c0_i32_0 : i32, i32
  }
  func.func @transform_14(%arg0: i32, %arg1: i32) -> (i32, i32) {
    %c0_i32 = arith.constant 0 : i32
    %c0_i32_0 = arith.constant 0 : i32
    %c0_i32_1 = arith.constant 0 : i32
    return %c0_i32, %c0_i32_0 : i32, i32
  }
  func.func @transform_15(%arg0: i32, %arg1: i32) -> (i32, i32) {
    %c0_i32 = arith.constant 0 : i32
    %c0_i32_0 = arith.constant 0 : i32
    return %arg0, %c0_i32 : i32, i32
  }
  func.func @transform_16(%arg0: i32, %arg1: i32) -> (i32, i32) {
    %c0_i32 = arith.constant 0 : i32
    %c0_i32_0 = arith.constant 0 : i32
    return %arg0, %c0_i32 : i32, i32
  }
}

</mosaic_0001>

<llo_original>
// kernel: transformer_moe_film_forward.5
$region0: #{transformer_moe_film_forward.5}
  #allocation0 [shape = 'u32[]', space=smem, size = 0x4, offset = 0x4, fixed_abs, tag = 'smem constant byte address 0x4 - core index']
  #allocation1 [shape = 'u32[144,128]{1,0:T(1,128)}', space=vmem, size = 0x12000, scoped, tag = 'internal scratch']
  #allocation2 [shape = 'f32[16,32]{1,0:T(8,128)}', space=vmem, size = 0x2000, scoped, tag = 'scratch operand']
  #allocation3 [shape = 'f32[16,32]{1,0:T(8,128)}', space=vmem, size = 0x2000, scoped, tag = 'scratch operand']
  %s0 = inlined_call_operand.vmem [shape: f32[16,32], index: 0, kind: input, shape index: {}]
  %s1 = inlined_call_operand.vmem [shape: f32[1,32], index: 1, kind: input, shape index: {}]
  %s2 = inlined_call_operand.vmem [shape: f32[1,32], index: 2, kind: input, shape index: {}]
  %s3 = inlined_call_operand.vmem [shape: bf16[32,128], index: 3, kind: input, shape index: {}]
  %s4 = inlined_call_operand.vmem [shape: f32[1,128], index: 4, kind: input, shape index: {}]
  %s5 = inlined_call_operand.vmem [shape: bf16[2,32,32], index: 5, kind: input, shape index: {}]
  %s6 = inlined_call_operand.vmem [shape: f32[2,1,32], index: 6, kind: input, shape index: {}]
  %s7 = inlined_call_operand.vmem [shape: bf16[2,32,32], index: 7, kind: input, shape index: {}]
  %s8 = inlined_call_operand.vmem [shape: f32[2,1,32], index: 8, kind: input, shape index: {}]
  %s9 = inlined_call_operand.vmem [shape: bf16[2,32,32], index: 9, kind: input, shape index: {}]
  %s10 = inlined_call_operand.vmem [shape: f32[2,1,32], index: 10, kind: input, shape index: {}]
  %s11 = inlined_call_operand.vmem [shape: bf16[32,32], index: 11, kind: input, shape index: {}]
  %s12 = inlined_call_operand.vmem [shape: f32[1,32], index: 12, kind: input, shape index: {}]
  %s13 = inlined_call_operand.vmem [shape: bf16[32,32], index: 13, kind: input, shape index: {}]
  %s14 = inlined_call_operand.vmem [shape: f32[1,32], index: 14, kind: input, shape index: {}]
  %s15 = inlined_call_operand.vmem [shape: f32[16,32], index: 15, kind: output, shape index: {0}]
  %s16 = inlined_call_operand.vmem [shape: f32[16,128], index: 16, kind: output, shape index: {1}]
  %17 = xla_tuple %s15, %s16
  %s18 = sld [smem:[#allocation0]]
  $region86: #{transformer_moe_film_forward.5} parent=0
    _
  %s20 = ssub.s32 1, %s18
  %s21 = scalar_select 0, %s20, %s18
  // Predicated region
  $region2: #{transformer_moe_film_forward.5} parent=0 // pred_check
    _
  $region3: #{transformer_moe_film_forward.5} parent=0 // pred_check_branch
    %23 = sbr.rel (0) target = $region5
  $region4: #{transformer_moe_film_forward.5} parent=0 // pred_region
    _
  $region5: #{transformer_moe_film_forward.5} parent=0 // pred_fallthru
    _
  // Predicated region
  $region6: #{transformer_moe_film_forward.5} parent=0 // pred_check
    _
  $region7: #{transformer_moe_film_forward.5} parent=0 // pred_check_branch
    %25 = sbr.rel (0) target = $region9
  $region8: #{transformer_moe_film_forward.5} parent=0 // pred_region
    _
  $region9: #{transformer_moe_film_forward.5} parent=0 // pred_fallthru
    _
  // Predicated region
  $region10: #{transformer_moe_film_forward.5} parent=0 // pred_check
    _
  $region11: #{transformer_moe_film_forward.5} parent=0 // pred_check_branch
    %27 = sbr.rel (0) target = $region13
  $region12: #{transformer_moe_film_forward.5} parent=0 // pred_region
    _
  $region13: #{transformer_moe_film_forward.5} parent=0 // pred_fallthru
    _
  // Predicated region
  $region14: #{transformer_moe_film_forward.5} parent=0 // pred_check
    _
  $region15: #{transformer_moe_film_forward.5} parent=0 // pred_check_branch
    %29 = sbr.rel (0) target = $region17
  $region16: #{transformer_moe_film_forward.5} parent=0 // pred_region
    _
  $region17: #{transformer_moe_film_forward.5} parent=0 // pred_fallthru
    _
  // Predicated region
  $region18: #{transformer_moe_film_forward.5} parent=0 // pred_check
    _
  $region19: #{transformer_moe_film_forward.5} parent=0 // pred_check_branch
    %31 = sbr.rel (0) target = $region21
  $region20: #{transformer_moe_film_forward.5} parent=0 // pred_region
    _
  $region21: #{transformer_moe_film_forward.5} parent=0 // pred_fallthru
    _
  // Predicated region
  $region22: #{transformer_moe_film_forward.5} parent=0 // pred_check
    _
  $region23: #{transformer_moe_film_forward.5} parent=0 // pred_check_branch
    %33 = sbr.rel (0) target = $region25
  $region24: #{transformer_moe_film_forward.5} parent=0 // pred_region
    _
  $region25: #{transformer_moe_film_forward.5} parent=0 // pred_fallthru
    _
  // Predicated region
  $region26: #{transformer_moe_film_forward.5} parent=0 // pred_check
    _
  $region27: #{transformer_moe_film_forward.5} parent=0 // pred_check_branch
    %35 = sbr.rel (0) target = $region29
  $region28: #{transformer_moe_film_forward.5} parent=0 // pred_region
    _
  $region29: #{transformer_moe_film_forward.5} parent=0 // pred_fallthru
    _
  // Predicated region
  $region30: #{transformer_moe_film_forward.5} parent=0 // pred_check
    _
  $region31: #{transformer_moe_film_forward.5} parent=0 // pred_check_branch
    %37 = sbr.rel (0) target = $region33
  $region32: #{transformer_moe_film_forward.5} parent=0 // pred_region
    _
  $region33: #{transformer_moe_film_forward.5} parent=0 // pred_fallthru
    _
  // Predicated region
  $region34: #{transformer_moe_film_forward.5} parent=0 // pred_check
    _
  $region35: #{transformer_moe_film_forward.5} parent=0 // pred_check_branch
    %39 = sbr.rel (0) target = $region37
  $region36: #{transformer_moe_film_forward.5} parent=0 // pred_region
    _
  $region37: #{transformer_moe_film_forward.5} parent=0 // pred_fallthru
    _
  // Predicated region
  $region38: #{transformer_moe_film_forward.5} parent=0 // pred_check
    _
  $region39: #{transformer_moe_film_forward.5} parent=0 // pred_check_branch
    %41 = sbr.rel (0) target = $region41
  $region40: #{transformer_moe_film_forward.5} parent=0 // pred_region
    _
  $region41: #{transformer_moe_film_forward.5} parent=0 // pred_fallthru
    _
  // Predicated region
  $region42: #{transformer_moe_film_forward.5} parent=0 // pred_check
    _
  $region43: #{transformer_moe_film_forward.5} parent=0 // pred_check_branch
    %43 = sbr.rel (0) target = $region45
  $region44: #{transformer_moe_film_forward.5} parent=0 // pred_region
    _
  $region45: #{transformer_moe_film_forward.5} parent=0 // pred_fallthru
    _
  // Predicated region
  $region46: #{transformer_moe_film_forward.5} parent=0 // pred_check
    _
  $region47: #{transformer_moe_film_forward.5} parent=0 // pred_check_branch
    %45 = sbr.rel (0) target = $region49
  $region48: #{transformer_moe_film_forward.5} parent=0 // pred_region
    _
  $region49: #{transformer_moe_film_forward.5} parent=0 // pred_fallthru
    _
  // Predicated region
  $region50: #{transformer_moe_film_forward.5} parent=0 // pred_check
    _
  $region51: #{transformer_moe_film_forward.5} parent=0 // pred_check_branch
    %47 = sbr.rel (0) target = $region53
  $region52: #{transformer_moe_film_forward.5} parent=0 // pred_region
    _
  $region53: #{transformer_moe_film_forward.5} parent=0 // pred_fallthru
    _
  // Predicated region
  $region54: #{transformer_moe_film_forward.5} parent=0 // pred_check
    _
  $region55: #{transformer_moe_film_forward.5} parent=0 // pred_check_branch
    %49 = sbr.rel (0) target = $region57
  $region56: #{transformer_moe_film_forward.5} parent=0 // pred_region
    _
  $region57: #{transformer_moe_film_forward.5} parent=0 // pred_fallthru
    _
  // Predicated region
  $region58: #{transformer_moe_film_forward.5} parent=0 // pred_check
    _
  $region59: #{transformer_moe_film_forward.5} parent=0 // pred_check_branch
    %51 = sbr.rel (0) target = $region61
  $region60: #{transformer_moe_film_forward.5} parent=0 // pred_region
    _
  $region61: #{transformer_moe_film_forward.5} parent=0 // pred_fallthru
    _
  %p53 = scmp.eq.s32.totalorder 0, 0
  // Predicated region
  $region62: #{transformer_moe_film_forward.5} parent=0 // pred_check
    %p54 = pneg %p53
  $region63: #{transformer_moe_film_forward.5} parent=0 // pred_check_branch
    %56 = sbr.rel (%p54) target = $region65
  $region64: #{transformer_moe_film_forward.5} parent=0 // pred_region
    %v57 = vld [vmem:[%s0] sm:$0xff]
    %v58 = vld [vmem:[%s0 + $0x8] sm:$0xff]
    %v59 = vld [vmem:[%s1] sm:$0x1]
    %v60 = vld [vmem:[%s2] sm:$0x1]
    %vm61 = vcmask 261120
    %v62 = vsel %vm61, %v57, 0.0
    %63 = vadd.xlane.f32.xlu0 %v62
    %v64 = vpop.xlane.xlu0 %63
    %v65 = vsel %vm61, %v58, 0.0
    %66 = vadd.xlane.f32.xlu0 %v65
    %v67 = vpop.xlane.xlu0 %66
    %v68 = vrcp.pop 32.0
    %v69 = vmul.f32 %v64, %v68
    %v70 = vmul.f32 %v67, %v68
    %v71 = vsub.f32 %v57, %v69
    %v72 = vsub.f32 %v58, %v70
    %v73 = vmul.f32 %v71, %v71
    %v74 = vmul.f32 %v72, %v72
    %v75 = vsel %vm61, %v73, 0.0
    %76 = vadd.xlane.f32.xlu0 %v75
    %v77 = vpop.xlane.xlu0 %76
    %v78 = vsel %vm61, %v74, 0.0
    %79 = vadd.xlane.f32.xlu0 %v78
    %v80 = vpop.xlane.xlu0 %79
    %v81 = vmul.f32 %v77, %v68
    %v82 = vmul.f32 %v80, %v68
    %v83 = vadd.f32 %v81, 1e-05
    %v84 = vadd.f32 %v82, 1e-05
    %v85 = vrsqrt.pop %v83
    %v86 = vrsqrt.pop %v84
    %v87 = vmul.f32 %v71, %v85
    %v88 = vmul.f32 %v72, %v86
    %v90 = vlaneseq
    %v91 = vshrl.u32 %v90, 7
    %v92 = vsub.s32 0, %v91
    %v93 = vrot.slane %v59, %v92
    %v95 = vmul.f32 %v87, %v93
    %v96 = vmul.f32 %v88, %v93
    %v98 = vlaneseq
    %v99 = vshrl.u32 %v98, 7
    %v100 = vsub.s32 0, %v99
    %v101 = vrot.slane %v60, %v100
    %v103 = vadd.f32 %v95, %v101
    %v104 = vadd.f32 %v96, %v101
    %v105 = vpack.c.bf16 %v104, %v103
    %v106 = vld [vmem:[%s3] sm:$0xf]
    %v107 = vld [vmem:[%s3 + $0x4] sm:$0xf]
    %v108 = vld [vmem:[%s3 + $0x8] sm:$0xf]
    %v109 = vld [vmem:[%s3 + $0xc] sm:$0xf]
    %v110 = vld [vmem:[%s4] sm:$0x1]
    %v112 = vlaneseq
    %v113 = vshrl.u32 %v112, 7
    %v114 = vsub.s32 0, %v113
    %v115 = vrot.slane %v110, %v114
    %v121 = vunpack.c.l.b16 %v106
    %v122 = vunpack.c.l.b16 %v107
    %v123 = vunpack.c.l.b16 %v108
    %v124 = vunpack.c.l.b16 %v109
    %v125 = vpack.c.b16 %v122, %v121
    %v126 = vpack.c.b16 %v124, %v123
    %v130 = vsel %vm61, %v105, 0
    %132 = vmatprep.subr.bf16.mxu0 0
    %133 = vmatpush1.bf16.msra.mxu0 0
    %134 = vmatprep.subr.bf16.mxu0 0
    %135 = vmatpush1.bf16.msra.mxu0 0
    %136 = vmatprep.subr.bf16.mxu0 0
    %137 = vmatpush1.bf16.msra.mxu0 0
    %138 = vmatprep.subr.bf16.mxu0 0
    %139 = vmatpush1.bf16.msra.mxu0 0
    %140 = vmatprep.subr.bf16.mxu0 0
    %141 = vmatpush1.bf16.msra.mxu0 0
    %142 = vmatprep.subr.bf16.mxu0 0
    %143 = vmatpush1.bf16.msra.mxu0 0
    %144 = vmatprep.subr.bf16.mxu0 0
    %145 = vmatpush1.bf16.msra.mxu0 %v126
    %146 = vmatprep.subr.bf16.mxu0 0
    %147 = vmatpush1.bf16.msra.mxu0 %v125
    %148 = vmatprep.subr.bf16.mxu0 0
    %149 = vmatpush2.bf16.msra.mxu0 0
    %150 = vmatprep.subr.bf16.mxu0 0
    %151 = vmatpush2.bf16.msra.mxu0 0
    %152 = vmatprep.subr.bf16.mxu0 0
    %153 = vmatpush2.bf16.msra.mxu0 0
    %154 = vmatprep.subr.bf16.mxu0 0
    %155 = vmatpush2.bf16.msra.mxu0 0
    %156 = vmatprep.subr.bf16.mxu0 0
    %157 = vmatpush2.bf16.msra.mxu0 0
    %158 = vmatprep.subr.bf16.mxu0 0
    %159 = vmatpush2.bf16.msra.mxu0 0
    %160 = vmatprep.subr.bf16.mxu0 0
    %161 = vmatpush2.bf16.msra.mxu0 0
    %162 = vmatprep.subr.bf16.mxu0 0
    %163 = vmatpush2.bf16.msra.mxu0 0
    %164 = vmatprep.mubr.bf16.mxu0 0
    %165 = vmatmul.mubr.bf16.gmra.mxu0 %v130
    %v166 = vpop.f32.mrf.mxu0
    %v167 = vadd.f32 %v115, %v166
    %v168 = vpop.f32.mrf.mxu0
    %v169 = vpop.f32.mrf.mxu0
    %v170 = vadd.f32 %v115, %v169
    %v171 = vpop.f32.mrf.mxu0
    %172 = vdwg.mxu0
    %173 = vmax.xlane.f32.xlu0 %v167
    %v174 = vpop.xlane.xlu0 %173
    %175 = vmax.xlane.f32.xlu0 %v170
    %v176 = vpop.xlane.xlu0 %175
    %v177 = vsub.f32 %v167, %v174
    %v178 = vsub.f32 %v170, %v176
    %v179 = vmul.f32 %v177, 1.442695
    %v180 = vpow.pop %v179
    %v181 = vmul.f32 %v178, 1.442695
    %v182 = vpow.pop %v181
    %183 = vadd.xlane.f32.xlu0 %v180
    %v184 = vpop.xlane.xlu0 %183
    %185 = vadd.xlane.f32.xlu0 %v182
    %v186 = vpop.xlane.xlu0 %185
    %v187 = vrcp.pop %v184
    %v188 = vmul.f32 %v180, %v187
    %v189 = vrcp.pop %v186
    %v190 = vmul.f32 %v182, %v189
    %191 = vst [vmem:[%s16] sm:$0xff] %v188
    %192 = vst [vmem:[%s16 + $0x8] sm:$0xff] %v190
    %v193 = vld [vmem:[%s5] sm:$0xf]
    %v194 = vld [vmem:[%s5 + $0x4] sm:$0xf]
    %v195 = vld [vmem:[%s5 + $0x8] sm:$0xf]
    %v196 = vld [vmem:[%s5 + $0xc] sm:$0xf]
    %v197 = vld [vmem:[%s6] sm:$0x1]
    %v199 = vlaneseq
    %v200 = vshrl.u32 %v199, 7
    %v201 = vsub.s32 0, %v200
    %v202 = vrot.slane %v197, %v201
    %v208 = vunpack.c.l.b16 %v193
    %v209 = vunpack.c.l.b16 %v194
    %v210 = vunpack.c.l.b16 %v195
    %v211 = vunpack.c.l.b16 %v196
    %v212 = vpack.c.b16 %v209, %v208
    %v213 = vpack.c.b16 %v211, %v210
    %216 = vmatprep.subr.bf16.mxu0 0
    %217 = vmatpush1.bf16.msra.mxu0 0
    %218 = vmatprep.subr.bf16.mxu0 0
    %219 = vmatpush1.bf16.msra.mxu0 0
    %220 = vmatprep.subr.bf16.mxu0 0
    %221 = vmatpush1.bf16.msra.mxu0 0
    %222 = vmatprep.subr.bf16.mxu0 0
    %223 = vmatpush1.bf16.msra.mxu0 0
    %224 = vmatprep.subr.bf16.mxu0 0
    %225 = vmatpush1.bf16.msra.mxu0 0
    %226 = vmatprep.subr.bf16.mxu0 0
    %227 = vmatpush1.bf16.msra.mxu0 0
    %228 = vmatprep.subr.bf16.mxu0 0
    %229 = vmatpush1.bf16.msra.mxu0 %v213
    %230 = vmatprep.subr.bf16.mxu0 0
    %231 = vmatpush1.bf16.msra.mxu0 %v212
    %232 = vmatprep.subr.bf16.mxu0 0
    %233 = vmatpush2.bf16.msra.mxu0 0
    %234 = vmatprep.subr.bf16.mxu0 0
    %235 = vmatpush2.bf16.msra.mxu0 0
    %236 = vmatprep.subr.bf16.mxu0 0
    %237 = vmatpush2.bf16.msra.mxu0 0
    %238 = vmatprep.subr.bf16.mxu0 0
    %239 = vmatpush2.bf16.msra.mxu0 0
    %240 = vmatprep.subr.bf16.mxu0 0
    %241 = vmatpush2.bf16.msra.mxu0 0
    %242 = vmatprep.subr.bf16.mxu0 0
    %243 = vmatpush2.bf16.msra.mxu0 0
    %244 = vmatprep.subr.bf16.mxu0 0
    %245 = vmatpush2.bf16.msra.mxu0 0
    %246 = vmatprep.subr.bf16.mxu0 0
    %247 = vmatpush2.bf16.msra.mxu0 0
    %248 = vmatprep.mubr.bf16.mxu0 0
    %249 = vmatmul.mubr.bf16.gmra.mxu0 %v130
    %v250 = vpop.f32.mrf.mxu0
    %v251 = vadd.f32 %v202, %v250
    %v252 = vpop.f32.mrf.mxu0
    %v253 = vpop.f32.mrf.mxu0
    %v254 = vadd.f32 %v202, %v253
    %v255 = vpop.f32.mrf.mxu0
    %256 = vdwg.mxu0
    %s257 = scalar_lea.vmem %s5, 16
    %v258 = vld [vmem:[%s257] sm:$0xf]
    %v259 = vld [vmem:[%s257 + $0x4] sm:$0xf]
    %v260 = vld [vmem:[%s257 + $0x8] sm:$0xf]
    %v261 = vld [vmem:[%s257 + $0xc] sm:$0xf]
    %s262 = scalar_lea.vmem %s6, 1
    %v263 = vld [vmem:[%s262] sm:$0x1]
    %v265 = vlaneseq
    %v266 = vshrl.u32 %v265, 7
    %v267 = vsub.s32 0, %v266
    %v268 = vrot.slane %v263, %v267
    %v274 = vunpack.c.l.b16 %v258
    %v275 = vunpack.c.l.b16 %v259
    %v276 = vunpack.c.l.b16 %v260
    %v277 = vunpack.c.l.b16 %v261
    %v278 = vpack.c.b16 %v275, %v274
    %v279 = vpack.c.b16 %v277, %v276
    %282 = vmatprep.subr.bf16.mxu0 0
    %283 = vmatpush1.bf16.msra.mxu0 0
    %284 = vmatprep.subr.bf16.mxu0 0
    %285 = vmatpush1.bf16.msra.mxu0 0
    %286 = vmatprep.subr.bf16.mxu0 0
    %287 = vmatpush1.bf16.msra.mxu0 0
    %288 = vmatprep.subr.bf16.mxu0 0
    %289 = vmatpush1.bf16.msra.mxu0 0
    %290 = vmatprep.subr.bf16.mxu0 0
    %291 = vmatpush1.bf16.msra.mxu0 0
    %292 = vmatprep.subr.bf16.mxu0 0
    %293 = vmatpush1.bf16.msra.mxu0 0
    %294 = vmatprep.subr.bf16.mxu0 0
    %295 = vmatpush1.bf16.msra.mxu0 %v279
    %296 = vmatprep.subr.bf16.mxu0 0
    %297 = vmatpush1.bf16.msra.mxu0 %v278
    %298 = vmatprep.subr.bf16.mxu0 0
    %299 = vmatpush2.bf16.msra.mxu0 0
    %300 = vmatprep.subr.bf16.mxu0 0
    %301 = vmatpush2.bf16.msra.mxu0 0
    %302 = vmatprep.subr.bf16.mxu0 0
    %303 = vmatpush2.bf16.msra.mxu0 0
    %304 = vmatprep.subr.bf16.mxu0 0
    %305 = vmatpush2.bf16.msra.mxu0 0
    %306 = vmatprep.subr.bf16.mxu0 0
    %307 = vmatpush2.bf16.msra.mxu0 0
    %308 = vmatprep.subr.bf16.mxu0 0
    %309 = vmatpush2.bf16.msra.mxu0 0
    %310 = vmatprep.subr.bf16.mxu0 0
    %311 = vmatpush2.bf16.msra.mxu0 0
    %312 = vmatprep.subr.bf16.mxu0 0
    %313 = vmatpush2.bf16.msra.mxu0 0
    %314 = vmatprep.mubr.bf16.mxu0 0
    %315 = vmatmul.mubr.bf16.gmra.mxu0 %v130
    %v316 = vpop.f32.mrf.mxu0
    %v317 = vadd.f32 %v268, %v316
    %v318 = vpop.f32.mrf.mxu0
    %v319 = vpop.f32.mrf.mxu0
    %v320 = vadd.f32 %v268, %v319
    %v321 = vpop.f32.mrf.mxu0
    %322 = vdwg.mxu0
    %v323 = vmul.f32 %v251, 0.5
    %v324 = vmul.f32 %v254, 0.5
    %v325 = vmul.f32 %v251, 0.70710677
    %v326 = vmul.f32 %v254, 0.70710677
    %v327 = verf.f32.pop %v325
    %v328 = verf.f32.pop %v326
    %v329 = vadd.f32 %v327, 1.0
    %v330 = vadd.f32 %v328, 1.0
    %v331 = vmul.f32 %v323, %v329
    %v332 = vmul.f32 %v324, %v330
    %v333 = vmul.f32 %v331, %v317
    %v334 = vmul.f32 %v332, %v320
    %335 = vst.msk [vmem:[#allocation2] sm:$0xff] %vm61, %v333
    %336 = vst.msk [vmem:[#allocation2 + $0x8] sm:$0xff] %vm61, %v334
    %v337 = vmul.f32 %v333, 0.5
    %v338 = vmul.f32 %v334, 0.5
    %v339 = vmul.f32 %v333, 0.70710677
    %v340 = vmul.f32 %v334, 0.70710677
    %v341 = verf.f32.pop %v339
    %v342 = verf.f32.pop %v340
    %v343 = vadd.f32 %v341, 1.0
    %v344 = vadd.f32 %v342, 1.0
    %v345 = vmul.f32 %v337, %v343
    %v346 = vmul.f32 %v338, %v344
    %348 = vset.pattern.permute.xlu0 0
    %349 = vperm.xlu0 %348, %v188
    %v350 = vpop.permute.xlu0 %349
    %353 = vset.pattern.permute.xlu0 0
    %354 = vperm.xlu0 %353, %v190
    %v355 = vpop.permute.xlu0 %354
    %v357 = vmul.f32 %v350, %v345
    %v358 = vmul.f32 %v355, %v346
    %359 = vst.msk [vmem:[#allocation3] sm:$0xff] %vm61, %v357
    %360 = vst.msk [vmem:[#allocation3 + $0x8] sm:$0xff] %vm61, %v358
  $region65: #{transformer_moe_film_forward.5} parent=0 // pred_fallthru
    _
  %v361 = vld [vmem:[#allocation2] sm:$0xff]
  %v362 = vld [vmem:[#allocation2 + $0x8] sm:$0xff]
  %v363 = vpack.c.bf16 %v362, %v361
  %v364 = vld [vmem:[%s7] sm:$0xf]
  %v365 = vld [vmem:[%s7 + $0x4] sm:$0xf]
  %v366 = vld [vmem:[%s7 + $0x8] sm:$0xf]
  %v367 = vld [vmem:[%s7 + $0xc] sm:$0xf]
  %v368 = vld [vmem:[%s8] sm:$0x1]
  %v370 = vlaneseq
  %v371 = vshrl.u32 %v370, 7
  %v372 = vsub.s32 0, %v371
  %v373 = vrot.slane %v368, %v372
  %v379 = vunpack.c.l.b16 %v364
  %v380 = vunpack.c.l.b16 %v365
  %v381 = vunpack.c.l.b16 %v366
  %v382 = vunpack.c.l.b16 %v367
  %v383 = vpack.c.b16 %v380, %v379
  %v384 = vpack.c.b16 %v382, %v381
  %vm387 = vcmask 261120
  %v389 = vsel %vm387, %v363, 0
  %391 = vmatprep.subr.bf16.mxu0 0
  %392 = vmatpush1.bf16.msra.mxu0 0
  %393 = vmatprep.subr.bf16.mxu0 0
  %394 = vmatpush1.bf16.msra.mxu0 0
  %395 = vmatprep.subr.bf16.mxu0 0
  %396 = vmatpush1.bf16.msra.mxu0 0
  %397 = vmatprep.subr.bf16.mxu0 0
  %398 = vmatpush1.bf16.msra.mxu0 0
  %399 = vmatprep.subr.bf16.mxu0 0
  %400 = vmatpush1.bf16.msra.mxu0 0
  %401 = vmatprep.subr.bf16.mxu0 0
  %402 = vmatpush1.bf16.msra.mxu0 0
  %403 = vmatprep.subr.bf16.mxu0 0
  %404 = vmatpush1.bf16.msra.mxu0 %v384
  %405 = vmatprep.subr.bf16.mxu0 0
  %406 = vmatpush1.bf16.msra.mxu0 %v383
  %407 = vmatprep.subr.bf16.mxu0 0
  %408 = vmatpush2.bf16.msra.mxu0 0
  %409 = vmatprep.subr.bf16.mxu0 0
  %410 = vmatpush2.bf16.msra.mxu0 0
  %411 = vmatprep.subr.bf16.mxu0 0
  %412 = vmatpush2.bf16.msra.mxu0 0
  %413 = vmatprep.subr.bf16.mxu0 0
  %414 = vmatpush2.bf16.msra.mxu0 0
  %415 = vmatprep.subr.bf16.mxu0 0
  %416 = vmatpush2.bf16.msra.mxu0 0
  %417 = vmatprep.subr.bf16.mxu0 0
  %418 = vmatpush2.bf16.msra.mxu0 0
  %419 = vmatprep.subr.bf16.mxu0 0
  %420 = vmatpush2.bf16.msra.mxu0 0
  %421 = vmatprep.subr.bf16.mxu0 0
  %422 = vmatpush2.bf16.msra.mxu0 0
  %423 = vmatprep.mubr.bf16.mxu0 0
  %424 = vmatmul.mubr.bf16.gmra.mxu0 %v389
  %v425 = vpop.f32.mrf.mxu0
  %v426 = vadd.f32 %v373, %v425
  %v427 = vpop.f32.mrf.mxu0
  %v428 = vpop.f32.mrf.mxu0
  %v429 = vadd.f32 %v373, %v428
  %v430 = vpop.f32.mrf.mxu0
  %431 = vdwg.mxu0
  %v432 = vld [vmem:[%s9] sm:$0xf]
  %v433 = vld [vmem:[%s9 + $0x4] sm:$0xf]
  %v434 = vld [vmem:[%s9 + $0x8] sm:$0xf]
  %v435 = vld [vmem:[%s9 + $0xc] sm:$0xf]
  %v436 = vld [vmem:[%s10] sm:$0x1]
  %v438 = vlaneseq
  %v439 = vshrl.u32 %v438, 7
  %v440 = vsub.s32 0, %v439
  %v441 = vrot.slane %v436, %v440
  %v447 = vunpack.c.l.b16 %v432
  %v448 = vunpack.c.l.b16 %v433
  %v449 = vunpack.c.l.b16 %v434
  %v450 = vunpack.c.l.b16 %v435
  %v451 = vpack.c.b16 %v448, %v447
  %v452 = vpack.c.b16 %v450, %v449
  %455 = vmatprep.subr.bf16.mxu0 0
  %456 = vmatpush1.bf16.msra.mxu0 0
  %457 = vmatprep.subr.bf16.mxu0 0
  %458 = vmatpush1.bf16.msra.mxu0 0
  %459 = vmatprep.subr.bf16.mxu0 0
  %460 = vmatpush1.bf16.msra.mxu0 0
  %461 = vmatprep.subr.bf16.mxu0 0
  %462 = vmatpush1.bf16.msra.mxu0 0
  %463 = vmatprep.subr.bf16.mxu0 0
  %464 = vmatpush1.bf16.msra.mxu0 0
  %465 = vmatprep.subr.bf16.mxu0 0
  %466 = vmatpush1.bf16.msra.mxu0 0
  %467 = vmatprep.subr.bf16.mxu0 0
  %468 = vmatpush1.bf16.msra.mxu0 %v452
  %469 = vmatprep.subr.bf16.mxu0 0
  %470 = vmatpush1.bf16.msra.mxu0 %v451
  %471 = vmatprep.subr.bf16.mxu0 0
  %472 = vmatpush2.bf16.msra.mxu0 0
  %473 = vmatprep.subr.bf16.mxu0 0
  %474 = vmatpush2.bf16.msra.mxu0 0
  %475 = vmatprep.subr.bf16.mxu0 0
  %476 = vmatpush2.bf16.msra.mxu0 0
  %477 = vmatprep.subr.bf16.mxu0 0
  %478 = vmatpush2.bf16.msra.mxu0 0
  %479 = vmatprep.subr.bf16.mxu0 0
  %480 = vmatpush2.bf16.msra.mxu0 0
  %481 = vmatprep.subr.bf16.mxu0 0
  %482 = vmatpush2.bf16.msra.mxu0 0
  %483 = vmatprep.subr.bf16.mxu0 0
  %484 = vmatpush2.bf16.msra.mxu0 0
  %485 = vmatprep.subr.bf16.mxu0 0
  %486 = vmatpush2.bf16.msra.mxu0 0
  %487 = vmatprep.mubr.bf16.mxu0 0
  %488 = vmatmul.mubr.bf16.gmra.mxu0 %v389
  %v489 = vpop.f32.mrf.mxu0
  %v490 = vadd.f32 %v441, %v489
  %v491 = vpop.f32.mrf.mxu0
  %v492 = vpop.f32.mrf.mxu0
  %v493 = vadd.f32 %v441, %v492
  %v494 = vpop.f32.mrf.mxu0
  %495 = vdwg.mxu0
  %v496 = vld [vmem:[%s16] sm:$0xff]
  %v497 = vld [vmem:[%s16 + $0x8] sm:$0xff]
  %v498 = vlaneseq
  %v499 = vand.u32 %v498, 127
  %s500 = sadd.s32 0, 1
  %v501 = vstv %s500
  %vm502 = vcmp.eq.s32.totalorder %v499, %v501
  %v503 = vsel %vm502, %v496, 0.0
  %v504 = vsel %vm502, %v497, 0.0
  %505 = vadd.xlane.f32.xlu0 %v503
  %v506 = vpop.xlane.xlu0 %505
  %507 = vadd.xlane.f32.xlu0 %v504
  %v508 = vpop.xlane.xlu0 %507
  %v509 = vld [vmem:[#allocation3] sm:$0xff]
  %v510 = vld [vmem:[#allocation3 + $0x8] sm:$0xff]
  %v511 = vmul.f32 %v426, %v361
  %v512 = vmul.f32 %v429, %v362
  %v513 = vadd.f32 %v511, %v490
  %v514 = vadd.f32 %v512, %v493
  %v515 = vmul.f32 %v506, %v513
  %v516 = vmul.f32 %v508, %v514
  %v517 = vadd.f32 %v509, %v515
  %v518 = vadd.f32 %v510, %v516
  %519 = vst.msk [vmem:[#allocation3] sm:$0xff] %vm387, %v517
  %520 = vst.msk [vmem:[#allocation3 + $0x8] sm:$0xff] %vm387, %v518
  // Predicated region
  $region66: #{transformer_moe_film_forward.5} parent=0 // pred_check
    %p521 = pneg %p53
  $region67: #{transformer_moe_film_forward.5} parent=0 // pred_check_branch
    %523 = sbr.rel (%p521) target = $region69
  $region68: #{transformer_moe_film_forward.5} parent=0 // pred_region
    %v524 = vld [vmem:[#allocation3] sm:$0xff]
    %v525 = vld [vmem:[#allocation3 + $0x8] sm:$0xff]
    %v526 = vpack.c.bf16 %v525, %v524
    %v527 = vld [vmem:[%s11] sm:$0xf]
    %v528 = vld [vmem:[%s11 + $0x4] sm:$0xf]
    %v529 = vld [vmem:[%s11 + $0x8] sm:$0xf]
    %v530 = vld [vmem:[%s11 + $0xc] sm:$0xf]
    %v531 = vld [vmem:[%s12] sm:$0x1]
    %v533 = vlaneseq
    %v534 = vshrl.u32 %v533, 7
    %v535 = vsub.s32 0, %v534
    %v536 = vrot.slane %v531, %v535
    %v542 = vunpack.c.l.b16 %v527
    %v543 = vunpack.c.l.b16 %v528
    %v544 = vunpack.c.l.b16 %v529
    %v545 = vunpack.c.l.b16 %v530
    %v546 = vpack.c.b16 %v543, %v542
    %v547 = vpack.c.b16 %v545, %v544
    %v551 = vsel %vm387, %v526, 0
    %553 = vmatprep.subr.bf16.mxu0 0
    %554 = vmatpush1.bf16.msra.mxu0 0
    %555 = vmatprep.subr.bf16.mxu0 0
    %556 = vmatpush1.bf16.msra.mxu0 0
    %557 = vmatprep.subr.bf16.mxu0 0
    %558 = vmatpush1.bf16.msra.mxu0 0
    %559 = vmatprep.subr.bf16.mxu0 0
    %560 = vmatpush1.bf16.msra.mxu0 0
    %561 = vmatprep.subr.bf16.mxu0 0
    %562 = vmatpush1.bf16.msra.mxu0 0
    %563 = vmatprep.subr.bf16.mxu0 0
    %564 = vmatpush1.bf16.msra.mxu0 0
    %565 = vmatprep.subr.bf16.mxu0 0
    %566 = vmatpush1.bf16.msra.mxu0 %v547
    %567 = vmatprep.subr.bf16.mxu0 0
    %568 = vmatpush1.bf16.msra.mxu0 %v546
    %569 = vmatprep.subr.bf16.mxu0 0
    %570 = vmatpush2.bf16.msra.mxu0 0
    %571 = vmatprep.subr.bf16.mxu0 0
    %572 = vmatpush2.bf16.msra.mxu0 0
    %573 = vmatprep.subr.bf16.mxu0 0
    %574 = vmatpush2.bf16.msra.mxu0 0
    %575 = vmatprep.subr.bf16.mxu0 0
    %576 = vmatpush2.bf16.msra.mxu0 0
    %577 = vmatprep.subr.bf16.mxu0 0
    %578 = vmatpush2.bf16.msra.mxu0 0
    %579 = vmatprep.subr.bf16.mxu0 0
    %580 = vmatpush2.bf16.msra.mxu0 0
    %581 = vmatprep.subr.bf16.mxu0 0
    %582 = vmatpush2.bf16.msra.mxu0 0
    %583 = vmatprep.subr.bf16.mxu0 0
    %584 = vmatpush2.bf16.msra.mxu0 0
    %585 = vmatprep.mubr.bf16.mxu0 0
    %586 = vmatmul.mubr.bf16.gmra.mxu0 %v551
    %v587 = vpop.f32.mrf.mxu0
    %v588 = vadd.f32 %v536, %v587
    %v589 = vpop.f32.mrf.mxu0
    %v590 = vpop.f32.mrf.mxu0
    %v591 = vadd.f32 %v536, %v590
    %v592 = vpop.f32.mrf.mxu0
    %593 = vdwg.mxu0
    %v594 = vmul.f32 %v588, 0.5
    %v595 = vmul.f32 %v591, 0.5
    %v596 = vmul.f32 %v588, 0.70710677
    %v597 = vmul.f32 %v591, 0.70710677
    %v598 = verf.f32.pop %v596
    %v599 = verf.f32.pop %v597
    %v600 = vadd.f32 %v598, 1.0
    %v601 = vadd.f32 %v599, 1.0
    %v602 = vmul.f32 %v594, %v600
    %v603 = vmul.f32 %v595, %v601
    %v604 = vpack.c.bf16 %v603, %v602
    %v605 = vld [vmem:[%s13] sm:$0xf]
    %v606 = vld [vmem:[%s13 + $0x4] sm:$0xf]
    %v607 = vld [vmem:[%s13 + $0x8] sm:$0xf]
    %v608 = vld [vmem:[%s13 + $0xc] sm:$0xf]
    %v609 = vld [vmem:[%s14] sm:$0x1]
    %v611 = vlaneseq
    %v612 = vshrl.u32 %v611, 7
    %v613 = vsub.s32 0, %v612
    %v614 = vrot.slane %v609, %v613
    %v620 = vunpack.c.l.b16 %v605
    %v621 = vunpack.c.l.b16 %v606
    %v622 = vunpack.c.l.b16 %v607
    %v623 = vunpack.c.l.b16 %v608
    %v624 = vpack.c.b16 %v621, %v620
    %v625 = vpack.c.b16 %v623, %v622
    %v629 = vsel %vm387, %v604, 0
    %631 = vmatprep.subr.bf16.mxu0 0
    %632 = vmatpush1.bf16.msra.mxu0 0
    %633 = vmatprep.subr.bf16.mxu0 0
    %634 = vmatpush1.bf16.msra.mxu0 0
    %635 = vmatprep.subr.bf16.mxu0 0
    %636 = vmatpush1.bf16.msra.mxu0 0
    %637 = vmatprep.subr.bf16.mxu0 0
    %638 = vmatpush1.bf16.msra.mxu0 0
    %639 = vmatprep.subr.bf16.mxu0 0
    %640 = vmatpush1.bf16.msra.mxu0 0
    %641 = vmatprep.subr.bf16.mxu0 0
    %642 = vmatpush1.bf16.msra.mxu0 0
    %643 = vmatprep.subr.bf16.mxu0 0
    %644 = vmatpush1.bf16.msra.mxu0 %v625
    %645 = vmatprep.subr.bf16.mxu0 0
    %646 = vmatpush1.bf16.msra.mxu0 %v624
    %647 = vmatprep.subr.bf16.mxu0 0
    %648 = vmatpush2.bf16.msra.mxu0 0
    %649 = vmatprep.subr.bf16.mxu0 0
    %650 = vmatpush2.bf16.msra.mxu0 0
    %651 = vmatprep.subr.bf16.mxu0 0
    %652 = vmatpush2.bf16.msra.mxu0 0
    %653 = vmatprep.subr.bf16.mxu0 0
    %654 = vmatpush2.bf16.msra.mxu0 0
    %655 = vmatprep.subr.bf16.mxu0 0
    %656 = vmatpush2.bf16.msra.mxu0 0
    %657 = vmatprep.subr.bf16.mxu0 0
    %658 = vmatpush2.bf16.msra.mxu0 0
    %659 = vmatprep.subr.bf16.mxu0 0
    %660 = vmatpush2.bf16.msra.mxu0 0
    %661 = vmatprep.subr.bf16.mxu0 0
    %662 = vmatpush2.bf16.msra.mxu0 0
    %663 = vmatprep.mubr.bf16.mxu0 0
    %664 = vmatmul.mubr.bf16.gmra.mxu0 %v629
    %v665 = vpop.f32.mrf.mxu0
    %v666 = vadd.f32 %v614, %v665
    %v667 = vpop.f32.mrf.mxu0
    %v668 = vpop.f32.mrf.mxu0
    %v669 = vadd.f32 %v614, %v668
    %v670 = vpop.f32.mrf.mxu0
    %671 = vdwg.mxu0
    %v672 = vld [vmem:[%s0] sm:$0xff]
    %v673 = vld [vmem:[%s0 + $0x8] sm:$0xff]
    %v674 = vadd.f32 %v666, %v672
    %v675 = vadd.f32 %v669, %v673
    %676 = vst.msk [vmem:[%s15] sm:$0xff] %vm387, %v674
    %677 = vst.msk [vmem:[%s15 + $0x8] sm:$0xff] %vm387, %v675
  $region69: #{transformer_moe_film_forward.5} parent=0 // pred_fallthru
    _
  // Predicated region
  $region70: #{transformer_moe_film_forward.5} parent=0 // pred_check
    _
  $region71: #{transformer_moe_film_forward.5} parent=0 // pred_check_branch
    %679 = sbr.rel (0) target = $region73
  $region72: #{transformer_moe_film_forward.5} parent=0 // pred_region
    _
  $region73: #{transformer_moe_film_forward.5} parent=0 // pred_fallthru
    _
  // Predicated region
  $region74: #{transformer_moe_film_forward.5} parent=0 // pred_check
    _
  $region75: #{transformer_moe_film_forward.5} parent=0 // pred_check_branch
    %681 = sbr.rel (0) target = $region77
  $region76: #{transformer_moe_film_forward.5} parent=0 // pred_region
    _
  $region77: #{transformer_moe_film_forward.5} parent=0 // pred_fallthru
    _
  // Predicated region
  $region78: #{transformer_moe_film_forward.5} parent=0 // pred_check
    _
  $region79: #{transformer_moe_film_forward.5} parent=0 // pred_check_branch
    %683 = sbr.rel (0) target = $region81
  $region80: #{transformer_moe_film_forward.5} parent=0 // pred_region
    _
  $region81: #{transformer_moe_film_forward.5} parent=0 // pred_fallthru
    _
  // Predicated region
  $region82: #{transformer_moe_film_forward.5} parent=0 // pred_check
    _
  $region83: #{transformer_moe_film_forward.5} parent=0 // pred_check_branch
    %685 = sbr.rel (0) target = $region85
  $region84: #{transformer_moe_film_forward.5} parent=0 // pred_region
    _
  $region85: #{transformer_moe_film_forward.5} parent=0 // pred_fallthru
    _

// kernel: transformer_moe_film_forward.7
$region0: #{transformer_moe_film_forward.7}
  #allocation0 [shape = 'u32[]', space=smem, size = 0x4, offset = 0x4, fixed_abs, tag = 'smem constant byte address 0x4 - core index']
  #allocation1 [shape = 'u32[144,128]{1,0:T(1,128)}', space=vmem, size = 0x12000, scoped, tag = 'internal scratch']
  #allocation2 [shape = 'f32[16,32]{1,0:T(8,128)}', space=vmem, size = 0x2000, scoped, tag = 'scratch operand']
  #allocation3 [shape = 'f32[16,32]{1,0:T(8,128)}', space=vmem, size = 0x2000, scoped, tag = 'scratch operand']
  %s0 = inlined_call_operand.vmem [shape: f32[16,32], index: 0, kind: input, shape index: {}]
  %s1 = inlined_call_operand.vmem [shape: f32[1,32], index: 1, kind: input, shape index: {}]
  %s2 = inlined_call_operand.vmem [shape: f32[1,32], index: 2, kind: input, shape index: {}]
  %s3 = inlined_call_operand.vmem [shape: bf16[32,128], index: 3, kind: input, shape index: {}]
  %s4 = inlined_call_operand.vmem [shape: f32[1,128], index: 4, kind: input, shape index: {}]
  %s5 = inlined_call_operand.vmem [shape: bf16[2,32,32], index: 5, kind: input, shape index: {}]
  %s6 = inlined_call_operand.vmem [shape: f32[2,1,32], index: 6, kind: input, shape index: {}]
  %s7 = inlined_call_operand.vmem [shape: bf16[2,32,32], index: 7, kind: input, shape index: {}]
  %s8 = inlined_call_operand.vmem [shape: f32[2,1,32], index: 8, kind: input, shape index: {}]
  %s9 = inlined_call_operand.vmem [shape: bf16[2,32,32], index: 9, kind: input, shape index: {}]
  %s10 = inlined_call_operand.vmem [shape: f32[2,1,32], index: 10, kind: input, shape index: {}]
  %s11 = inlined_call_operand.vmem [shape: bf16[32,32], index: 11, kind: input, shape index: {}]
  %s12 = inlined_call_operand.vmem [shape: f32[1,32], index: 12, kind: input, shape index: {}]
  %s13 = inlined_call_operand.vmem [shape: bf16[32,32], index: 13, kind: input, shape index: {}]
  %s14 = inlined_call_operand.vmem [shape: f32[1,32], index: 14, kind: input, shape index: {}]
  %s15 = inlined_call_operand.hbm [shape: f32[16,32], index: 15, kind: output, shape index: {0}]
  %s16 = inlined_call_operand.vmem [shape: f32[16,128], index: 16, kind: output, shape index: {1}]
  %17 = xla_tuple %s15, %s16
  %s18 = sld [smem:[#allocation0]]
  $region86: #{transformer_moe_film_forward.7} parent=0
    _
  %s20 = ssub.s32 1, %s18
  %s21 = scalar_select 0, %s20, %s18
  $region1: #{transformer_moe_film_forward.7} parent=0
    #allocation4 [shape = 'u8[8192]{0}', space=vmem, size = 0x2000, scoped, tag = 'output window, operand 0, single buffered']
    #allocation5 [shape = 's32[1]{0}', space=sflag, size = 0x4, scoped, tag = 'scoped memory for transformer_moe_film_forward.7']
    %22 = vsyncpa [#allocation5], 0
    // Predicated region
    $region2: #{transformer_moe_film_forward.7} parent=1 // pred_check
      _
    $region3: #{transformer_moe_film_forward.7} parent=1 // pred_check_branch
      %24 = sbr.rel (0) target = $region5
    $region4: #{transformer_moe_film_forward.7} parent=1 // pred_region
      _
    $region5: #{transformer_moe_film_forward.7} parent=1 // pred_fallthru
      _
    // Predicated region
    $region6: #{transformer_moe_film_forward.7} parent=1 // pred_check
      _
    $region7: #{transformer_moe_film_forward.7} parent=1 // pred_check_branch
      %26 = sbr.rel (0) target = $region9
    $region8: #{transformer_moe_film_forward.7} parent=1 // pred_region
      _
    $region9: #{transformer_moe_film_forward.7} parent=1 // pred_fallthru
      _
    // Predicated region
    $region10: #{transformer_moe_film_forward.7} parent=1 // pred_check
      _
    $region11: #{transformer_moe_film_forward.7} parent=1 // pred_check_branch
      %28 = sbr.rel (0) target = $region13
    $region12: #{transformer_moe_film_forward.7} parent=1 // pred_region
      _
    $region13: #{transformer_moe_film_forward.7} parent=1 // pred_fallthru
      _
    // Predicated region
    $region14: #{transformer_moe_film_forward.7} parent=1 // pred_check
      _
    $region15: #{transformer_moe_film_forward.7} parent=1 // pred_check_branch
      %30 = sbr.rel (0) target = $region17
    $region16: #{transformer_moe_film_forward.7} parent=1 // pred_region
      _
    $region17: #{transformer_moe_film_forward.7} parent=1 // pred_fallthru
      _
    // Predicated region
    $region18: #{transformer_moe_film_forward.7} parent=1 // pred_check
      _
    $region19: #{transformer_moe_film_forward.7} parent=1 // pred_check_branch
      %32 = sbr.rel (0) target = $region21
    $region20: #{transformer_moe_film_forward.7} parent=1 // pred_region
      _
    $region21: #{transformer_moe_film_forward.7} parent=1 // pred_fallthru
      _
    // Predicated region
    $region22: #{transformer_moe_film_forward.7} parent=1 // pred_check
      _
    $region23: #{transformer_moe_film_forward.7} parent=1 // pred_check_branch
      %34 = sbr.rel (0) target = $region25
    $region24: #{transformer_moe_film_forward.7} parent=1 // pred_region
      _
    $region25: #{transformer_moe_film_forward.7} parent=1 // pred_fallthru
      _
    // Predicated region
    $region26: #{transformer_moe_film_forward.7} parent=1 // pred_check
      _
    $region27: #{transformer_moe_film_forward.7} parent=1 // pred_check_branch
      %36 = sbr.rel (0) target = $region29
    $region28: #{transformer_moe_film_forward.7} parent=1 // pred_region
      _
    $region29: #{transformer_moe_film_forward.7} parent=1 // pred_fallthru
      _
    // Predicated region
    $region30: #{transformer_moe_film_forward.7} parent=1 // pred_check
      _
    $region31: #{transformer_moe_film_forward.7} parent=1 // pred_check_branch
      %38 = sbr.rel (0) target = $region33
    $region32: #{transformer_moe_film_forward.7} parent=1 // pred_region
      _
    $region33: #{transformer_moe_film_forward.7} parent=1 // pred_fallthru
      _
    // Predicated region
    $region34: #{transformer_moe_film_forward.7} parent=1 // pred_check
      _
    $region35: #{transformer_moe_film_forward.7} parent=1 // pred_check_branch
      %40 = sbr.rel (0) target = $region37
    $region36: #{transformer_moe_film_forward.7} parent=1 // pred_region
      _
    $region37: #{transformer_moe_film_forward.7} parent=1 // pred_fallthru
      _
    // Predicated region
    $region38: #{transformer_moe_film_forward.7} parent=1 // pred_check
      _
    $region39: #{transformer_moe_film_forward.7} parent=1 // pred_check_branch
      %42 = sbr.rel (0) target = $region41
    $region40: #{transformer_moe_film_forward.7} parent=1 // pred_region
      _
    $region41: #{transformer_moe_film_forward.7} parent=1 // pred_fallthru
      _
    // Predicated region
    $region42: #{transformer_moe_film_forward.7} parent=1 // pred_check
      _
    $region43: #{transformer_moe_film_forward.7} parent=1 // pred_check_branch
      %44 = sbr.rel (0) target = $region45
    $region44: #{transformer_moe_film_forward.7} parent=1 // pred_region
      _
    $region45: #{transformer_moe_film_forward.7} parent=1 // pred_fallthru
      _
    // Predicated region
    $region46: #{transformer_moe_film_forward.7} parent=1 // pred_check
      _
    $region47: #{transformer_moe_film_forward.7} parent=1 // pred_check_branch
      %46 = sbr.rel (0) target = $region49
    $region48: #{transformer_moe_film_forward.7} parent=1 // pred_region
      _
    $region49: #{transformer_moe_film_forward.7} parent=1 // pred_fallthru
      _
    // Predicated region
    $region50: #{transformer_moe_film_forward.7} parent=1 // pred_check
      _
    $region51: #{transformer_moe_film_forward.7} parent=1 // pred_check_branch
      %48 = sbr.rel (0) target = $region53
    $region52: #{transformer_moe_film_forward.7} parent=1 // pred_region
      _
    $region53: #{transformer_moe_film_forward.7} parent=1 // pred_fallthru
      _
    // Predicated region
    $region54: #{transformer_moe_film_forward.7} parent=1 // pred_check
      _
    $region55: #{transformer_moe_film_forward.7} parent=1 // pred_check_branch
      %50 = sbr.rel (0) target = $region57
    $region56: #{transformer_moe_film_forward.7} parent=1 // pred_region
      _
    $region57: #{transformer_moe_film_forward.7} parent=1 // pred_fallthru
      _
    // Predicated region
    $region58: #{transformer_moe_film_forward.7} parent=1 // pred_check
      _
    $region59: #{transformer_moe_film_forward.7} parent=1 // pred_check_branch
      %52 = sbr.rel (0) target = $region61
    $region60: #{transformer_moe_film_forward.7} parent=1 // pred_region
      _
    $region61: #{transformer_moe_film_forward.7} parent=1 // pred_fallthru
      _
    %p54 = scmp.eq.s32.totalorder 0, 0
    // Predicated region
    $region62: #{transformer_moe_film_forward.7} parent=1 // pred_check
      %p55 = pneg %p54
    $region63: #{transformer_moe_film_forward.7} parent=1 // pred_check_branch
      %57 = sbr.rel (%p55) target = $region65
    $region64: #{transformer_moe_film_forward.7} parent=1 // pred_region
      %v58 = vld [vmem:[%s0] sm:$0xff]
      %v59 = vld [vmem:[%s0 + $0x8] sm:$0xff]
      %v60 = vld [vmem:[%s1] sm:$0x1]
      %v61 = vld [vmem:[%s2] sm:$0x1]
      %vm62 = vcmask 261120
      %v63 = vsel %vm62, %v58, 0.0
      %64 = vadd.xlane.f32.xlu0 %v63
      %v65 = vpop.xlane.xlu0 %64
      %v66 = vsel %vm62, %v59, 0.0
      %67 = vadd.xlane.f32.xlu0 %v66
      %v68 = vpop.xlane.xlu0 %67
      %v69 = vrcp.pop 32.0
      %v70 = vmul.f32 %v65, %v69
      %v71 = vmul.f32 %v68, %v69
      %v72 = vsub.f32 %v58, %v70
      %v73 = vsub.f32 %v59, %v71
      %v74 = vmul.f32 %v72, %v72
      %v75 = vmul.f32 %v73, %v73
      %v76 = vsel %vm62, %v74, 0.0
      %77 = vadd.xlane.f32.xlu0 %v76
      %v78 = vpop.xlane.xlu0 %77
      %v79 = vsel %vm62, %v75, 0.0
      %80 = vadd.xlane.f32.xlu0 %v79
      %v81 = vpop.xlane.xlu0 %80
      %v82 = vmul.f32 %v78, %v69
      %v83 = vmul.f32 %v81, %v69
      %v84 = vadd.f32 %v82, 1e-05
      %v85 = vadd.f32 %v83, 1e-05
      %v86 = vrsqrt.pop %v84
      %v87 = vrsqrt.pop %v85
      %v88 = vmul.f32 %v72, %v86
      %v89 = vmul.f32 %v73, %v87
      %v91 = vlaneseq
      %v92 = vshrl.u32 %v91, 7
      %v93 = vsub.s32 0, %v92
      %v94 = vrot.slane %v60, %v93
      %v96 = vmul.f32 %v88, %v94
      %v97 = vmul.f32 %v89, %v94
      %v99 = vlaneseq
      %v100 = vshrl.u32 %v99, 7
      %v101 = vsub.s32 0, %v100
      %v102 = vrot.slane %v61, %v101
      %v104 = vadd.f32 %v96, %v102
      %v105 = vadd.f32 %v97, %v102
      %v106 = vpack.c.bf16 %v105, %v104
      %v107 = vld [vmem:[%s3] sm:$0xf]
      %v108 = vld [vmem:[%s3 + $0x4] sm:$0xf]
      %v109 = vld [vmem:[%s3 + $0x8] sm:$0xf]
      %v110 = vld [vmem:[%s3 + $0xc] sm:$0xf]
      %v111 = vld [vmem:[%s4] sm:$0x1]
      %v113 = vlaneseq
      %v114 = vshrl.u32 %v113, 7
      %v115 = vsub.s32 0, %v114
      %v116 = vrot.slane %v111, %v115
      %v122 = vunpack.c.l.b16 %v107
      %v123 = vunpack.c.l.b16 %v108
      %v124 = vunpack.c.l.b16 %v109
      %v125 = vunpack.c.l.b16 %v110
      %v126 = vpack.c.b16 %v123, %v122
      %v127 = vpack.c.b16 %v125, %v124
      %v131 = vsel %vm62, %v106, 0
      %133 = vmatprep.subr.bf16.mxu0 0
      %134 = vmatpush1.bf16.msra.mxu0 0
      %135 = vmatprep.subr.bf16.mxu0 0
      %136 = vmatpush1.bf16.msra.mxu0 0
      %137 = vmatprep.subr.bf16.mxu0 0
      %138 = vmatpush1.bf16.msra.mxu0 0
      %139 = vmatprep.subr.bf16.mxu0 0
      %140 = vmatpush1.bf16.msra.mxu0 0
      %141 = vmatprep.subr.bf16.mxu0 0
      %142 = vmatpush1.bf16.msra.mxu0 0
      %143 = vmatprep.subr.bf16.mxu0 0
      %144 = vmatpush1.bf16.msra.mxu0 0
      %145 = vmatprep.subr.bf16.mxu0 0
      %146 = vmatpush1.bf16.msra.mxu0 %v127
      %147 = vmatprep.subr.bf16.mxu0 0
      %148 = vmatpush1.bf16.msra.mxu0 %v126
      %149 = vmatprep.subr.bf16.mxu0 0
      %150 = vmatpush2.bf16.msra.mxu0 0
      %151 = vmatprep.subr.bf16.mxu0 0
      %152 = vmatpush2.bf16.msra.mxu0 0
      %153 = vmatprep.subr.bf16.mxu0 0
      %154 = vmatpush2.bf16.msra.mxu0 0
      %155 = vmatprep.subr.bf16.mxu0 0
      %156 = vmatpush2.bf16.msra.mxu0 0
      %157 = vmatprep.subr.bf16.mxu0 0
      %158 = vmatpush2.bf16.msra.mxu0 0
      %159 = vmatprep.subr.bf16.mxu0 0
      %160 = vmatpush2.bf16.msra.mxu0 0
      %161 = vmatprep.subr.bf16.mxu0 0
      %162 = vmatpush2.bf16.msra.mxu0 0
      %163 = vmatprep.subr.bf16.mxu0 0
      %164 = vmatpush2.bf16.msra.mxu0 0
      %165 = vmatprep.mubr.bf16.mxu0 0
      %166 = vmatmul.mubr.bf16.gmra.mxu0 %v131
      %v167 = vpop.f32.mrf.mxu0
      %v168 = vadd.f32 %v116, %v167
      %v169 = vpop.f32.mrf.mxu0
      %v170 = vpop.f32.mrf.mxu0
      %v171 = vadd.f32 %v116, %v170
      %v172 = vpop.f32.mrf.mxu0
      %173 = vdwg.mxu0
      %174 = vmax.xlane.f32.xlu0 %v168
      %v175 = vpop.xlane.xlu0 %174
      %176 = vmax.xlane.f32.xlu0 %v171
      %v177 = vpop.xlane.xlu0 %176
      %v178 = vsub.f32 %v168, %v175
      %v179 = vsub.f32 %v171, %v177
      %v180 = vmul.f32 %v178, 1.442695
      %v181 = vpow.pop %v180
      %v182 = vmul.f32 %v179, 1.442695
      %v183 = vpow.pop %v182
      %184 = vadd.xlane.f32.xlu0 %v181
      %v185 = vpop.xlane.xlu0 %184
      %186 = vadd.xlane.f32.xlu0 %v183
      %v187 = vpop.xlane.xlu0 %186
      %v188 = vrcp.pop %v185
      %v189 = vmul.f32 %v181, %v188
      %v190 = vrcp.pop %v187
      %v191 = vmul.f32 %v183, %v190
      %192 = vst [vmem:[%s16] sm:$0xff] %v189
      %193 = vst [vmem:[%s16 + $0x8] sm:$0xff] %v191
      %v194 = vld [vmem:[%s5] sm:$0xf]
      %v195 = vld [vmem:[%s5 + $0x4] sm:$0xf]
      %v196 = vld [vmem:[%s5 + $0x8] sm:$0xf]
      %v197 = vld [vmem:[%s5 + $0xc] sm:$0xf]
      %v198 = vld [vmem:[%s6] sm:$0x1]
      %v200 = vlaneseq
      %v201 = vshrl.u32 %v200, 7
      %v202 = vsub.s32 0, %v201
      %v203 = vrot.slane %v198, %v202
      %v209 = vunpack.c.l.b16 %v194
      %v210 = vunpack.c.l.b16 %v195
      %v211 = vunpack.c.l.b16 %v196
      %v212 = vunpack.c.l.b16 %v197
      %v213 = vpack.c.b16 %v210, %v209
      %v214 = vpack.c.b16 %v212, %v211
      %217 = vmatprep.subr.bf16.mxu0 0
      %218 = vmatpush1.bf16.msra.mxu0 0
      %219 = vmatprep.subr.bf16.mxu0 0
      %220 = vmatpush1.bf16.msra.mxu0 0
      %221 = vmatprep.subr.bf16.mxu0 0
      %222 = vmatpush1.bf16.msra.mxu0 0
      %223 = vmatprep.subr.bf16.mxu0 0
      %224 = vmatpush1.bf16.msra.mxu0 0
      %225 = vmatprep.subr.bf16.mxu0 0
      %226 = vmatpush1.bf16.msra.mxu0 0
      %227 = vmatprep.subr.bf16.mxu0 0
      %228 = vmatpush1.bf16.msra.mxu0 0
      %229 = vmatprep.subr.bf16.mxu0 0
      %230 = vmatpush1.bf16.msra.mxu0 %v214
      %231 = vmatprep.subr.bf16.mxu0 0
      %232 = vmatpush1.bf16.msra.mxu0 %v213
      %233 = vmatprep.subr.bf16.mxu0 0
      %234 = vmatpush2.bf16.msra.mxu0 0
      %235 = vmatprep.subr.bf16.mxu0 0
      %236 = vmatpush2.bf16.msra.mxu0 0
      %237 = vmatprep.subr.bf16.mxu0 0
      %238 = vmatpush2.bf16.msra.mxu0 0
      %239 = vmatprep.subr.bf16.mxu0 0
      %240 = vmatpush2.bf16.msra.mxu0 0
      %241 = vmatprep.subr.bf16.mxu0 0
      %242 = vmatpush2.bf16.msra.mxu0 0
      %243 = vmatprep.subr.bf16.mxu0 0
      %244 = vmatpush2.bf16.msra.mxu0 0
      %245 = vmatprep.subr.bf16.mxu0 0
      %246 = vmatpush2.bf16.msra.mxu0 0
      %247 = vmatprep.subr.bf16.mxu0 0
      %248 = vmatpush2.bf16.msra.mxu0 0
      %249 = vmatprep.mubr.bf16.mxu0 0
      %250 = vmatmul.mubr.bf16.gmra.mxu0 %v131
      %v251 = vpop.f32.mrf.mxu0
      %v252 = vadd.f32 %v203, %v251
      %v253 = vpop.f32.mrf.mxu0
      %v254 = vpop.f32.mrf.mxu0
      %v255 = vadd.f32 %v203, %v254
      %v256 = vpop.f32.mrf.mxu0
      %257 = vdwg.mxu0
      %s258 = scalar_lea.vmem %s5, 16
      %v259 = vld [vmem:[%s258] sm:$0xf]
      %v260 = vld [vmem:[%s258 + $0x4] sm:$0xf]
      %v261 = vld [vmem:[%s258 + $0x8] sm:$0xf]
      %v262 = vld [vmem:[%s258 + $0xc] sm:$0xf]
      %s263 = scalar_lea.vmem %s6, 1
      %v264 = vld [vmem:[%s263] sm:$0x1]
      %v266 = vlaneseq
      %v267 = vshrl.u32 %v266, 7
      %v268 = vsub.s32 0, %v267
      %v269 = vrot.slane %v264, %v268
      %v275 = vunpack.c.l.b16 %v259
      %v276 = vunpack.c.l.b16 %v260
      %v277 = vunpack.c.l.b16 %v261
      %v278 = vunpack.c.l.b16 %v262
      %v279 = vpack.c.b16 %v276, %v275
      %v280 = vpack.c.b16 %v278, %v277
      %283 = vmatprep.subr.bf16.mxu0 0
      %284 = vmatpush1.bf16.msra.mxu0 0
      %285 = vmatprep.subr.bf16.mxu0 0
      %286 = vmatpush1.bf16.msra.mxu0 0
      %287 = vmatprep.subr.bf16.mxu0 0
      %288 = vmatpush1.bf16.msra.mxu0 0
      %289 = vmatprep.subr.bf16.mxu0 0
      %290 = vmatpush1.bf16.msra.mxu0 0
      %291 = vmatprep.subr.bf16.mxu0 0
      %292 = vmatpush1.bf16.msra.mxu0 0
      %293 = vmatprep.subr.bf16.mxu0 0
      %294 = vmatpush1.bf16.msra.mxu0 0
      %295 = vmatprep.subr.bf16.mxu0 0
      %296 = vmatpush1.bf16.msra.mxu0 %v280
      %297 = vmatprep.subr.bf16.mxu0 0
      %298 = vmatpush1.bf16.msra.mxu0 %v279
      %299 = vmatprep.subr.bf16.mxu0 0
      %300 = vmatpush2.bf16.msra.mxu0 0
      %301 = vmatprep.subr.bf16.mxu0 0
      %302 = vmatpush2.bf16.msra.mxu0 0
      %303 = vmatprep.subr.bf16.mxu0 0
      %304 = vmatpush2.bf16.msra.mxu0 0
      %305 = vmatprep.subr.bf16.mxu0 0
      %306 = vmatpush2.bf16.msra.mxu0 0
      %307 = vmatprep.subr.bf16.mxu0 0
      %308 = vmatpush2.bf16.msra.mxu0 0
      %309 = vmatprep.subr.bf16.mxu0 0
      %310 = vmatpush2.bf16.msra.mxu0 0
      %311 = vmatprep.subr.bf16.mxu0 0
      %312 = vmatpush2.bf16.msra.mxu0 0
      %313 = vmatprep.subr.bf16.mxu0 0
      %314 = vmatpush2.bf16.msra.mxu0 0
      %315 = vmatprep.mubr.bf16.mxu0 0
      %316 = vmatmul.mubr.bf16.gmra.mxu0 %v131
      %v317 = vpop.f32.mrf.mxu0
      %v318 = vadd.f32 %v269, %v317
      %v319 = vpop.f32.mrf.mxu0
      %v320 = vpop.f32.mrf.mxu0
      %v321 = vadd.f32 %v269, %v320
      %v322 = vpop.f32.mrf.mxu0
      %323 = vdwg.mxu0
      %v324 = vmul.f32 %v252, 0.5
      %v325 = vmul.f32 %v255, 0.5
      %v326 = vmul.f32 %v252, 0.70710677
      %v327 = vmul.f32 %v255, 0.70710677
      %v328 = verf.f32.pop %v326
      %v329 = verf.f32.pop %v327
      %v330 = vadd.f32 %v328, 1.0
      %v331 = vadd.f32 %v329, 1.0
      %v332 = vmul.f32 %v324, %v330
      %v333 = vmul.f32 %v325, %v331
      %v334 = vmul.f32 %v332, %v318
      %v335 = vmul.f32 %v333, %v321
      %336 = vst.msk [vmem:[#allocation2] sm:$0xff] %vm62, %v334
      %337 = vst.msk [vmem:[#allocation2 + $0x8] sm:$0xff] %vm62, %v335
      %v338 = vmul.f32 %v334, 0.5
      %v339 = vmul.f32 %v335, 0.5
      %v340 = vmul.f32 %v334, 0.70710677
      %v341 = vmul.f32 %v335, 0.70710677
      %v342 = verf.f32.pop %v340
      %v343 = verf.f32.pop %v341
      %v344 = vadd.f32 %v342, 1.0
      %v345 = vadd.f32 %v343, 1.0
      %v346 = vmul.f32 %v338, %v344
      %v347 = vmul.f32 %v339, %v345
      %349 = vset.pattern.permute.xlu0 0
      %350 = vperm.xlu0 %349, %v189
      %v351 = vpop.permute.xlu0 %350
      %354 = vset.pattern.permute.xlu0 0
      %355 = vperm.xlu0 %354, %v191
      %v356 = vpop.permute.xlu0 %355
      %v358 = vmul.f32 %v351, %v346
      %v359 = vmul.f32 %v356, %v347
      %360 = vst.msk [vmem:[#allocation3] sm:$0xff] %vm62, %v358
      %361 = vst.msk [vmem:[#allocation3 + $0x8] sm:$0xff] %vm62, %v359
    $region65: #{transformer_moe_film_forward.7} parent=1 // pred_fallthru
      _
    %v362 = vld [vmem:[#allocation2] sm:$0xff]
    %v363 = vld [vmem:[#allocation2 + $0x8] sm:$0xff]
    %v364 = vpack.c.bf16 %v363, %v362
    %v365 = vld [vmem:[%s7] sm:$0xf]
    %v366 = vld [vmem:[%s7 + $0x4] sm:$0xf]
    %v367 = vld [vmem:[%s7 + $0x8] sm:$0xf]
    %v368 = vld [vmem:[%s7 + $0xc] sm:$0xf]
    %v369 = vld [vmem:[%s8] sm:$0x1]
    %v371 = vlaneseq
    %v372 = vshrl.u32 %v371, 7
    %v373 = vsub.s32 0, %v372
    %v374 = vrot.slane %v369, %v373
    %v380 = vunpack.c.l.b16 %v365
    %v381 = vunpack.c.l.b16 %v366
    %v382 = vunpack.c.l.b16 %v367
    %v383 = vunpack.c.l.b16 %v368
    %v384 = vpack.c.b16 %v381, %v380
    %v385 = vpack.c.b16 %v383, %v382
    %vm388 = vcmask 261120
    %v390 = vsel %vm388, %v364, 0
    %392 = vmatprep.subr.bf16.mxu0 0
    %393 = vmatpush1.bf16.msra.mxu0 0
    %394 = vmatprep.subr.bf16.mxu0 0
    %395 = vmatpush1.bf16.msra.mxu0 0
    %396 = vmatprep.subr.bf16.mxu0 0
    %397 = vmatpush1.bf16.msra.mxu0 0
    %398 = vmatprep.subr.bf16.mxu0 0
    %399 = vmatpush1.bf16.msra.mxu0 0
    %400 = vmatprep.subr.bf16.mxu0 0
    %401 = vmatpush1.bf16.msra.mxu0 0
    %402 = vmatprep.subr.bf16.mxu0 0
    %403 = vmatpush1.bf16.msra.mxu0 0
    %404 = vmatprep.subr.bf16.mxu0 0
    %405 = vmatpush1.bf16.msra.mxu0 %v385
    %406 = vmatprep.subr.bf16.mxu0 0
    %407 = vmatpush1.bf16.msra.mxu0 %v384
    %408 = vmatprep.subr.bf16.mxu0 0
    %409 = vmatpush2.bf16.msra.mxu0 0
    %410 = vmatprep.subr.bf16.mxu0 0
    %411 = vmatpush2.bf16.msra.mxu0 0
    %412 = vmatprep.subr.bf16.mxu0 0
    %413 = vmatpush2.bf16.msra.mxu0 0
    %414 = vmatprep.subr.bf16.mxu0 0
    %415 = vmatpush2.bf16.msra.mxu0 0
    %416 = vmatprep.subr.bf16.mxu0 0
    %417 = vmatpush2.bf16.msra.mxu0 0
    %418 = vmatprep.subr.bf16.mxu0 0
    %419 = vmatpush2.bf16.msra.mxu0 0
    %420 = vmatprep.subr.bf16.mxu0 0
    %421 = vmatpush2.bf16.msra.mxu0 0
    %422 = vmatprep.subr.bf16.mxu0 0
    %423 = vmatpush2.bf16.msra.mxu0 0
    %424 = vmatprep.mubr.bf16.mxu0 0
    %425 = vmatmul.mubr.bf16.gmra.mxu0 %v390
    %v426 = vpop.f32.mrf.mxu0
    %v427 = vadd.f32 %v374, %v426
    %v428 = vpop.f32.mrf.mxu0
    %v429 = vpop.f32.mrf.mxu0
    %v430 = vadd.f32 %v374, %v429
    %v431 = vpop.f32.mrf.mxu0
    %432 = vdwg.mxu0
    %v433 = vld [vmem:[%s9] sm:$0xf]
    %v434 = vld [vmem:[%s9 + $0x4] sm:$0xf]
    %v435 = vld [vmem:[%s9 + $0x8] sm:$0xf]
    %v436 = vld [vmem:[%s9 + $0xc] sm:$0xf]
    %v437 = vld [vmem:[%s10] sm:$0x1]
    %v439 = vlaneseq
    %v440 = vshrl.u32 %v439, 7
    %v441 = vsub.s32 0, %v440
    %v442 = vrot.slane %v437, %v441
    %v448 = vunpack.c.l.b16 %v433
    %v449 = vunpack.c.l.b16 %v434
    %v450 = vunpack.c.l.b16 %v435
    %v451 = vunpack.c.l.b16 %v436
    %v452 = vpack.c.b16 %v449, %v448
    %v453 = vpack.c.b16 %v451, %v450
    %456 = vmatprep.subr.bf16.mxu0 0
    %457 = vmatpush1.bf16.msra.mxu0 0
    %458 = vmatprep.subr.bf16.mxu0 0
    %459 = vmatpush1.bf16.msra.mxu0 0
    %460 = vmatprep.subr.bf16.mxu0 0
    %461 = vmatpush1.bf16.msra.mxu0 0
    %462 = vmatprep.subr.bf16.mxu0 0
    %463 = vmatpush1.bf16.msra.mxu0 0
    %464 = vmatprep.subr.bf16.mxu0 0
    %465 = vmatpush1.bf16.msra.mxu0 0
    %466 = vmatprep.subr.bf16.mxu0 0
    %467 = vmatpush1.bf16.msra.mxu0 0
    %468 = vmatprep.subr.bf16.mxu0 0
    %469 = vmatpush1.bf16.msra.mxu0 %v453
    %470 = vmatprep.subr.bf16.mxu0 0
    %471 = vmatpush1.bf16.msra.mxu0 %v452
    %472 = vmatprep.subr.bf16.mxu0 0
    %473 = vmatpush2.bf16.msra.mxu0 0
    %474 = vmatprep.subr.bf16.mxu0 0
    %475 = vmatpush2.bf16.msra.mxu0 0
    %476 = vmatprep.subr.bf16.mxu0 0
    %477 = vmatpush2.bf16.msra.mxu0 0
    %478 = vmatprep.subr.bf16.mxu0 0
    %479 = vmatpush2.bf16.msra.mxu0 0
    %480 = vmatprep.subr.bf16.mxu0 0
    %481 = vmatpush2.bf16.msra.mxu0 0
    %482 = vmatprep.subr.bf16.mxu0 0
    %483 = vmatpush2.bf16.msra.mxu0 0
    %484 = vmatprep.subr.bf16.mxu0 0
    %485 = vmatpush2.bf16.msra.mxu0 0
    %486 = vmatprep.subr.bf16.mxu0 0
    %487 = vmatpush2.bf16.msra.mxu0 0
    %488 = vmatprep.mubr.bf16.mxu0 0
    %489 = vmatmul.mubr.bf16.gmra.mxu0 %v390
    %v490 = vpop.f32.mrf.mxu0
    %v491 = vadd.f32 %v442, %v490
    %v492 = vpop.f32.mrf.mxu0
    %v493 = vpop.f32.mrf.mxu0
    %v494 = vadd.f32 %v442, %v493
    %v495 = vpop.f32.mrf.mxu0
    %496 = vdwg.mxu0
    %v497 = vld [vmem:[%s16] sm:$0xff]
    %v498 = vld [vmem:[%s16 + $0x8] sm:$0xff]
    %v499 = vlaneseq
    %v500 = vand.u32 %v499, 127
    %s501 = sadd.s32 0, 1
    %v502 = vstv %s501
    %vm503 = vcmp.eq.s32.totalorder %v500, %v502
    %v504 = vsel %vm503, %v497, 0.0
    %v505 = vsel %vm503, %v498, 0.0
    %506 = vadd.xlane.f32.xlu0 %v504
    %v507 = vpop.xlane.xlu0 %506
    %508 = vadd.xlane.f32.xlu0 %v505
    %v509 = vpop.xlane.xlu0 %508
    %v510 = vld [vmem:[#allocation3] sm:$0xff]
    %v511 = vld [vmem:[#allocation3 + $0x8] sm:$0xff]
    %v512 = vmul.f32 %v427, %v362
    %v513 = vmul.f32 %v430, %v363
    %v514 = vadd.f32 %v512, %v491
    %v515 = vadd.f32 %v513, %v494
    %v516 = vmul.f32 %v507, %v514
    %v517 = vmul.f32 %v509, %v515
    %v518 = vadd.f32 %v510, %v516
    %v519 = vadd.f32 %v511, %v517
    %520 = vst.msk [vmem:[#allocation3] sm:$0xff] %vm388, %v518
    %521 = vst.msk [vmem:[#allocation3 + $0x8] sm:$0xff] %vm388, %v519
    // Predicated region
    $region66: #{transformer_moe_film_forward.7} parent=1 // pred_check
      %p522 = pneg %p54
    $region67: #{transformer_moe_film_forward.7} parent=1 // pred_check_branch
      %524 = sbr.rel (%p522) target = $region69
    $region68: #{transformer_moe_film_forward.7} parent=1 // pred_region
      %v525 = vld [vmem:[#allocation3] sm:$0xff]
      %v526 = vld [vmem:[#allocation3 + $0x8] sm:$0xff]
      %v527 = vpack.c.bf16 %v526, %v525
      %v528 = vld [vmem:[%s11] sm:$0xf]
      %v529 = vld [vmem:[%s11 + $0x4] sm:$0xf]
      %v530 = vld [vmem:[%s11 + $0x8] sm:$0xf]
      %v531 = vld [vmem:[%s11 + $0xc] sm:$0xf]
      %v532 = vld [vmem:[%s12] sm:$0x1]
      %v534 = vlaneseq
      %v535 = vshrl.u32 %v534, 7
      %v536 = vsub.s32 0, %v535
      %v537 = vrot.slane %v532, %v536
      %v543 = vunpack.c.l.b16 %v528
      %v544 = vunpack.c.l.b16 %v529
      %v545 = vunpack.c.l.b16 %v530
      %v546 = vunpack.c.l.b16 %v531
      %v547 = vpack.c.b16 %v544, %v543
      %v548 = vpack.c.b16 %v546, %v545
      %v552 = vsel %vm388, %v527, 0
      %554 = vmatprep.subr.bf16.mxu0 0
      %555 = vmatpush1.bf16.msra.mxu0 0
      %556 = vmatprep.subr.bf16.mxu0 0
      %557 = vmatpush1.bf16.msra.mxu0 0
      %558 = vmatprep.subr.bf16.mxu0 0
      %559 = vmatpush1.bf16.msra.mxu0 0
      %560 = vmatprep.subr.bf16.mxu0 0
      %561 = vmatpush1.bf16.msra.mxu0 0
      %562 = vmatprep.subr.bf16.mxu0 0
      %563 = vmatpush1.bf16.msra.mxu0 0
      %564 = vmatprep.subr.bf16.mxu0 0
      %565 = vmatpush1.bf16.msra.mxu0 0
      %566 = vmatprep.subr.bf16.mxu0 0
      %567 = vmatpush1.bf16.msra.mxu0 %v548
      %568 = vmatprep.subr.bf16.mxu0 0
      %569 = vmatpush1.bf16.msra.mxu0 %v547
      %570 = vmatprep.subr.bf16.mxu0 0
      %571 = vmatpush2.bf16.msra.mxu0 0
      %572 = vmatprep.subr.bf16.mxu0 0
      %573 = vmatpush2.bf16.msra.mxu0 0
      %574 = vmatprep.subr.bf16.mxu0 0
      %575 = vmatpush2.bf16.msra.mxu0 0
      %576 = vmatprep.subr.bf16.mxu0 0
      %577 = vmatpush2.bf16.msra.mxu0 0
      %578 = vmatprep.subr.bf16.mxu0 0
      %579 = vmatpush2.bf16.msra.mxu0 0
      %580 = vmatprep.subr.bf16.mxu0 0
      %581 = vmatpush2.bf16.msra.mxu0 0
      %582 = vmatprep.subr.bf16.mxu0 0
      %583 = vmatpush2.bf16.msra.mxu0 0
      %584 = vmatprep.subr.bf16.mxu0 0
      %585 = vmatpush2.bf16.msra.mxu0 0
      %586 = vmatprep.mubr.bf16.mxu0 0
      %587 = vmatmul.mubr.bf16.gmra.mxu0 %v552
      %v588 = vpop.f32.mrf.mxu0
      %v589 = vadd.f32 %v537, %v588
      %v590 = vpop.f32.mrf.mxu0
      %v591 = vpop.f32.mrf.mxu0
      %v592 = vadd.f32 %v537, %v591
      %v593 = vpop.f32.mrf.mxu0
      %594 = vdwg.mxu0
      %v595 = vmul.f32 %v589, 0.5
      %v596 = vmul.f32 %v592, 0.5
      %v597 = vmul.f32 %v589, 0.70710677
      %v598 = vmul.f32 %v592, 0.70710677
      %v599 = verf.f32.pop %v597
      %v600 = verf.f32.pop %v598
      %v601 = vadd.f32 %v599, 1.0
      %v602 = vadd.f32 %v600, 1.0
      %v603 = vmul.f32 %v595, %v601
      %v604 = vmul.f32 %v596, %v602
      %v605 = vpack.c.bf16 %v604, %v603
      %v606 = vld [vmem:[%s13] sm:$0xf]
      %v607 = vld [vmem:[%s13 + $0x4] sm:$0xf]
      %v608 = vld [vmem:[%s13 + $0x8] sm:$0xf]
      %v609 = vld [vmem:[%s13 + $0xc] sm:$0xf]
      %v610 = vld [vmem:[%s14] sm:$0x1]
      %v612 = vlaneseq
      %v613 = vshrl.u32 %v612, 7
      %v614 = vsub.s32 0, %v613
      %v615 = vrot.slane %v610, %v614
      %v621 = vunpack.c.l.b16 %v606
      %v622 = vunpack.c.l.b16 %v607
      %v623 = vunpack.c.l.b16 %v608
      %v624 = vunpack.c.l.b16 %v609
      %v625 = vpack.c.b16 %v622, %v621
      %v626 = vpack.c.b16 %v624, %v623
      %v630 = vsel %vm388, %v605, 0
      %632 = vmatprep.subr.bf16.mxu0 0
      %633 = vmatpush1.bf16.msra.mxu0 0
      %634 = vmatprep.subr.bf16.mxu0 0
      %635 = vmatpush1.bf16.msra.mxu0 0
      %636 = vmatprep.subr.bf16.mxu0 0
      %637 = vmatpush1.bf16.msra.mxu0 0
      %638 = vmatprep.subr.bf16.mxu0 0
      %639 = vmatpush1.bf16.msra.mxu0 0
      %640 = vmatprep.subr.bf16.mxu0 0
      %641 = vmatpush1.bf16.msra.mxu0 0
      %642 = vmatprep.subr.bf16.mxu0 0
      %643 = vmatpush1.bf16.msra.mxu0 0
      %644 = vmatprep.subr.bf16.mxu0 0
      %645 = vmatpush1.bf16.msra.mxu0 %v626
      %646 = vmatprep.subr.bf16.mxu0 0
      %647 = vmatpush1.bf16.msra.mxu0 %v625
      %648 = vmatprep.subr.bf16.mxu0 0
      %649 = vmatpush2.bf16.msra.mxu0 0
      %650 = vmatprep.subr.bf16.mxu0 0
      %651 = vmatpush2.bf16.msra.mxu0 0
      %652 = vmatprep.subr.bf16.mxu0 0
      %653 = vmatpush2.bf16.msra.mxu0 0
      %654 = vmatprep.subr.bf16.mxu0 0
      %655 = vmatpush2.bf16.msra.mxu0 0
      %656 = vmatprep.subr.bf16.mxu0 0
      %657 = vmatpush2.bf16.msra.mxu0 0
      %658 = vmatprep.subr.bf16.mxu0 0
      %659 = vmatpush2.bf16.msra.mxu0 0
      %660 = vmatprep.subr.bf16.mxu0 0
      %661 = vmatpush2.bf16.msra.mxu0 0
      %662 = vmatprep.subr.bf16.mxu0 0
      %663 = vmatpush2.bf16.msra.mxu0 0
      %664 = vmatprep.mubr.bf16.mxu0 0
      %665 = vmatmul.mubr.bf16.gmra.mxu0 %v630
      %v666 = vpop.f32.mrf.mxu0
      %v667 = vadd.f32 %v615, %v666
      %v668 = vpop.f32.mrf.mxu0
      %v669 = vpop.f32.mrf.mxu0
      %v670 = vadd.f32 %v615, %v669
      %v671 = vpop.f32.mrf.mxu0
      %672 = vdwg.mxu0
      %v673 = vld [vmem:[%s0] sm:$0xff]
      %v674 = vld [vmem:[%s0 + $0x8] sm:$0xff]
      %v675 = vadd.f32 %v667, %v673
      %v676 = vadd.f32 %v670, %v674
      %677 = vst.msk [vmem:[#allocation4] sm:$0xff] %vm388, %v675
      %678 = vst.msk [vmem:[#allocation4 + $0x8] sm:$0xff] %vm388, %v676
    $region69: #{transformer_moe_film_forward.7} parent=1 // pred_fallthru
      _
    // Predicated region
    $region70: #{transformer_moe_film_forward.7} parent=1 // pred_check
      _
    $region71: #{transformer_moe_film_forward.7} parent=1 // pred_check_branch
      %680 = sbr.rel (0) target = $region73
    $region72: #{transformer_moe_film_forward.7} parent=1 // pred_region
      %s682 = ssub.s32 256, 256
      %683 = vsyncadd [#allocation5], %s682
      %s684 = sshll.u32 [#allocation4], 4
      %s685 = int_to_ptr.vmem [resolvable:$true] %s684
      %690 = dma.vmem_to_hbm [thread:$0]  %s685, 256, %s15, [#allocation5], 128, 128, 8
    $region73: #{transformer_moe_film_forward.7} parent=1 // pred_fallthru
      _
    // Predicated region
    $region74: #{transformer_moe_film_forward.7} parent=1 // pred_check
      _
    $region75: #{transformer_moe_film_forward.7} parent=1 // pred_check_branch
      %692 = sbr.rel (0) target = $region77
    $region76: #{transformer_moe_film_forward.7} parent=1 // pred_region
      _
    $region77: #{transformer_moe_film_forward.7} parent=1 // pred_fallthru
      _
    // Predicated region
    $region78: #{transformer_moe_film_forward.7} parent=1 // pred_check
      _
    $region79: #{transformer_moe_film_forward.7} parent=1 // pred_check_branch
      %694 = sbr.rel (0) target = $region81
    $region80: #{transformer_moe_film_forward.7} parent=1 // pred_region
      %695 = dma.done [#allocation5], 256
    $region81: #{transformer_moe_film_forward.7} parent=1 // pred_fallthru
      _
    // Predicated region
    $region82: #{transformer_moe_film_forward.7} parent=1 // pred_check
      _
    $region83: #{transformer_moe_film_forward.7} parent=1 // pred_check_branch
      %697 = sbr.rel (0) target = $region85
    $region84: #{transformer_moe_film_forward.7} parent=1 // pred_region
      _
    $region85: #{transformer_moe_film_forward.7} parent=1 // pred_fallthru
      _
    %698 = vsyncpa [#allocation5], 1

// kernel: transformer_moe_film_forward.4
$region0: #{transformer_moe_film_forward.4}
  #allocation0 [shape = 'u32[]', space=smem, size = 0x4, offset = 0x4, fixed_abs, tag = 'smem constant byte address 0x4 - core index']
  #allocation1 [shape = 'u32[144,128]{1,0:T(1,128)}', space=vmem, size = 0x12000, scoped, tag = 'internal scratch']
  %s0 = inlined_call_operand.vmem [shape: f32[2,8,32], index: 0, kind: input, shape index: {}]
  %s1 = inlined_call_operand.vmem [shape: f32[1,32], index: 1, kind: input, shape index: {}]
  %s2 = inlined_call_operand.vmem [shape: f32[1,32], index: 2, kind: input, shape index: {}]
  %s3 = inlined_call_operand.vmem [shape: bf16[2,32,16], index: 3, kind: input, shape index: {}]
  %s4 = inlined_call_operand.vmem [shape: bf16[2,32,16], index: 4, kind: input, shape index: {}]
  %s5 = inlined_call_operand.vmem [shape: bf16[2,32,16], index: 5, kind: input, shape index: {}]
  %s6 = inlined_call_operand.vmem [shape: bf16[2,16,32], index: 6, kind: input, shape index: {}]
  %s7 = inlined_call_operand.vmem [shape: f32[1,32], index: 7, kind: input, shape index: {}]
  %s8 = inlined_call_operand.vmem [shape: f32[2,8,32], index: 8, kind: output, shape index: {}]
  %s9 = sld [smem:[#allocation0]]
  $region42: #{transformer_moe_film_forward.4} parent=0
    _
  %s11 = ssub.s32 1, %s9
  %s12 = scalar_select 0, %s11, %s9
  // Predicated region
  $region2: #{transformer_moe_film_forward.4} parent=0 // pred_check
    _
  $region3: #{transformer_moe_film_forward.4} parent=0 // pred_check_branch
    %14 = sbr.rel (0) target = $region5
  $region4: #{transformer_moe_film_forward.4} parent=0 // pred_region
    _
  $region5: #{transformer_moe_film_forward.4} parent=0 // pred_fallthru
    _
  // Predicated region
  $region6: #{transformer_moe_film_forward.4} parent=0 // pred_check
    _
  $region7: #{transformer_moe_film_forward.4} parent=0 // pred_check_branch
    %16 = sbr.rel (0) target = $region9
  $region8: #{transformer_moe_film_forward.4} parent=0 // pred_region
    _
  $region9: #{transformer_moe_film_forward.4} parent=0 // pred_fallthru
    _
  // Predicated region
  $region10: #{transformer_moe_film_forward.4} parent=0 // pred_check
    _
  $region11: #{transformer_moe_film_forward.4} parent=0 // pred_check_branch
    %18 = sbr.rel (0) target = $region13
  $region12: #{transformer_moe_film_forward.4} parent=0 // pred_region
    _
  $region13: #{transformer_moe_film_forward.4} parent=0 // pred_fallthru
    _
  // Predicated region
  $region14: #{transformer_moe_film_forward.4} parent=0 // pred_check
    _
  $region15: #{transformer_moe_film_forward.4} parent=0 // pred_check_branch
    %20 = sbr.rel (0) target = $region17
  $region16: #{transformer_moe_film_forward.4} parent=0 // pred_region
    _
  $region17: #{transformer_moe_film_forward.4} parent=0 // pred_fallthru
    _
  // Predicated region
  $region18: #{transformer_moe_film_forward.4} parent=0 // pred_check
    _
  $region19: #{transformer_moe_film_forward.4} parent=0 // pred_check_branch
    %22 = sbr.rel (0) target = $region21
  $region20: #{transformer_moe_film_forward.4} parent=0 // pred_region
    _
  $region21: #{transformer_moe_film_forward.4} parent=0 // pred_fallthru
    _
  // Predicated region
  $region22: #{transformer_moe_film_forward.4} parent=0 // pred_check
    _
  $region23: #{transformer_moe_film_forward.4} parent=0 // pred_check_branch
    %24 = sbr.rel (0) target = $region25
  $region24: #{transformer_moe_film_forward.4} parent=0 // pred_region
    _
  $region25: #{transformer_moe_film_forward.4} parent=0 // pred_fallthru
    _
  // Predicated region
  $region26: #{transformer_moe_film_forward.4} parent=0 // pred_check
    _
  $region27: #{transformer_moe_film_forward.4} parent=0 // pred_check_branch
    %26 = sbr.rel (0) target = $region29
  $region28: #{transformer_moe_film_forward.4} parent=0 // pred_region
    _
  $region29: #{transformer_moe_film_forward.4} parent=0 // pred_fallthru
    _
  // Predicated region
  $region30: #{transformer_moe_film_forward.4} parent=0 // pred_check
    _
  $region31: #{transformer_moe_film_forward.4} parent=0 // pred_check_branch
    %28 = sbr.rel (0) target = $region33
  $region32: #{transformer_moe_film_forward.4} parent=0 // pred_region
    _
  $region33: #{transformer_moe_film_forward.4} parent=0 // pred_fallthru
    _
  %v30 = vld [vmem:[%s0] sm:$0xff]
  %v31 = vld [vmem:[%s0 + $0x8] sm:$0xff]
  %v32 = vld [vmem:[%s1] sm:$0x1]
  %v33 = vld [vmem:[%s2] sm:$0x1]
  %vm34 = vcmask 261120
  %v35 = vsel %vm34, %v30, 0.0
  %36 = vadd.xlane.f32.xlu0 %v35
  %v37 = vpop.xlane.xlu0 %36
  %v38 = vsel %vm34, %v31, 0.0
  %39 = vadd.xlane.f32.xlu0 %v38
  %v40 = vpop.xlane.xlu0 %39
  %v41 = vrcp.pop 32.0
  %v42 = vmul.f32 %v37, %v41
  %v43 = vmul.f32 %v40, %v41
  %v44 = vsub.f32 %v30, %v42
  %v45 = vsub.f32 %v31, %v43
  %v46 = vmul.f32 %v44, %v44
  %v47 = vmul.f32 %v45, %v45
  %v48 = vsel %vm34, %v46, 0.0
  %49 = vadd.xlane.f32.xlu0 %v48
  %v50 = vpop.xlane.xlu0 %49
  %v51 = vsel %vm34, %v47, 0.0
  %52 = vadd.xlane.f32.xlu0 %v51
  %v53 = vpop.xlane.xlu0 %52
  %v54 = vmul.f32 %v50, %v41
  %v55 = vmul.f32 %v53, %v41
  %v56 = vadd.f32 %v54, 1e-05
  %v57 = vadd.f32 %v55, 1e-05
  %v58 = vrsqrt.pop %v56
  %v59 = vrsqrt.pop %v57
  %v60 = vmul.f32 %v44, %v58
  %v61 = vmul.f32 %v45, %v59
  %v63 = vlaneseq
  %v64 = vshrl.u32 %v63, 7
  %v65 = vsub.s32 0, %v64
  %v66 = vrot.slane %v32, %v65
  %v68 = vmul.f32 %v60, %v66
  %v69 = vmul.f32 %v61, %v66
  %v71 = vlaneseq
  %v72 = vshrl.u32 %v71, 7
  %v73 = vsub.s32 0, %v72
  %v74 = vrot.slane %v33, %v73
  %v76 = vadd.f32 %v68, %v74
  %v77 = vadd.f32 %v69, %v74
  %v78 = vpack.c.bf16 %v77, %v76
  %v79 = vld [vmem:[%s3] sm:$0xf]
  %v80 = vld [vmem:[%s3 + $0x4] sm:$0xf]
  %v81 = vld [vmem:[%s3 + $0x8] sm:$0xf]
  %v82 = vld [vmem:[%s3 + $0xc] sm:$0xf]
  %v87 = vunpack.c.l.b16 %v79
  %v88 = vunpack.c.l.b16 %v80
  %v89 = vunpack.c.l.b16 %v81
  %v90 = vunpack.c.l.b16 %v82
  %v91 = vpack.c.b16 %v88, %v87
  %v92 = vpack.c.b16 %v90, %v89
  %v96 = vsel %vm34, %v78, 0
  %98 = vmatprep.subr.bf16.mxu0 0
  %99 = vmatpush1.bf16.msra.mxu0 0
  %100 = vmatprep.subr.bf16.mxu0 0
  %101 = vmatpush1.bf16.msra.mxu0 0
  %102 = vmatprep.subr.bf16.mxu0 0
  %103 = vmatpush1.bf16.msra.mxu0 0
  %104 = vmatprep.subr.bf16.mxu0 0
  %105 = vmatpush1.bf16.msra.mxu0 0
  %106 = vmatprep.subr.bf16.mxu0 0
  %107 = vmatpush1.bf16.msra.mxu0 0
  %108 = vmatprep.subr.bf16.mxu0 0
  %109 = vmatpush1.bf16.msra.mxu0 0
  %110 = vmatprep.subr.bf16.mxu0 0
  %111 = vmatpush1.bf16.msra.mxu0 %v92
  %112 = vmatprep.subr.bf16.mxu0 0
  %113 = vmatpush1.bf16.msra.mxu0 %v91
  %114 = vmatprep.subr.bf16.mxu0 0
  %115 = vmatpush2.bf16.msra.mxu0 0
  %116 = vmatprep.subr.bf16.mxu0 0
  %117 = vmatpush2.bf16.msra.mxu0 0
  %118 = vmatprep.subr.bf16.mxu0 0
  %119 = vmatpush2.bf16.msra.mxu0 0
  %120 = vmatprep.subr.bf16.mxu0 0
  %121 = vmatpush2.bf16.msra.mxu0 0
  %122 = vmatprep.subr.bf16.mxu0 0
  %123 = vmatpush2.bf16.msra.mxu0 0
  %124 = vmatprep.subr.bf16.mxu0 0
  %125 = vmatpush2.bf16.msra.mxu0 0
  %126 = vmatprep.subr.bf16.mxu0 0
  %127 = vmatpush2.bf16.msra.mxu0 0
  %128 = vmatprep.subr.bf16.mxu0 0
  %129 = vmatpush2.bf16.msra.mxu0 0
  %130 = vmatprep.mubr.bf16.mxu0 0
  %131 = vmatmul.mubr.bf16.gmra.mxu0 %v96
  %v132 = vpop.f32.mrf.mxu0
  %v133 = vadd.f32 0.0, %v132
  %v134 = vpop.f32.mrf.mxu0
  %v135 = vpop.f32.mrf.mxu0
  %v136 = vadd.f32 0.0, %v135
  %v137 = vpop.f32.mrf.mxu0
  %138 = vdwg.mxu0
  %v139 = vmul.f32 %v133, 0.25
  %v140 = vmul.f32 %v136, 0.25
  %v141 = vld [vmem:[%s4] sm:$0xf]
  %v142 = vld [vmem:[%s4 + $0x4] sm:$0xf]
  %v143 = vld [vmem:[%s4 + $0x8] sm:$0xf]
  %v144 = vld [vmem:[%s4 + $0xc] sm:$0xf]
  %v149 = vunpack.c.l.b16 %v141
  %v150 = vunpack.c.l.b16 %v142
  %v151 = vunpack.c.l.b16 %v143
  %v152 = vunpack.c.l.b16 %v144
  %v153 = vpack.c.b16 %v150, %v149
  %v154 = vpack.c.b16 %v152, %v151
  %157 = vmatprep.subr.bf16.mxu0 0
  %158 = vmatpush1.bf16.msra.mxu0 0
  %159 = vmatprep.subr.bf16.mxu0 0
  %160 = vmatpush1.bf16.msra.mxu0 0
  %161 = vmatprep.subr.bf16.mxu0 0
  %162 = vmatpush1.bf16.msra.mxu0 0
  %163 = vmatprep.subr.bf16.mxu0 0
  %164 = vmatpush1.bf16.msra.mxu0 0
  %165 = vmatprep.subr.bf16.mxu0 0
  %166 = vmatpush1.bf16.msra.mxu0 0
  %167 = vmatprep.subr.bf16.mxu0 0
  %168 = vmatpush1.bf16.msra.mxu0 0
  %169 = vmatprep.subr.bf16.mxu0 0
  %170 = vmatpush1.bf16.msra.mxu0 %v154
  %171 = vmatprep.subr.bf16.mxu0 0
  %172 = vmatpush1.bf16.msra.mxu0 %v153
  %173 = vmatprep.subr.bf16.mxu0 0
  %174 = vmatpush2.bf16.msra.mxu0 0
  %175 = vmatprep.subr.bf16.mxu0 0
  %176 = vmatpush2.bf16.msra.mxu0 0
  %177 = vmatprep.subr.bf16.mxu0 0
  %178 = vmatpush2.bf16.msra.mxu0 0
  %179 = vmatprep.subr.bf16.mxu0 0
  %180 = vmatpush2.bf16.msra.mxu0 0
  %181 = vmatprep.subr.bf16.mxu0 0
  %182 = vmatpush2.bf16.msra.mxu0 0
  %183 = vmatprep.subr.bf16.mxu0 0
  %184 = vmatpush2.bf16.msra.mxu0 0
  %185 = vmatprep.subr.bf16.mxu0 0
  %186 = vmatpush2.bf16.msra.mxu0 0
  %187 = vmatprep.subr.bf16.mxu0 0
  %188 = vmatpush2.bf16.msra.mxu0 0
  %189 = vmatprep.mubr.bf16.mxu0 0
  %190 = vmatmul.mubr.bf16.gmra.mxu0 %v96
  %v191 = vpop.f32.mrf.mxu0
  %v192 = vadd.f32 0.0, %v191
  %v193 = vpop.f32.mrf.mxu0
  %v194 = vpop.f32.mrf.mxu0
  %v195 = vadd.f32 0.0, %v194
  %v196 = vpop.f32.mrf.mxu0
  %197 = vdwg.mxu0
  %v198 = vld [vmem:[%s5] sm:$0xf]
  %v199 = vld [vmem:[%s5 + $0x4] sm:$0xf]
  %v200 = vld [vmem:[%s5 + $0x8] sm:$0xf]
  %v201 = vld [vmem:[%s5 + $0xc] sm:$0xf]
  %v206 = vunpack.c.l.b16 %v198
  %v207 = vunpack.c.l.b16 %v199
  %v208 = vunpack.c.l.b16 %v200
  %v209 = vunpack.c.l.b16 %v201
  %v210 = vpack.c.b16 %v207, %v206
  %v211 = vpack.c.b16 %v209, %v208
  %214 = vmatprep.subr.bf16.mxu0 0
  %215 = vmatpush1.bf16.msra.mxu0 0
  %216 = vmatprep.subr.bf16.mxu0 0
  %217 = vmatpush1.bf16.msra.mxu0 0
  %218 = vmatprep.subr.bf16.mxu0 0
  %219 = vmatpush1.bf16.msra.mxu0 0
  %220 = vmatprep.subr.bf16.mxu0 0
  %221 = vmatpush1.bf16.msra.mxu0 0
  %222 = vmatprep.subr.bf16.mxu0 0
  %223 = vmatpush1.bf16.msra.mxu0 0
  %224 = vmatprep.subr.bf16.mxu0 0
  %225 = vmatpush1.bf16.msra.mxu0 0
  %226 = vmatprep.subr.bf16.mxu0 0
  %227 = vmatpush1.bf16.msra.mxu0 %v211
  %228 = vmatprep.subr.bf16.mxu0 0
  %229 = vmatpush1.bf16.msra.mxu0 %v210
  %230 = vmatprep.subr.bf16.mxu0 0
  %231 = vmatpush2.bf16.msra.mxu0 0
  %232 = vmatprep.subr.bf16.mxu0 0
  %233 = vmatpush2.bf16.msra.mxu0 0
  %234 = vmatprep.subr.bf16.mxu0 0
  %235 = vmatpush2.bf16.msra.mxu0 0
  %236 = vmatprep.subr.bf16.mxu0 0
  %237 = vmatpush2.bf16.msra.mxu0 0
  %238 = vmatprep.subr.bf16.mxu0 0
  %239 = vmatpush2.bf16.msra.mxu0 0
  %240 = vmatprep.subr.bf16.mxu0 0
  %241 = vmatpush2.bf16.msra.mxu0 0
  %242 = vmatprep.subr.bf16.mxu0 0
  %243 = vmatpush2.bf16.msra.mxu0 0
  %244 = vmatprep.subr.bf16.mxu0 0
  %245 = vmatpush2.bf16.msra.mxu0 0
  %246 = vmatprep.mubr.bf16.mxu0 0
  %247 = vmatmul.mubr.bf16.gmra.mxu0 %v96
  %v248 = vpop.f32.mrf.mxu0
  %v249 = vadd.f32 0.0, %v248
  %v250 = vpop.f32.mrf.mxu0
  %v251 = vpop.f32.mrf.mxu0
  %v252 = vadd.f32 0.0, %v251
  %v253 = vpop.f32.mrf.mxu0
  %254 = vdwg.mxu0
  %v255 = vpack.c.bf16 %v139, %v139
  %v256 = vpack.c.bf16 %v140, %v140
  %v257 = vpack.c.bf16 %v192, %v192
  %v258 = vpack.c.bf16 %v195, %v195
  %v259 = vpack.c.bf16 %v249, %v249
  %v260 = vpack.c.bf16 %v252, %v252
  %vm261 = vcmask 130048
  %v263 = vsel %vm261, %v255, 0
  %v266 = vsel %vm261, %v257, 0
  %268 = vmatprep.subr.bf16.mxu0 0
  %269 = vmatpush1.bf16.xpose.msra.mxu0 0
  %270 = vmatprep.subr.bf16.mxu0 0
  %271 = vmatpush1.bf16.xpose.msra.mxu0 0
  %272 = vmatprep.subr.bf16.mxu0 0
  %273 = vmatpush1.bf16.xpose.msra.mxu0 0
  %274 = vmatprep.subr.bf16.mxu0 0
  %275 = vmatpush1.bf16.xpose.msra.mxu0 0
  %276 = vmatprep.subr.bf16.mxu0 0
  %277 = vmatpush1.bf16.xpose.msra.mxu0 0
  %278 = vmatprep.subr.bf16.mxu0 0
  %279 = vmatpush1.bf16.xpose.msra.mxu0 0
  %280 = vmatprep.subr.bf16.mxu0 0
  %281 = vmatpush1.bf16.xpose.msra.mxu0 0
  %282 = vmatprep.subr.bf16.mxu0 0
  %283 = vmatpush1.bf16.xpose.msra.mxu0 %v266
  %284 = vmatprep.subr.bf16.mxu0 0
  %285 = vmatpush2.bf16.xpose.msra.mxu0 0
  %286 = vmatprep.subr.bf16.mxu0 0
  %287 = vmatpush2.bf16.xpose.msra.mxu0 0
  %288 = vmatprep.subr.bf16.mxu0 0
  %289 = vmatpush2.bf16.xpose.msra.mxu0 0
  %290 = vmatprep.subr.bf16.mxu0 0
  %291 = vmatpush2.bf16.xpose.msra.mxu0 0
  %292 = vmatprep.subr.bf16.mxu0 0
  %293 = vmatpush2.bf16.xpose.msra.mxu0 0
  %294 = vmatprep.subr.bf16.mxu0 0
  %295 = vmatpush2.bf16.xpose.msra.mxu0 0
  %296 = vmatprep.subr.bf16.mxu0 0
  %297 = vmatpush2.bf16.xpose.msra.mxu0 0
  %298 = vmatprep.subr.bf16.mxu0 0
  %299 = vmatpush2.bf16.xpose.msra.mxu0 0
  %300 = vmatprep.mubr.bf16.mxu0 0
  %301 = vmatmul.mubr.bf16.gmra.mxu0 %v263
  %v302 = vpop.f32.mrf.mxu0
  %v303 = vadd.f32 0.0, %v302
  %v304 = vpop.f32.mrf.mxu0
  %v305 = vpop.f32.mrf.mxu0
  %v306 = vpop.f32.mrf.mxu0
  %307 = vdwg.mxu0
  %v309 = vsel %vm261, %v256, 0
  %v312 = vsel %vm261, %v258, 0
  %314 = vmatprep.subr.bf16.mxu0 0
  %315 = vmatpush1.bf16.xpose.msra.mxu0 0
  %316 = vmatprep.subr.bf16.mxu0 0
  %317 = vmatpush1.bf16.xpose.msra.mxu0 0
  %318 = vmatprep.subr.bf16.mxu0 0
  %319 = vmatpush1.bf16.xpose.msra.mxu0 0
  %320 = vmatprep.subr.bf16.mxu0 0
  %321 = vmatpush1.bf16.xpose.msra.mxu0 0
  %322 = vmatprep.subr.bf16.mxu0 0
  %323 = vmatpush1.bf16.xpose.msra.mxu0 0
  %324 = vmatprep.subr.bf16.mxu0 0
  %325 = vmatpush1.bf16.xpose.msra.mxu0 0
  %326 = vmatprep.subr.bf16.mxu0 0
  %327 = vmatpush1.bf16.xpose.msra.mxu0 0
  %328 = vmatprep.subr.bf16.mxu0 0
  %329 = vmatpush1.bf16.xpose.msra.mxu0 %v312
  %330 = vmatprep.subr.bf16.mxu0 0
  %331 = vmatpush2.bf16.xpose.msra.mxu0 0
  %332 = vmatprep.subr.bf16.mxu0 0
  %333 = vmatpush2.bf16.xpose.msra.mxu0 0
  %334 = vmatprep.subr.bf16.mxu0 0
  %335 = vmatpush2.bf16.xpose.msra.mxu0 0
  %336 = vmatprep.subr.bf16.mxu0 0
  %337 = vmatpush2.bf16.xpose.msra.mxu0 0
  %338 = vmatprep.subr.bf16.mxu0 0
  %339 = vmatpush2.bf16.xpose.msra.mxu0 0
  %340 = vmatprep.subr.bf16.mxu0 0
  %341 = vmatpush2.bf16.xpose.msra.mxu0 0
  %342 = vmatprep.subr.bf16.mxu0 0
  %343 = vmatpush2.bf16.xpose.msra.mxu0 0
  %344 = vmatprep.subr.bf16.mxu0 0
  %345 = vmatpush2.bf16.xpose.msra.mxu0 0
  %346 = vmatprep.mubr.bf16.mxu0 0
  %347 = vmatmul.mubr.bf16.gmra.mxu0 %v309
  %v348 = vpop.f32.mrf.mxu0
  %v349 = vadd.f32 0.0, %v348
  %v350 = vpop.f32.mrf.mxu0
  %v351 = vpop.f32.mrf.mxu0
  %v352 = vpop.f32.mrf.mxu0
  %353 = vdwg.mxu0
  %vm354 = vcmask 64512
  %v355 = vsel %vm354, %v303, -inf
  %356 = vmax.xlane.f32.xlu0 %v355
  %v357 = vpop.xlane.xlu0 %356
  %v358 = vsel %vm354, %v349, -inf
  %359 = vmax.xlane.f32.xlu0 %v358
  %v360 = vpop.xlane.xlu0 %359
  %v361 = vsub.f32 %v303, %v357
  %v362 = vsub.f32 %v349, %v360
  %v363 = vmul.f32 %v361, 1.442695
  %v364 = vpow.pop %v363
  %v365 = vmul.f32 %v362, 1.442695
  %v366 = vpow.pop %v365
  %v367 = vsel %vm354, %v364, 0.0
  %368 = vadd.xlane.f32.xlu0 %v367
  %v369 = vpop.xlane.xlu0 %368
  %v370 = vsel %vm354, %v366, 0.0
  %371 = vadd.xlane.f32.xlu0 %v370
  %v372 = vpop.xlane.xlu0 %371
  %v373 = vrcp.pop %v369
  %v374 = vrcp.pop %v372
  %v375 = vmul.f32 %v364, %v373
  %v376 = vmul.f32 %v366, %v374
  %v377 = vpack.c.bf16 %v375, %v375
  %v378 = vpack.c.bf16 %v376, %v376
  %v380 = vsel %vm354, %v377, 0
  %vm382 = vcmask 1043456
  %v384 = vsel %vm382, %v259, 0
  %386 = vmatprep.subr.bf16.mxu0 0
  %387 = vmatpush1.bf16.msra.mxu0 0
  %388 = vmatprep.subr.bf16.mxu0 0
  %389 = vmatpush1.bf16.msra.mxu0 0
  %390 = vmatprep.subr.bf16.mxu0 0
  %391 = vmatpush1.bf16.msra.mxu0 0
  %392 = vmatprep.subr.bf16.mxu0 0
  %393 = vmatpush1.bf16.msra.mxu0 0
  %394 = vmatprep.subr.bf16.mxu0 0
  %395 = vmatpush1.bf16.msra.mxu0 0
  %396 = vmatprep.subr.bf16.mxu0 0
  %397 = vmatpush1.bf16.msra.mxu0 0
  %398 = vmatprep.subr.bf16.mxu0 0
  %399 = vmatpush1.bf16.msra.mxu0 0
  %400 = vmatprep.subr.bf16.mxu0 0
  %401 = vmatpush1.bf16.msra.mxu0 %v384
  %402 = vmatprep.subr.bf16.mxu0 0
  %403 = vmatpush2.bf16.msra.mxu0 0
  %404 = vmatprep.subr.bf16.mxu0 0
  %405 = vmatpush2.bf16.msra.mxu0 0
  %406 = vmatprep.subr.bf16.mxu0 0
  %407 = vmatpush2.bf16.msra.mxu0 0
  %408 = vmatprep.subr.bf16.mxu0 0
  %409 = vmatpush2.bf16.msra.mxu0 0
  %410 = vmatprep.subr.bf16.mxu0 0
  %411 = vmatpush2.bf16.msra.mxu0 0
  %412 = vmatprep.subr.bf16.mxu0 0
  %413 = vmatpush2.bf16.msra.mxu0 0
  %414 = vmatprep.subr.bf16.mxu0 0
  %415 = vmatpush2.bf16.msra.mxu0 0
  %416 = vmatprep.subr.bf16.mxu0 0
  %417 = vmatpush2.bf16.msra.mxu0 0
  %418 = vmatprep.mubr.bf16.mxu0 0
  %419 = vmatmul.mubr.bf16.gmra.mxu0 %v380
  %v420 = vpop.f32.mrf.mxu0
  %v421 = vadd.f32 0.0, %v420
  %v422 = vpop.f32.mrf.mxu0
  %v423 = vpop.f32.mrf.mxu0
  %v424 = vpop.f32.mrf.mxu0
  %425 = vdwg.mxu0
  %v427 = vsel %vm354, %v378, 0
  %v430 = vsel %vm382, %v260, 0
  %432 = vmatprep.subr.bf16.mxu0 0
  %433 = vmatpush1.bf16.msra.mxu0 0
  %434 = vmatprep.subr.bf16.mxu0 0
  %435 = vmatpush1.bf16.msra.mxu0 0
  %436 = vmatprep.subr.bf16.mxu0 0
  %437 = vmatpush1.bf16.msra.mxu0 0
  %438 = vmatprep.subr.bf16.mxu0 0
  %439 = vmatpush1.bf16.msra.mxu0 0
  %440 = vmatprep.subr.bf16.mxu0 0
  %441 = vmatpush1.bf16.msra.mxu0 0
  %442 = vmatprep.subr.bf16.mxu0 0
  %443 = vmatpush1.bf16.msra.mxu0 0
  %444 = vmatprep.subr.bf16.mxu0 0
  %445 = vmatpush1.bf16.msra.mxu0 0
  %446 = vmatprep.subr.bf16.mxu0 0
  %447 = vmatpush1.bf16.msra.mxu0 %v430
  %448 = vmatprep.subr.bf16.mxu0 0
  %449 = vmatpush2.bf16.msra.mxu0 0
  %450 = vmatprep.subr.bf16.mxu0 0
  %451 = vmatpush2.bf16.msra.mxu0 0
  %452 = vmatprep.subr.bf16.mxu0 0
  %453 = vmatpush2.bf16.msra.mxu0 0
  %454 = vmatprep.subr.bf16.mxu0 0
  %455 = vmatpush2.bf16.msra.mxu0 0
  %456 = vmatprep.subr.bf16.mxu0 0
  %457 = vmatpush2.bf16.msra.mxu0 0
  %458 = vmatprep.subr.bf16.mxu0 0
  %459 = vmatpush2.bf16.msra.mxu0 0
  %460 = vmatprep.subr.bf16.mxu0 0
  %461 = vmatpush2.bf16.msra.mxu0 0
  %462 = vmatprep.subr.bf16.mxu0 0
  %463 = vmatpush2.bf16.msra.mxu0 0
  %464 = vmatprep.mubr.bf16.mxu0 0
  %465 = vmatmul.mubr.bf16.gmra.mxu0 %v427
  %v466 = vpop.f32.mrf.mxu0
  %v467 = vadd.f32 0.0, %v466
  %v468 = vpop.f32.mrf.mxu0
  %v469 = vpop.f32.mrf.mxu0
  %v470 = vpop.f32.mrf.mxu0
  %471 = vdwg.mxu0
  %v472 = vpack.c.bf16 %v467, %v421
  %v473 = vld [vmem:[%s6] sm:$0xf]
  %v474 = vld [vmem:[%s6 + $0x4] sm:$0xf]
  %s475 = scalar_lea.vmem %s3, 16
  %v476 = vld [vmem:[%s475] sm:$0xf]
  %v477 = vld [vmem:[%s475 + $0x4] sm:$0xf]
  %v478 = vld [vmem:[%s475 + $0x8] sm:$0xf]
  %v479 = vld [vmem:[%s475 + $0xc] sm:$0xf]
  %v484 = vunpack.c.l.b16 %v476
  %v485 = vunpack.c.l.b16 %v477
  %v486 = vunpack.c.l.b16 %v478
  %v487 = vunpack.c.l.b16 %v479
  %v488 = vpack.c.b16 %v485, %v484
  %v489 = vpack.c.b16 %v487, %v486
  %492 = vmatprep.subr.bf16.mxu0 0
  %493 = vmatpush1.bf16.msra.mxu0 0
  %494 = vmatprep.subr.bf16.mxu0 0
  %495 = vmatpush1.bf16.msra.mxu0 0
  %496 = vmatprep.subr.bf16.mxu0 0
  %497 = vmatpush1.bf16.msra.mxu0 0
  %498 = vmatprep.subr.bf16.mxu0 0
  %499 = vmatpush1.bf16.msra.mxu0 0
  %500 = vmatprep.subr.bf16.mxu0 0
  %501 = vmatpush1.bf16.msra.mxu0 0
  %502 = vmatprep.subr.bf16.mxu0 0
  %503 = vmatpush1.bf16.msra.mxu0 0
  %504 = vmatprep.subr.bf16.mxu0 0
  %505 = vmatpush1.bf16.msra.mxu0 %v489
  %506 = vmatprep.subr.bf16.mxu0 0
  %507 = vmatpush1.bf16.msra.mxu0 %v488
  %508 = vmatprep.subr.bf16.mxu0 0
  %509 = vmatpush2.bf16.msra.mxu0 0
  %510 = vmatprep.subr.bf16.mxu0 0
  %511 = vmatpush2.bf16.msra.mxu0 0
  %512 = vmatprep.subr.bf16.mxu0 0
  %513 = vmatpush2.bf16.msra.mxu0 0
  %514 = vmatprep.subr.bf16.mxu0 0
  %515 = vmatpush2.bf16.msra.mxu0 0
  %516 = vmatprep.subr.bf16.mxu0 0
  %517 = vmatpush2.bf16.msra.mxu0 0
  %518 = vmatprep.subr.bf16.mxu0 0
  %519 = vmatpush2.bf16.msra.mxu0 0
  %520 = vmatprep.subr.bf16.mxu0 0
  %521 = vmatpush2.bf16.msra.mxu0 0
  %522 = vmatprep.subr.bf16.mxu0 0
  %523 = vmatpush2.bf16.msra.mxu0 0
  %524 = vmatprep.mubr.bf16.mxu0 0
  %525 = vmatmul.mubr.bf16.gmra.mxu0 %v96
  %v526 = vpop.f32.mrf.mxu0
  %v527 = vadd.f32 0.0, %v526
  %v528 = vpop.f32.mrf.mxu0
  %v529 = vpop.f32.mrf.mxu0
  %v530 = vadd.f32 0.0, %v529
  %v531 = vpop.f32.mrf.mxu0
  %532 = vdwg.mxu0
  %v533 = vmul.f32 %v527, 0.25
  %v534 = vmul.f32 %v530, 0.25
  %s535 = scalar_lea.vmem %s4, 16
  %v536 = vld [vmem:[%s535] sm:$0xf]
  %v537 = vld [vmem:[%s535 + $0x4] sm:$0xf]
  %v538 = vld [vmem:[%s535 + $0x8] sm:$0xf]
  %v539 = vld [vmem:[%s535 + $0xc] sm:$0xf]
  %v544 = vunpack.c.l.b16 %v536
  %v545 = vunpack.c.l.b16 %v537
  %v546 = vunpack.c.l.b16 %v538
  %v547 = vunpack.c.l.b16 %v539
  %v548 = vpack.c.b16 %v545, %v544
  %v549 = vpack.c.b16 %v547, %v546
  %552 = vmatprep.subr.bf16.mxu0 0
  %553 = vmatpush1.bf16.msra.mxu0 0
  %554 = vmatprep.subr.bf16.mxu0 0
  %555 = vmatpush1.bf16.msra.mxu0 0
  %556 = vmatprep.subr.bf16.mxu0 0
  %557 = vmatpush1.bf16.msra.mxu0 0
  %558 = vmatprep.subr.bf16.mxu0 0
  %559 = vmatpush1.bf16.msra.mxu0 0
  %560 = vmatprep.subr.bf16.mxu0 0
  %561 = vmatpush1.bf16.msra.mxu0 0
  %562 = vmatprep.subr.bf16.mxu0 0
  %563 = vmatpush1.bf16.msra.mxu0 0
  %564 = vmatprep.subr.bf16.mxu0 0
  %565 = vmatpush1.bf16.msra.mxu0 %v549
  %566 = vmatprep.subr.bf16.mxu0 0
  %567 = vmatpush1.bf16.msra.mxu0 %v548
  %568 = vmatprep.subr.bf16.mxu0 0
  %569 = vmatpush2.bf16.msra.mxu0 0
  %570 = vmatprep.subr.bf16.mxu0 0
  %571 = vmatpush2.bf16.msra.mxu0 0
  %572 = vmatprep.subr.bf16.mxu0 0
  %573 = vmatpush2.bf16.msra.mxu0 0
  %574 = vmatprep.subr.bf16.mxu0 0
  %575 = vmatpush2.bf16.msra.mxu0 0
  %576 = vmatprep.subr.bf16.mxu0 0
  %577 = vmatpush2.bf16.msra.mxu0 0
  %578 = vmatprep.subr.bf16.mxu0 0
  %579 = vmatpush2.bf16.msra.mxu0 0
  %580 = vmatprep.subr.bf16.mxu0 0
  %581 = vmatpush2.bf16.msra.mxu0 0
  %582 = vmatprep.subr.bf16.mxu0 0
  %583 = vmatpush2.bf16.msra.mxu0 0
  %584 = vmatprep.mubr.bf16.mxu0 0
  %585 = vmatmul.mubr.bf16.gmra.mxu0 %v96
  %v586 = vpop.f32.mrf.mxu0
  %v587 = vadd.f32 0.0, %v586
  %v588 = vpop.f32.mrf.mxu0
  %v589 = vpop.f32.mrf.mxu0
  %v590 = vadd.f32 0.0, %v589
  %v591 = vpop.f32.mrf.mxu0
  %592 = vdwg.mxu0
  %s593 = scalar_lea.vmem %s5, 16
  %v594 = vld [vmem:[%s593] sm:$0xf]
  %v595 = vld [vmem:[%s593 + $0x4] sm:$0xf]
  %v596 = vld [vmem:[%s593 + $0x8] sm:$0xf]
  %v597 = vld [vmem:[%s593 + $0xc] sm:$0xf]
  %v602 = vunpack.c.l.b16 %v594
  %v603 = vunpack.c.l.b16 %v595
  %v604 = vunpack.c.l.b16 %v596
  %v605 = vunpack.c.l.b16 %v597
  %v606 = vpack.c.b16 %v603, %v602
  %v607 = vpack.c.b16 %v605, %v604
  %610 = vmatprep.subr.bf16.mxu0 0
  %611 = vmatpush1.bf16.msra.mxu0 0
  %612 = vmatprep.subr.bf16.mxu0 0
  %613 = vmatpush1.bf16.msra.mxu0 0
  %614 = vmatprep.subr.bf16.mxu0 0
  %615 = vmatpush1.bf16.msra.mxu0 0
  %616 = vmatprep.subr.bf16.mxu0 0
  %617 = vmatpush1.bf16.msra.mxu0 0
  %618 = vmatprep.subr.bf16.mxu0 0
  %619 = vmatpush1.bf16.msra.mxu0 0
  %620 = vmatprep.subr.bf16.mxu0 0
  %621 = vmatpush1.bf16.msra.mxu0 0
  %622 = vmatprep.subr.bf16.mxu0 0
  %623 = vmatpush1.bf16.msra.mxu0 %v607
  %624 = vmatprep.subr.bf16.mxu0 0
  %625 = vmatpush1.bf16.msra.mxu0 %v606
  %626 = vmatprep.subr.bf16.mxu0 0
  %627 = vmatpush2.bf16.msra.mxu0 0
  %628 = vmatprep.subr.bf16.mxu0 0
  %629 = vmatpush2.bf16.msra.mxu0 0
  %630 = vmatprep.subr.bf16.mxu0 0
  %631 = vmatpush2.bf16.msra.mxu0 0
  %632 = vmatprep.subr.bf16.mxu0 0
  %633 = vmatpush2.bf16.msra.mxu0 0
  %634 = vmatprep.subr.bf16.mxu0 0
  %635 = vmatpush2.bf16.msra.mxu0 0
  %636 = vmatprep.subr.bf16.mxu0 0
  %637 = vmatpush2.bf16.msra.mxu0 0
  %638 = vmatprep.subr.bf16.mxu0 0
  %639 = vmatpush2.bf16.msra.mxu0 0
  %640 = vmatprep.subr.bf16.mxu0 0
  %641 = vmatpush2.bf16.msra.mxu0 0
  %642 = vmatprep.mubr.bf16.mxu0 0
  %643 = vmatmul.mubr.bf16.gmra.mxu0 %v96
  %v644 = vpop.f32.mrf.mxu0
  %v645 = vadd.f32 0.0, %v644
  %v646 = vpop.f32.mrf.mxu0
  %v647 = vpop.f32.mrf.mxu0
  %v648 = vadd.f32 0.0, %v647
  %v649 = vpop.f32.mrf.mxu0
  %650 = vdwg.mxu0
  %v651 = vpack.c.bf16 %v533, %v533
  %v652 = vpack.c.bf16 %v534, %v534
  %v653 = vpack.c.bf16 %v587, %v587
  %v654 = vpack.c.bf16 %v590, %v590
  %v655 = vpack.c.bf16 %v645, %v645
  %v656 = vpack.c.bf16 %v648, %v648
  %v658 = vsel %vm261, %v651, 0
  %v661 = vsel %vm261, %v653, 0
  %663 = vmatprep.subr.bf16.mxu0 0
  %664 = vmatpush1.bf16.xpose.msra.mxu0 0
  %665 = vmatprep.subr.bf16.mxu0 0
  %666 = vmatpush1.bf16.xpose.msra.mxu0 0
  %667 = vmatprep.subr.bf16.mxu0 0
  %668 = vmatpush1.bf16.xpose.msra.mxu0 0
  %669 = vmatprep.subr.bf16.mxu0 0
  %670 = vmatpush1.bf16.xpose.msra.mxu0 0
  %671 = vmatprep.subr.bf16.mxu0 0
  %672 = vmatpush1.bf16.xpose.msra.mxu0 0
  %673 = vmatprep.subr.bf16.mxu0 0
  %674 = vmatpush1.bf16.xpose.msra.mxu0 0
  %675 = vmatprep.subr.bf16.mxu0 0
  %676 = vmatpush1.bf16.xpose.msra.mxu0 0
  %677 = vmatprep.subr.bf16.mxu0 0
  %678 = vmatpush1.bf16.xpose.msra.mxu0 %v661
  %679 = vmatprep.subr.bf16.mxu0 0
  %680 = vmatpush2.bf16.xpose.msra.mxu0 0
  %681 = vmatprep.subr.bf16.mxu0 0
  %682 = vmatpush2.bf16.xpose.msra.mxu0 0
  %683 = vmatprep.subr.bf16.mxu0 0
  %684 = vmatpush2.bf16.xpose.msra.mxu0 0
  %685 = vmatprep.subr.bf16.mxu0 0
  %686 = vmatpush2.bf16.xpose.msra.mxu0 0
  %687 = vmatprep.subr.bf16.mxu0 0
  %688 = vmatpush2.bf16.xpose.msra.mxu0 0
  %689 = vmatprep.subr.bf16.mxu0 0
  %690 = vmatpush2.bf16.xpose.msra.mxu0 0
  %691 = vmatprep.subr.bf16.mxu0 0
  %692 = vmatpush2.bf16.xpose.msra.mxu0 0
  %693 = vmatprep.subr.bf16.mxu0 0
  %694 = vmatpush2.bf16.xpose.msra.mxu0 0
  %695 = vmatprep.mubr.bf16.mxu0 0
  %696 = vmatmul.mubr.bf16.gmra.mxu0 %v658
  %v697 = vpop.f32.mrf.mxu0
  %v698 = vadd.f32 0.0, %v697
  %v699 = vpop.f32.mrf.mxu0
  %v700 = vpop.f32.mrf.mxu0
  %v701 = vpop.f32.mrf.mxu0
  %702 = vdwg.mxu0
  %v704 = vsel %vm261, %v652, 0
  %v707 = vsel %vm261, %v654, 0
  %709 = vmatprep.subr.bf16.mxu0 0
  %710 = vmatpush1.bf16.xpose.msra.mxu0 0
  %711 = vmatprep.subr.bf16.mxu0 0
  %712 = vmatpush1.bf16.xpose.msra.mxu0 0
  %713 = vmatprep.subr.bf16.mxu0 0
  %714 = vmatpush1.bf16.xpose.msra.mxu0 0
  %715 = vmatprep.subr.bf16.mxu0 0
  %716 = vmatpush1.bf16.xpose.msra.mxu0 0
  %717 = vmatprep.subr.bf16.mxu0 0
  %718 = vmatpush1.bf16.xpose.msra.mxu0 0
  %719 = vmatprep.subr.bf16.mxu0 0
  %720 = vmatpush1.bf16.xpose.msra.mxu0 0
  %721 = vmatprep.subr.bf16.mxu0 0
  %722 = vmatpush1.bf16.xpose.msra.mxu0 0
  %723 = vmatprep.subr.bf16.mxu0 0
  %724 = vmatpush1.bf16.xpose.msra.mxu0 %v707
  %725 = vmatprep.subr.bf16.mxu0 0
  %726 = vmatpush2.bf16.xpose.msra.mxu0 0
  %727 = vmatprep.subr.bf16.mxu0 0
  %728 = vmatpush2.bf16.xpose.msra.mxu0 0
  %729 = vmatprep.subr.bf16.mxu0 0
  %730 = vmatpush2.bf16.xpose.msra.mxu0 0
  %731 = vmatprep.subr.bf16.mxu0 0
  %732 = vmatpush2.bf16.xpose.msra.mxu0 0
  %733 = vmatprep.subr.bf16.mxu0 0
  %734 = vmatpush2.bf16.xpose.msra.mxu0 0
  %735 = vmatprep.subr.bf16.mxu0 0
  %736 = vmatpush2.bf16.xpose.msra.mxu0 0
  %737 = vmatprep.subr.bf16.mxu0 0
  %738 = vmatpush2.bf16.xpose.msra.mxu0 0
  %739 = vmatprep.subr.bf16.mxu0 0
  %740 = vmatpush2.bf16.xpose.msra.mxu0 0
  %741 = vmatprep.mubr.bf16.mxu0 0
  %742 = vmatmul.mubr.bf16.gmra.mxu0 %v704
  %v743 = vpop.f32.mrf.mxu0
  %v744 = vadd.f32 0.0, %v743
  %v745 = vpop.f32.mrf.mxu0
  %v746 = vpop.f32.mrf.mxu0
  %v747 = vpop.f32.mrf.mxu0
  %748 = vdwg.mxu0
  %v749 = vsel %vm354, %v698, -inf
  %750 = vmax.xlane.f32.xlu0 %v749
  %v751 = vpop.xlane.xlu0 %750
  %v752 = vsel %vm354, %v744, -inf
  %753 = vmax.xlane.f32.xlu0 %v752
  %v754 = vpop.xlane.xlu0 %753
  %v755 = vsub.f32 %v698, %v751
  %v756 = vsub.f32 %v744, %v754
  %v757 = vmul.f32 %v755, 1.442695
  %v758 = vpow.pop %v757
  %v759 = vmul.f32 %v756, 1.442695
  %v760 = vpow.pop %v759
  %v761 = vsel %vm354, %v758, 0.0
  %762 = vadd.xlane.f32.xlu0 %v761
  %v763 = vpop.xlane.xlu0 %762
  %v764 = vsel %vm354, %v760, 0.0
  %765 = vadd.xlane.f32.xlu0 %v764
  %v766 = vpop.xlane.xlu0 %765
  %v767 = vrcp.pop %v763
  %v768 = vrcp.pop %v766
  %v769 = vmul.f32 %v758, %v767
  %v770 = vmul.f32 %v760, %v768
  %v771 = vpack.c.bf16 %v769, %v769
  %v772 = vpack.c.bf16 %v770, %v770
  %v774 = vsel %vm354, %v771, 0
  %v777 = vsel %vm382, %v655, 0
  %779 = vmatprep.subr.bf16.mxu0 0
  %780 = vmatpush1.bf16.msra.mxu0 0
  %781 = vmatprep.subr.bf16.mxu0 0
  %782 = vmatpush1.bf16.msra.mxu0 0
  %783 = vmatprep.subr.bf16.mxu0 0
  %784 = vmatpush1.bf16.msra.mxu0 0
  %785 = vmatprep.subr.bf16.mxu0 0
  %786 = vmatpush1.bf16.msra.mxu0 0
  %787 = vmatprep.subr.bf16.mxu0 0
  %788 = vmatpush1.bf16.msra.mxu0 0
  %789 = vmatprep.subr.bf16.mxu0 0
  %790 = vmatpush1.bf16.msra.mxu0 0
  %791 = vmatprep.subr.bf16.mxu0 0
  %792 = vmatpush1.bf16.msra.mxu0 0
  %793 = vmatprep.subr.bf16.mxu0 0
  %794 = vmatpush1.bf16.msra.mxu0 %v777
  %795 = vmatprep.subr.bf16.mxu0 0
  %796 = vmatpush2.bf16.msra.mxu0 0
  %797 = vmatprep.subr.bf16.mxu0 0
  %798 = vmatpush2.bf16.msra.mxu0 0
  %799 = vmatprep.subr.bf16.mxu0 0
  %800 = vmatpush2.bf16.msra.mxu0 0
  %801 = vmatprep.subr.bf16.mxu0 0
  %802 = vmatpush2.bf16.msra.mxu0 0
  %803 = vmatprep.subr.bf16.mxu0 0
  %804 = vmatpush2.bf16.msra.mxu0 0
  %805 = vmatprep.subr.bf16.mxu0 0
  %806 = vmatpush2.bf16.msra.mxu0 0
  %807 = vmatprep.subr.bf16.mxu0 0
  %808 = vmatpush2.bf16.msra.mxu0 0
  %809 = vmatprep.subr.bf16.mxu0 0
  %810 = vmatpush2.bf16.msra.mxu0 0
  %811 = vmatprep.mubr.bf16.mxu0 0
  %812 = vmatmul.mubr.bf16.gmra.mxu0 %v774
  %v813 = vpop.f32.mrf.mxu0
  %v814 = vadd.f32 0.0, %v813
  %v815 = vpop.f32.mrf.mxu0
  %v816 = vpop.f32.mrf.mxu0
  %v817 = vpop.f32.mrf.mxu0
  %818 = vdwg.mxu0
  %v820 = vsel %vm354, %v772, 0
  %v823 = vsel %vm382, %v656, 0
  %825 = vmatprep.subr.bf16.mxu0 0
  %826 = vmatpush1.bf16.msra.mxu0 0
  %827 = vmatprep.subr.bf16.mxu0 0
  %828 = vmatpush1.bf16.msra.mxu0 0
  %829 = vmatprep.subr.bf16.mxu0 0
  %830 = vmatpush1.bf16.msra.mxu0 0
  %831 = vmatprep.subr.bf16.mxu0 0
  %832 = vmatpush1.bf16.msra.mxu0 0
  %833 = vmatprep.subr.bf16.mxu0 0
  %834 = vmatpush1.bf16.msra.mxu0 0
  %835 = vmatprep.subr.bf16.mxu0 0
  %836 = vmatpush1.bf16.msra.mxu0 0
  %837 = vmatprep.subr.bf16.mxu0 0
  %838 = vmatpush1.bf16.msra.mxu0 0
  %839 = vmatprep.subr.bf16.mxu0 0
  %840 = vmatpush1.bf16.msra.mxu0 %v823
  %841 = vmatprep.subr.bf16.mxu0 0
  %842 = vmatpush2.bf16.msra.mxu0 0
  %843 = vmatprep.subr.bf16.mxu0 0
  %844 = vmatpush2.bf16.msra.mxu0 0
  %845 = vmatprep.subr.bf16.mxu0 0
  %846 = vmatpush2.bf16.msra.mxu0 0
  %847 = vmatprep.subr.bf16.mxu0 0
  %848 = vmatpush2.bf16.msra.mxu0 0
  %849 = vmatprep.subr.bf16.mxu0 0
  %850 = vmatpush2.bf16.msra.mxu0 0
  %851 = vmatprep.subr.bf16.mxu0 0
  %852 = vmatpush2.bf16.msra.mxu0 0
  %853 = vmatprep.subr.bf16.mxu0 0
  %854 = vmatpush2.bf16.msra.mxu0 0
  %855 = vmatprep.subr.bf16.mxu0 0
  %856 = vmatpush2.bf16.msra.mxu0 0
  %857 = vmatprep.mubr.bf16.mxu0 0
  %858 = vmatmul.mubr.bf16.gmra.mxu0 %v820
  %v859 = vpop.f32.mrf.mxu0
  %v860 = vadd.f32 0.0, %v859
  %v861 = vpop.f32.mrf.mxu0
  %v862 = vpop.f32.mrf.mxu0
  %v863 = vpop.f32.mrf.mxu0
  %864 = vdwg.mxu0
  %v865 = vpack.c.bf16 %v860, %v814
  %s866 = scalar_lea.vmem %s6, 8
  %v867 = vld [vmem:[%s866] sm:$0xf]
  %v868 = vld [vmem:[%s866 + $0x4] sm:$0xf]
  %v871 = vunpack.c.l.b16 %v867
  %v872 = vunpack.c.l.b16 %v868
  %v873 = vpack.c.b16 %v872, %v871
  %v876 = vsel %vm261, %v865, 0
  %878 = vmatprep.subr.bf16.mxu0 0
  %879 = vmatpush1.bf16.msra.mxu0 0
  %880 = vmatprep.subr.bf16.mxu0 0
  %881 = vmatpush1.bf16.msra.mxu0 0
  %882 = vmatprep.subr.bf16.mxu0 0
  %883 = vmatpush1.bf16.msra.mxu0 0
  %884 = vmatprep.subr.bf16.mxu0 0
  %885 = vmatpush1.bf16.msra.mxu0 0
  %886 = vmatprep.subr.bf16.mxu0 0
  %887 = vmatpush1.bf16.msra.mxu0 0
  %888 = vmatprep.subr.bf16.mxu0 0
  %889 = vmatpush1.bf16.msra.mxu0 0
  %890 = vmatprep.subr.bf16.mxu0 0
  %891 = vmatpush1.bf16.msra.mxu0 0
  %892 = vmatprep.subr.bf16.mxu0 0
  %893 = vmatpush1.bf16.msra.mxu0 %v873
  %894 = vmatprep.subr.bf16.mxu0 0
  %895 = vmatpush2.bf16.msra.mxu0 0
  %896 = vmatprep.subr.bf16.mxu0 0
  %897 = vmatpush2.bf16.msra.mxu0 0
  %898 = vmatprep.subr.bf16.mxu0 0
  %899 = vmatpush2.bf16.msra.mxu0 0
  %900 = vmatprep.subr.bf16.mxu0 0
  %901 = vmatpush2.bf16.msra.mxu0 0
  %902 = vmatprep.subr.bf16.mxu0 0
  %903 = vmatpush2.bf16.msra.mxu0 0
  %904 = vmatprep.subr.bf16.mxu0 0
  %905 = vmatpush2.bf16.msra.mxu0 0
  %906 = vmatprep.subr.bf16.mxu0 0
  %907 = vmatpush2.bf16.msra.mxu0 0
  %908 = vmatprep.subr.bf16.mxu0 0
  %909 = vmatpush2.bf16.msra.mxu0 0
  %910 = vmatprep.mubr.bf16.mxu0 0
  %911 = vmatmul.mubr.bf16.gmra.mxu0 %v876
  %v912 = vpop.f32.mrf.mxu0
  %v913 = vadd.f32 0.0, %v912
  %v914 = vpop.f32.mrf.mxu0
  %v915 = vpop.f32.mrf.mxu0
  %v916 = vadd.f32 0.0, %v915
  %v917 = vpop.f32.mrf.mxu0
  %918 = vdwg.mxu0
  %v921 = vunpack.c.l.b16 %v473
  %v922 = vunpack.c.l.b16 %v474
  %v923 = vpack.c.b16 %v922, %v921
  %v926 = vsel %vm261, %v472, 0
  %928 = vmatprep.subr.bf16.mxu0 0
  %929 = vmatpush1.bf16.msra.mxu0 0
  %930 = vmatprep.subr.bf16.mxu0 0
  %931 = vmatpush1.bf16.msra.mxu0 0
  %932 = vmatprep.subr.bf16.mxu0 0
  %933 = vmatpush1.bf16.msra.mxu0 0
  %934 = vmatprep.subr.bf16.mxu0 0
  %935 = vmatpush1.bf16.msra.mxu0 0
  %936 = vmatprep.subr.bf16.mxu0 0
  %937 = vmatpush1.bf16.msra.mxu0 0
  %938 = vmatprep.subr.bf16.mxu0 0
  %939 = vmatpush1.bf16.msra.mxu0 0
  %940 = vmatprep.subr.bf16.mxu0 0
  %941 = vmatpush1.bf16.msra.mxu0 0
  %942 = vmatprep.subr.bf16.mxu0 0
  %943 = vmatpush1.bf16.msra.mxu0 %v923
  %944 = vmatprep.subr.bf16.mxu0 0
  %945 = vmatpush2.bf16.msra.mxu0 0
  %946 = vmatprep.subr.bf16.mxu0 0
  %947 = vmatpush2.bf16.msra.mxu0 0
  %948 = vmatprep.subr.bf16.mxu0 0
  %949 = vmatpush2.bf16.msra.mxu0 0
  %950 = vmatprep.subr.bf16.mxu0 0
  %951 = vmatpush2.bf16.msra.mxu0 0
  %952 = vmatprep.subr.bf16.mxu0 0
  %953 = vmatpush2.bf16.msra.mxu0 0
  %954 = vmatprep.subr.bf16.mxu0 0
  %955 = vmatpush2.bf16.msra.mxu0 0
  %956 = vmatprep.subr.bf16.mxu0 0
  %957 = vmatpush2.bf16.msra.mxu0 0
  %958 = vmatprep.subr.bf16.mxu0 0
  %959 = vmatpush2.bf16.msra.mxu0 0
  %960 = vmatprep.mubr.bf16.mxu0 0
  %961 = vmatmul.mubr.bf16.gmra.mxu0 %v926
  %v962 = vpop.f32.mrf.mxu0
  %v963 = vadd.f32 %v913, %v962
  %v964 = vpop.f32.mrf.mxu0
  %v965 = vpop.f32.mrf.mxu0
  %v966 = vadd.f32 %v916, %v965
  %v967 = vpop.f32.mrf.mxu0
  %968 = vdwg.mxu0
  %v969 = vld [vmem:[%s7] sm:$0x1]
  %v971 = vlaneseq
  %v972 = vshrl.u32 %v971, 7
  %v973 = vsub.s32 0, %v972
  %v974 = vrot.slane %v969, %v973
  %v976 = vadd.f32 %v963, %v974
  %v977 = vadd.f32 %v966, %v974
  %v978 = vadd.f32 %v976, %v30
  %v979 = vadd.f32 %v977, %v31
  %980 = vst.msk [vmem:[%s8] sm:$0xff] %vm34, %v978
  %981 = vst.msk [vmem:[%s8 + $0x8] sm:$0xff] %vm34, %v979
  // Predicated region
  $region34: #{transformer_moe_film_forward.4} parent=0 // pred_check
    _
  $region35: #{transformer_moe_film_forward.4} parent=0 // pred_check_branch
    %983 = sbr.rel (0) target = $region37
  $region36: #{transformer_moe_film_forward.4} parent=0 // pred_region
    _
  $region37: #{transformer_moe_film_forward.4} parent=0 // pred_fallthru
    _
  // Predicated region
  $region38: #{transformer_moe_film_forward.4} parent=0 // pred_check
    _
  $region39: #{transformer_moe_film_forward.4} parent=0 // pred_check_branch
    %985 = sbr.rel (0) target = $region41
  $region40: #{transformer_moe_film_forward.4} parent=0 // pred_region
    _
  $region41: #{transformer_moe_film_forward.4} parent=0 // pred_fallthru
    _

</llo_original>
